<compile_context>
chip_gen: v7x
topology: tpu7x:2x2x1
jax: 0.10.0
libtpu: 0.0.40
codegen_flags: <defaults>
</compile_context>

<pallas_src>
import jax
import jax.numpy as jnp
from jax.experimental import pallas as pl
from jax.experimental.pallas import tpu as pltpu


def _round_up(n, m):
    return (n + m - 1) // m * m


def att_gru_decoder_kernel(x_ref, enc_ref, h_ref,
                           wih_ref, whh_ref, bias_ref,
                           w1c_ref, w1h_ref,
                           w2_ref, b2_ref,
                           logits_ref, h_out_ref,
                           hid_sc):
    """One grid step = one vocab tile.  GRU + attention + predict[0] run only on the
    first vocab tile; the ReLU activations live in VMEM scratch (bf16) and feed the
    logits matmul of every vocab tile."""
    f32 = jnp.float32
    bf16 = jnp.bfloat16
    Hp = h_ref.shape[1]

    @pl.when(pl.program_id(0) == 0)
    def _():
        x = x_ref[...]                           # [Bp, Ep]    bf16
        h_prev = h_ref[...]                      # [Bp, Hp]    f32 (elementwise path stays f32)
        enc = enc_ref[...]                       # [Bp, S, Hp] bf16

        # ---- GRUCell, PyTorch gate order (r, z, n): one wide [*,3Hp] matmul per
        #      operand; gate slices are lane-aligned (Hp is a multiple of 128).
        gi = jnp.dot(x, wih_ref[...], preferred_element_type=f32)                    # [Bp, 3Hp]
        gh = jnp.dot(h_prev.astype(bf16), whh_ref[...], preferred_element_type=f32)  # [Bp, 3Hp]
        bias = bias_ref[...]                     # [8, Hp] f32 packed bias rows
        b_r, b_z = bias[0:1, :], bias[1:2, :]
        b_in, b_hn = bias[2:3, :], bias[3:4, :]
        b_1 = bias[4:5, :]

        r = jax.nn.sigmoid(gi[:, :Hp] + gh[:, :Hp] + b_r)
        z = jax.nn.sigmoid(gi[:, Hp:2 * Hp] + gh[:, Hp:2 * Hp] + b_z)
        n = jnp.tanh(gi[:, 2 * Hp:] + b_in + r * (gh[:, 2 * Hp:] + b_hn))
        h_new = (1.0 - z) * n + z * h_prev       # [Bp, Hp] f32

        # ---- dot-product attention over encoder outputs.
        # S and H are small in this config, so scores use VPU multiply + lane reduce
        # (no MXU relayout); at production sizes switch to an MXU matmul against a
        # pre-transposed [B, Hp, S] copy of enc.
        enc_f = enc.astype(f32)
        scores = jnp.sum(h_new[:, None, :] * enc_f, axis=-1)            # [Bp, S]
        scores = scores - jnp.max(scores, axis=-1, keepdims=True)
        e = jnp.exp(scores)
        denom = jnp.sum(e, axis=-1, keepdims=True)
        inv = pl.reciprocal(denom, approx=True)
        inv = inv * (2.0 - denom * inv)          # one Newton step -> f32-accurate softmax
        attn = e * inv                           # [Bp, S]

        attn3 = attn.astype(bf16)[:, None, :]    # [Bp, 1, S]
        ctx = jnp.einsum('bms,bsh->bmh', attn3, enc,
                         preferred_element_type=f32)[:, 0, :]            # [Bp, Hp]

        # ---- predict[0]: cat((ctx, h), -1) @ W1.T  ==  ctx @ W1c + h @ W1h
        hid = (jnp.dot(ctx.astype(bf16), w1c_ref[...], preferred_element_type=f32)
               + jnp.dot(h_new.astype(bf16), w1h_ref[...], preferred_element_type=f32)
               + b_1)
        hid_sc[...] = jnp.maximum(hid, 0.0).astype(bf16)

        h_out_ref[...] = h_new

    # ---- predict[2]: logits for this vocab tile (lane-dense [Bp, TN] output block).
    logits_ref[...] = (jnp.dot(hid_sc[...], w2_ref[...], preferred_element_type=jnp.float32)
                       + b2_ref[...])


def att_gru_decoder(tokens, emb, enc_out, h_prev,
                    w_ih, w_hh, b_ih, b_hh, w1, b1, w2, b2,
                    *, vocab_tile=512):
    B, S, H = enc_out.shape
    V, E = emb.shape
    f32, bf16 = jnp.float32, jnp.bfloat16

    Bp = _round_up(B, 8)
    Ep = _round_up(E, 128)
    Hp = _round_up(H, 128)
    TN = min(vocab_tile, _round_up(V, 128))      # vocab tile width (multiple of 128)
    Vp = _round_up(V, TN)
    num_v_tiles = Vp // TN

    def pad2(a, r, c):
        return jnp.pad(a, ((0, r - a.shape[0]), (0, c - a.shape[1])))

    def pad1(v):
        return jnp.pad(v, (0, Hp - v.shape[0]))

    # ---- one-time parameter re-layout (precomputed once in a real model):
    #      gate weights pre-transposed, zero-padded per gate, re-fused to [*, 3Hp]
    #      so the kernel takes lane-aligned static slices; matmul weights in bf16.
    def gate_pack(w, rp):       # w: [3H, in_dim] -> [rp, 3Hp]
        return jnp.concatenate(
            [pad2(w[g * H:(g + 1) * H].T, rp, Hp) for g in range(3)], axis=1)

    wih_t = gate_pack(w_ih, Ep).astype(bf16)            # [Ep, 3Hp]
    whh_t = gate_pack(w_hh, Hp).astype(bf16)            # [Hp, 3Hp]

    biases = jnp.zeros((8, Hp), f32)                    # packed bias rows
    biases = biases.at[0].set(pad1(b_ih[:H] + b_hh[:H]))                 # r
    biases = biases.at[1].set(pad1(b_ih[H:2 * H] + b_hh[H:2 * H]))       # z
    biases = biases.at[2].set(pad1(b_ih[2 * H:]))                        # n (input part)
    biases = biases.at[3].set(pad1(b_hh[2 * H:]))                        # n (hidden part)
    biases = biases.at[4].set(pad1(b1))                                  # predict[0] bias

    w1c_t = pad2(w1[:, :H].T, Hp, Hp).astype(bf16)      # [Hp, Hp] (context half of W1)
    w1h_t = pad2(w1[:, H:].T, Hp, Hp).astype(bf16)      # [Hp, Hp] (hidden half of W1)
    w2_t = pad2(w2.T, Hp, Vp).astype(bf16)              # [Hp, Vp]
    b2_p = jnp.pad(b2, (0, Vp - V)).reshape(1, Vp).astype(f32)

    # ---- activations: embedding gather done once on the wrapper side ([B,E] fetch),
    #      then padded to sublane/lane-aligned shapes; bf16 halves DMA bytes.
    x = jnp.take(emb, tokens, axis=0)                    # [B, E]
    x_p = pad2(x, Bp, Ep).astype(bf16)
    enc_p = jnp.pad(enc_out, ((0, Bp - B), (0, 0), (0, Hp - H))).astype(bf16)
    h_p = pad2(h_prev, Bp, Hp).astype(f32)

    def run(resident_mode):
        def rspec(shape, idx):
            if resident_mode is None:
                return pl.BlockSpec(shape, idx)
            return pl.BlockSpec(shape, idx, pipeline_mode=resident_mode)

        r2 = lambda j: (0, 0)
        r3 = lambda j: (0, 0, 0)
        vt = lambda j: (0, j)

        grid_spec = pltpu.PrefetchScalarGridSpec(
            num_scalar_prefetch=0,
            grid=(num_v_tiles,),
            in_specs=[
                rspec((Bp, Ep), r2),              # gathered embedding rows
                rspec((Bp, S, Hp), r3),           # encoder output
                rspec((Bp, Hp), r2),              # previous hidden state
                rspec((Ep, 3 * Hp), r2),          # W_ih^T  (r|z|n)
                rspec((Hp, 3 * Hp), r2),          # W_hh^T  (r|z|n)
                rspec((8, Hp), r2),               # packed bias rows
                rspec((Hp, Hp), r2),              # W1 (context half)^T
                rspec((Hp, Hp), r2),              # W1 (hidden half)^T
                pl.BlockSpec((Hp, TN), vt),       # W2^T vocab tile (default double-buffered)
                pl.BlockSpec((1, TN), vt),        # b2 vocab tile
            ],
            out_specs=(
                pl.BlockSpec((Bp, TN), vt),       # lane-dense logits tile
                pl.BlockSpec((Bp, Hp), r2),       # new hidden state (written at j == 0)
            ),
            scratch_shapes=[pltpu.VMEM((Bp, Hp), bf16)],   # ReLU activations (hid)
        )

        out = pl.pallas_call(
            att_gru_decoder_kernel,
            out_shape=(jax.ShapeDtypeStruct((Bp, Vp), f32),
                       jax.ShapeDtypeStruct((Bp, Hp), f32)),
            grid_spec=grid_spec,
            compiler_params=pltpu.CompilerParams(
                dimension_semantics=("arbitrary",)),   # hid scratch carried across vocab tiles
        )(x_p, enc_p, h_p, wih_t, whh_t, biases, w1c_t, w1h_t, w2_t, b2_p)
        return jax.block_until_ready(out)

    try:
        logits_p, h_new_p = run(pl.Buffered(1))   # single-buffer the resident blocks
    except Exception:
        # TODO(synk): drop this fallback once pipeline_mode=pl.Buffered(1) on resident
        # blocks is confirmed supported on the target JAX build.
        logits_p, h_new_p = run(None)

    return logits_p[:B, :V], h_new_p[:B, :H]


def reference(tokens, emb, enc_out, h_prev,
              w_ih, w_hh, b_ih, b_hh, w1, b1, w2, b2):
    """Pure-JAX f32 reference mirroring the PyTorch forward exactly."""
    H = h_prev.shape[1]
    x = emb[tokens]
    gi = x @ w_ih.T + b_ih
    gh = h_prev @ w_hh.T + b_hh
    r = jax.nn.sigmoid(gi[:, :H] + gh[:, :H])
    z = jax.nn.sigmoid(gi[:, H:2 * H] + gh[:, H:2 * H])
    n = jnp.tanh(gi[:, 2 * H:] + r * gh[:, 2 * H:])
    h_new = (1.0 - z) * n + z * h_prev
    scores = jnp.einsum('bh,bsh->bs', h_new, enc_out)
    attn = jax.nn.softmax(scores, axis=-1)
    ctx = jnp.einsum('bs,bsh->bh', attn, enc_out)
    hid = jnp.maximum(jnp.concatenate([ctx, h_new], axis=-1) @ w1.T + b1, 0.0)
    logits = hid @ w2.T + b2
    return logits, h_new


if __name__ == "__main__":
    B, S, H, E, V = 2, 8, 32, 16, 64

    key = jax.random.PRNGKey(0)
    ks = jax.random.split(key, 12)

    def uni(k, shape, fan_in):
        bound = 1.0 / jnp.sqrt(jnp.asarray(fan_in, jnp.float32))
        return jax.random.uniform(k, shape, jnp.float32, -bound, bound)

    # parameters (deterministic synthetic init, PyTorch-like shapes)
    emb  = jax.random.normal(ks[0], (V, E), jnp.float32)
    w_ih = uni(ks[1], (3 * H, E), H)
    w_hh = uni(ks[2], (3 * H, H), H)
    b_ih = uni(ks[3], (3 * H,), H)
    b_hh = uni(ks[4], (3 * H,), H)
    w1   = uni(ks[5], (H, 2 * H), 2 * H)
    b1   = uni(ks[6], (H,), 2 * H)
    w2   = uni(ks[7], (V, H), H)
    b2   = uni(ks[8], (V,), H)

    # inputs
    tokens  = jax.random.randint(ks[9], (B,), 0, V, jnp.int32)
    enc_out = jax.random.normal(ks[10], (B, S, H), jnp.float32)
    h_prev  = jax.random.normal(ks[11], (B, H), jnp.float32)
    # NOTE: encoder_hidden is unused by the reference forward, so it is omitted.

    logits, h_new = att_gru_decoder(tokens, emb, enc_out, h_prev,
                                    w_ih, w_hh, b_ih, b_hh, w1, b1, w2, b2)
    jax.block_until_ready((logits, h_new))

    ref_logits, ref_h = reference(tokens, emb, enc_out, h_prev,
                                  w_ih, w_hh, b_ih, b_hh, w1, b1, w2, b2)

    assert logits.shape == (B, V) and h_new.shape == (B, H)
    # bf16 weights / matmul inputs (f32 accumulation) vs. the pure-f32 reference.
    assert jnp.allclose(logits, ref_logits, atol=3e-2, rtol=3e-2)
    assert jnp.allclose(h_new, ref_h, atol=3e-2, rtol=3e-2)

    print("KERNEL_OK")
</pallas_src>

<mosaic_0001>
module attributes {stable_mosaic.version = 11 : i64} {
  func.func @att_gru_decoder_kernel(%arg0: i32, %arg1: memref<8x128xbf16, #tpu.memory_space<vmem>>, %arg2: memref<8x8x128xbf16, #tpu.memory_space<vmem>>, %arg3: memref<8x128xf32, #tpu.memory_space<vmem>>, %arg4: memref<128x384xbf16, #tpu.memory_space<vmem>>, %arg5: memref<128x384xbf16, #tpu.memory_space<vmem>>, %arg6: memref<8x128xf32, #tpu.memory_space<vmem>>, %arg7: memref<128x128xbf16, #tpu.memory_space<vmem>>, %arg8: memref<128x128xbf16, #tpu.memory_space<vmem>>, %arg9: memref<128x128xbf16, #tpu.memory_space<vmem>>, %arg10: memref<1x128xf32, #tpu.memory_space<vmem>>, %arg11: memref<8x128xf32, #tpu.memory_space<vmem>>, %arg12: memref<8x128xf32, #tpu.memory_space<vmem>>, %arg13: memref<8x128xbf16, #tpu.memory_space<vmem>>) attributes {dimension_semantics = [#tpu.dimension_semantics<arbitrary>], iteration_bounds = array<i64: 1>, scalar_prefetch = 0 : i64, scratch_operands = 1 : i64, tpu.core_type = #tpu.core_type<tc>, window_params = [{pipeline_mode = #tpu.pipeline_mode<synchronous>, transform_indices = @transform_0, window_bounds = array<i64: 8, 128>}, {pipeline_mode = #tpu.pipeline_mode<synchronous>, transform_indices = @transform_1, window_bounds = array<i64: 8, 8, 128>}, {pipeline_mode = #tpu.pipeline_mode<synchronous>, transform_indices = @transform_2, window_bounds = array<i64: 8, 128>}, {pipeline_mode = #tpu.pipeline_mode<synchronous>, transform_indices = @transform_3, window_bounds = array<i64: 128, 384>}, {pipeline_mode = #tpu.pipeline_mode<synchronous>, transform_indices = @transform_4, window_bounds = array<i64: 128, 384>}, {pipeline_mode = #tpu.pipeline_mode<synchronous>, transform_indices = @transform_5, window_bounds = array<i64: 8, 128>}, {pipeline_mode = #tpu.pipeline_mode<synchronous>, transform_indices = @transform_6, window_bounds = array<i64: 128, 128>}, {pipeline_mode = #tpu.pipeline_mode<synchronous>, transform_indices = @transform_7, window_bounds = array<i64: 128, 128>}, {transform_indices = @transform_8, window_bounds = array<i64: 128, 128>}, {transform_indices = @transform_9, window_bounds = array<i64: 1, 128>}, {transform_indices = @transform_10, window_bounds = array<i64: 8, 128>}, {pipeline_mode = #tpu.pipeline_mode<synchronous>, transform_indices = @transform_11, window_bounds = array<i64: 8, 128>}]} {
    %c0_i32 = arith.constant 0 : i32
    %0 = arith.cmpi eq, %arg0, %c0_i32 : i32
    %1 = arith.extui %0 : i1 to i32
    %c0_i32_0 = arith.constant 0 : i32
    %2 = arith.cmpi ne, %1, %c0_i32_0 : i32
    scf.if %2 {
      %c0_8 = arith.constant 0 : index
      %c0_9 = arith.constant 0 : index
      %10 = vector.load %arg1[%c0_8, %c0_9] : memref<8x128xbf16, #tpu.memory_space<vmem>>, vector<8x128xbf16>
      %c0_10 = arith.constant 0 : index
      %c0_11 = arith.constant 0 : index
      %11 = vector.load %arg3[%c0_10, %c0_11] : memref<8x128xf32, #tpu.memory_space<vmem>>, vector<8x128xf32>
      %c0_12 = arith.constant 0 : index
      %c0_13 = arith.constant 0 : index
      %c0_14 = arith.constant 0 : index
      %12 = vector.load %arg2[%c0_12, %c0_13, %c0_14] : memref<8x8x128xbf16, #tpu.memory_space<vmem>>, vector<8x8x128xbf16>
      %c0_15 = arith.constant 0 : index
      %c0_16 = arith.constant 0 : index
      %13 = vector.load %arg4[%c0_15, %c0_16] : memref<128x384xbf16, #tpu.memory_space<vmem>>, vector<128x384xbf16>
      %cst_17 = arith.constant dense<0.000000e+00> : vector<8x384xf32>
      %14 = tpu.matmul %10, %13, %cst_17 {dimension_numbers = #tpu.dot_dimension_numbers<[1], [0], [0], [1], [0, 0, 1, 1], [], []>} : vector<8x128xbf16>, vector<128x384xbf16>, vector<8x384xf32> -> vector<8x384xf32>
      %15 = arith.truncf %11 : vector<8x128xf32> to vector<8x128xbf16>
      %c0_18 = arith.constant 0 : index
      %c0_19 = arith.constant 0 : index
      %16 = vector.load %arg5[%c0_18, %c0_19] : memref<128x384xbf16, #tpu.memory_space<vmem>>, vector<128x384xbf16>
      %cst_20 = arith.constant dense<0.000000e+00> : vector<8x384xf32>
      %17 = tpu.matmul %15, %16, %cst_20 {dimension_numbers = #tpu.dot_dimension_numbers<[1], [0], [0], [1], [0, 0, 1, 1], [], []>} : vector<8x128xbf16>, vector<128x384xbf16>, vector<8x384xf32> -> vector<8x384xf32>
      %c0_21 = arith.constant 0 : index
      %c0_22 = arith.constant 0 : index
      %18 = vector.load %arg6[%c0_21, %c0_22] : memref<8x128xf32, #tpu.memory_space<vmem>>, vector<8x128xf32>
      %19 = vector.extract_strided_slice %18 {offsets = [0, 0], sizes = [1, 128], strides = [1, 1]} : vector<8x128xf32> to vector<1x128xf32>
      %20 = vector.extract_strided_slice %18 {offsets = [1, 0], sizes = [1, 128], strides = [1, 1]} : vector<8x128xf32> to vector<1x128xf32>
      %21 = vector.extract_strided_slice %18 {offsets = [2, 0], sizes = [1, 128], strides = [1, 1]} : vector<8x128xf32> to vector<1x128xf32>
      %22 = vector.extract_strided_slice %18 {offsets = [3, 0], sizes = [1, 128], strides = [1, 1]} : vector<8x128xf32> to vector<1x128xf32>
      %23 = vector.extract_strided_slice %18 {offsets = [4, 0], sizes = [1, 128], strides = [1, 1]} : vector<8x128xf32> to vector<1x128xf32>
      %24 = vector.extract_strided_slice %14 {offsets = [0, 0], sizes = [8, 128], strides = [1, 1]} : vector<8x384xf32> to vector<8x128xf32>
      %25 = vector.extract_strided_slice %17 {offsets = [0, 0], sizes = [8, 128], strides = [1, 1]} : vector<8x384xf32> to vector<8x128xf32>
      %26 = arith.addf %24, %25 : vector<8x128xf32>
      %27 = vector.broadcast %19 : vector<1x128xf32> to vector<8x128xf32>
      %28 = arith.addf %26, %27 : vector<8x128xf32>
      %29 = arith.negf %28 : vector<8x128xf32>
      %30 = math.exp %29 : vector<8x128xf32>
      %cst_23 = arith.constant 1.000000e+00 : f32
      %31 = vector.broadcast %cst_23 : f32 to vector<8x128xf32>
      %32 = arith.addf %31, %30 : vector<8x128xf32>
      %33 = arith.divf %31, %32 : vector<8x128xf32>
      %34 = vector.extract_strided_slice %14 {offsets = [0, 128], sizes = [8, 128], strides = [1, 1]} : vector<8x384xf32> to vector<8x128xf32>
      %35 = vector.extract_strided_slice %17 {offsets = [0, 128], sizes = [8, 128], strides = [1, 1]} : vector<8x384xf32> to vector<8x128xf32>
      %36 = arith.addf %34, %35 : vector<8x128xf32>
      %37 = vector.broadcast %20 : vector<1x128xf32> to vector<8x128xf32>
      %38 = arith.addf %36, %37 : vector<8x128xf32>
      %39 = arith.negf %38 : vector<8x128xf32>
      %40 = math.exp %39 : vector<8x128xf32>
      %cst_24 = arith.constant 1.000000e+00 : f32
      %41 = vector.broadcast %cst_24 : f32 to vector<8x128xf32>
      %42 = arith.addf %41, %40 : vector<8x128xf32>
      %43 = arith.divf %41, %42 : vector<8x128xf32>
      %44 = vector.extract_strided_slice %14 {offsets = [0, 256], sizes = [8, 128], strides = [1, 1]} : vector<8x384xf32> to vector<8x128xf32>
      %45 = vector.broadcast %21 : vector<1x128xf32> to vector<8x128xf32>
      %46 = arith.addf %44, %45 : vector<8x128xf32>
      %47 = vector.extract_strided_slice %17 {offsets = [0, 256], sizes = [8, 128], strides = [1, 1]} : vector<8x384xf32> to vector<8x128xf32>
      %48 = vector.broadcast %22 : vector<1x128xf32> to vector<8x128xf32>
      %49 = arith.addf %47, %48 : vector<8x128xf32>
      %50 = arith.mulf %33, %49 : vector<8x128xf32>
      %51 = arith.addf %46, %50 : vector<8x128xf32>
      %52 = math.tanh %51 : vector<8x128xf32>
      %cst_25 = arith.constant 1.000000e+00 : f32
      %53 = vector.broadcast %cst_25 : f32 to vector<8x128xf32>
      %54 = arith.subf %53, %43 : vector<8x128xf32>
      %55 = arith.mulf %54, %52 : vector<8x128xf32>
      %56 = arith.mulf %43, %11 : vector<8x128xf32>
      %57 = arith.addf %55, %56 : vector<8x128xf32>
      %58 = arith.extf %12 : vector<8x8x128xbf16> to vector<8x8x128xf32>
      %59 = vector.shape_cast %57 : vector<8x128xf32> to vector<8x1x128xf32>
      %60 = vector.broadcast %59 : vector<8x1x128xf32> to vector<8x8x128xf32>
      %61 = arith.mulf %60, %58 : vector<8x8x128xf32>
      %cst_26 = arith.constant dense<0.000000e+00> : vector<8x8xf32>
      %62 = vector.multi_reduction <add>, %61, %cst_26 [2] : vector<8x8x128xf32> to vector<8x8xf32>
      %cst_27 = arith.constant dense<0xFF800000> : vector<8xf32>
      %63 = vector.multi_reduction <maximumf>, %62, %cst_27 [1] : vector<8x8xf32> to vector<8xf32>
      %64 = vector.shape_cast %63 : vector<8xf32> to vector<8x1xf32>
      %65 = vector.broadcast %64 : vector<8x1xf32> to vector<8x8xf32>
      %66 = arith.subf %62, %65 : vector<8x8xf32>
      %67 = math.exp %66 : vector<8x8xf32>
      %cst_28 = arith.constant dense<0.000000e+00> : vector<8xf32>
      %68 = vector.multi_reduction <add>, %67, %cst_28 [1] : vector<8x8xf32> to vector<8xf32>
      %69 = vector.shape_cast %68 : vector<8xf32> to vector<8x1xf32>
      %70 = tpu.reciprocal %69 {approx = true} : vector<8x1xf32> -> vector<8x1xf32>
      %71 = arith.mulf %69, %70 : vector<8x1xf32>
      %cst_29 = arith.constant 2.000000e+00 : f32
      %72 = vector.broadcast %cst_29 : f32 to vector<8x1xf32>
      %73 = arith.subf %72, %71 : vector<8x1xf32>
      %74 = arith.mulf %70, %73 : vector<8x1xf32>
      %75 = vector.broadcast %74 : vector<8x1xf32> to vector<8x8xf32>
      %76 = arith.mulf %67, %75 : vector<8x8xf32>
      %77 = arith.truncf %76 : vector<8x8xf32> to vector<8x8xbf16>
      %78 = vector.shape_cast %77 : vector<8x8xbf16> to vector<8x1x8xbf16>
      "tpu.trace_start"() <{level = 10 : i32, message = "bms,bsh->bmh"}> : () -> ()
      %cst_30 = arith.constant dense<0.000000e+00> : vector<8x1x128xf32>
      %79 = tpu.matmul %78, %12, %cst_30 {dimension_numbers = #tpu.dot_dimension_numbers<[2], [1], [1], [2], [0, 0, 0, 1, 1, 2], [0], [0]>} : vector<8x1x8xbf16>, vector<8x8x128xbf16>, vector<8x1x128xf32> -> vector<8x1x128xf32>
      "tpu.trace_stop"() : () -> ()
      %80 = vector.shape_cast %79 : vector<8x1x128xf32> to vector<8x128xf32>
      %81 = arith.truncf %80 : vector<8x128xf32> to vector<8x128xbf16>
      %c0_31 = arith.constant 0 : index
      %c0_32 = arith.constant 0 : index
      %82 = vector.load %arg7[%c0_31, %c0_32] : memref<128x128xbf16, #tpu.memory_space<vmem>>, vector<128x128xbf16>
      %cst_33 = arith.constant dense<0.000000e+00> : vector<8x128xf32>
      %83 = tpu.matmul %81, %82, %cst_33 {dimension_numbers = #tpu.dot_dimension_numbers<[1], [0], [0], [1], [0, 0, 1, 1], [], []>} : vector<8x128xbf16>, vector<128x128xbf16>, vector<8x128xf32> -> vector<8x128xf32>
      %84 = arith.truncf %57 : vector<8x128xf32> to vector<8x128xbf16>
      %c0_34 = arith.constant 0 : index
      %c0_35 = arith.constant 0 : index
      %85 = vector.load %arg8[%c0_34, %c0_35] : memref<128x128xbf16, #tpu.memory_space<vmem>>, vector<128x128xbf16>
      %cst_36 = arith.constant dense<0.000000e+00> : vector<8x128xf32>
      %86 = tpu.matmul %84, %85, %cst_36 {dimension_numbers = #tpu.dot_dimension_numbers<[1], [0], [0], [1], [0, 0, 1, 1], [], []>} : vector<8x128xbf16>, vector<128x128xbf16>, vector<8x128xf32> -> vector<8x128xf32>
      %87 = arith.addf %83, %86 : vector<8x128xf32>
      %88 = vector.broadcast %23 : vector<1x128xf32> to vector<8x128xf32>
      %89 = arith.addf %87, %88 : vector<8x128xf32>
      %cst_37 = arith.constant 0.000000e+00 : f32
      %90 = vector.broadcast %cst_37 : f32 to vector<8x128xf32>
      %91 = arith.maximumf %89, %90 : vector<8x128xf32>
      %92 = arith.truncf %91 : vector<8x128xf32> to vector<8x128xbf16>
      %c0_38 = arith.constant 0 : index
      %c0_39 = arith.constant 0 : index
      %93 = vector.load %arg13[%c0_38, %c0_39] : memref<8x128xbf16, #tpu.memory_space<vmem>>, vector<8x128xbf16>
      tpu.vector_store %arg13[%c0_38, %c0_39], %92 {strides = array<i32>} : memref<8x128xbf16, #tpu.memory_space<vmem>>, vector<8x128xbf16>,
      %c0_40 = arith.constant 0 : index
      %c0_41 = arith.constant 0 : index
      %94 = vector.load %arg12[%c0_40, %c0_41] : memref<8x128xf32, #tpu.memory_space<vmem>>, vector<8x128xf32>
      tpu.vector_store %arg12[%c0_40, %c0_41], %57 {strides = array<i32>} : memref<8x128xf32, #tpu.memory_space<vmem>>, vector<8x128xf32>,
    } else {
    }
    %c0 = arith.constant 0 : index
    %c0_1 = arith.constant 0 : index
    %3 = vector.load %arg13[%c0, %c0_1] : memref<8x128xbf16, #tpu.memory_space<vmem>>, vector<8x128xbf16>
    %c0_2 = arith.constant 0 : index
    %c0_3 = arith.constant 0 : index
    %4 = vector.load %arg9[%c0_2, %c0_3] : memref<128x128xbf16, #tpu.memory_space<vmem>>, vector<128x128xbf16>
    %cst = arith.constant dense<0.000000e+00> : vector<8x128xf32>
    %5 = tpu.matmul %3, %4, %cst {dimension_numbers = #tpu.dot_dimension_numbers<[1], [0], [0], [1], [0, 0, 1, 1], [], []>} : vector<8x128xbf16>, vector<128x128xbf16>, vector<8x128xf32> -> vector<8x128xf32>
    %c0_4 = arith.constant 0 : index
    %c0_5 = arith.constant 0 : index
    %6 = vector.load %arg10[%c0_4, %c0_5] : memref<1x128xf32, #tpu.memory_space<vmem>>, vector<1x128xf32>
    %7 = vector.broadcast %6 : vector<1x128xf32> to vector<8x128xf32>
    %8 = arith.addf %5, %7 : vector<8x128xf32>
    %c0_6 = arith.constant 0 : index
    %c0_7 = arith.constant 0 : index
    %9 = vector.load %arg11[%c0_6, %c0_7] : memref<8x128xf32, #tpu.memory_space<vmem>>, vector<8x128xf32>
    tpu.vector_store %arg11[%c0_6, %c0_7], %8 {strides = array<i32>} : memref<8x128xf32, #tpu.memory_space<vmem>>, vector<8x128xf32>,
    return
  }
  func.func @transform_0(%arg0: i32) -> (i32, i32) {
    %c0_i32 = arith.constant 0 : i32
    %c0_i32_0 = arith.constant 0 : i32
    %c0_i32_1 = arith.constant 0 : i32
    return %c0_i32, %c0_i32_0 : i32, i32
  }
  func.func @transform_1(%arg0: i32) -> (i32, i32, i32) {
    %c0_i32 = arith.constant 0 : i32
    %c0_i32_0 = arith.constant 0 : i32
    %c0_i32_1 = arith.constant 0 : i32
    %c0_i32_2 = arith.constant 0 : i32
    return %c0_i32, %c0_i32_0, %c0_i32_1 : i32, i32, i32
  }
  func.func @transform_2(%arg0: i32) -> (i32, i32) {
    %c0_i32 = arith.constant 0 : i32
    %c0_i32_0 = arith.constant 0 : i32
    %c0_i32_1 = arith.constant 0 : i32
    return %c0_i32, %c0_i32_0 : i32, i32
  }
  func.func @transform_3(%arg0: i32) -> (i32, i32) {
    %c0_i32 = arith.constant 0 : i32
    %c0_i32_0 = arith.constant 0 : i32
    %c0_i32_1 = arith.constant 0 : i32
    return %c0_i32, %c0_i32_0 : i32, i32
  }
  func.func @transform_4(%arg0: i32) -> (i32, i32) {
    %c0_i32 = arith.constant 0 : i32
    %c0_i32_0 = arith.constant 0 : i32
    %c0_i32_1 = arith.constant 0 : i32
    return %c0_i32, %c0_i32_0 : i32, i32
  }
  func.func @transform_5(%arg0: i32) -> (i32, i32) {
    %c0_i32 = arith.constant 0 : i32
    %c0_i32_0 = arith.constant 0 : i32
    %c0_i32_1 = arith.constant 0 : i32
    return %c0_i32, %c0_i32_0 : i32, i32
  }
  func.func @transform_6(%arg0: i32) -> (i32, i32) {
    %c0_i32 = arith.constant 0 : i32
    %c0_i32_0 = arith.constant 0 : i32
    %c0_i32_1 = arith.constant 0 : i32
    return %c0_i32, %c0_i32_0 : i32, i32
  }
  func.func @transform_7(%arg0: i32) -> (i32, i32) {
    %c0_i32 = arith.constant 0 : i32
    %c0_i32_0 = arith.constant 0 : i32
    %c0_i32_1 = arith.constant 0 : i32
    return %c0_i32, %c0_i32_0 : i32, i32
  }
  func.func @transform_8(%arg0: i32) -> (i32, i32) {
    %c0_i32 = arith.constant 0 : i32
    %c0_i32_0 = arith.constant 0 : i32
    return %c0_i32, %arg0 : i32, i32
  }
  func.func @transform_9(%arg0: i32) -> (i32, i32) {
    %c0_i32 = arith.constant 0 : i32
    %c0_i32_0 = arith.constant 0 : i32
    return %c0_i32, %arg0 : i32, i32
  }
  func.func @transform_10(%arg0: i32) -> (i32, i32) {
    %c0_i32 = arith.constant 0 : i32
    %c0_i32_0 = arith.constant 0 : i32
    return %c0_i32, %arg0 : i32, i32
  }
  func.func @transform_11(%arg0: i32) -> (i32, i32) {
    %c0_i32 = arith.constant 0 : i32
    %c0_i32_0 = arith.constant 0 : i32
    %c0_i32_1 = arith.constant 0 : i32
    return %c0_i32, %c0_i32_0 : i32, i32
  }
}

module attributes {stable_mosaic.version = 11 : i64} {
  func.func @att_gru_decoder_kernel(%arg0: i32, %arg1: memref<8x128xbf16, #tpu.memory_space<vmem>>, %arg2: memref<8x8x128xbf16, #tpu.memory_space<vmem>>, %arg3: memref<8x128xf32, #tpu.memory_space<vmem>>, %arg4: memref<128x384xbf16, #tpu.memory_space<vmem>>, %arg5: memref<128x384xbf16, #tpu.memory_space<vmem>>, %arg6: memref<8x128xf32, #tpu.memory_space<vmem>>, %arg7: memref<128x128xbf16, #tpu.memory_space<vmem>>, %arg8: memref<128x128xbf16, #tpu.memory_space<vmem>>, %arg9: memref<128x128xbf16, #tpu.memory_space<vmem>>, %arg10: memref<1x128xf32, #tpu.memory_space<vmem>>, %arg11: memref<8x128xf32, #tpu.memory_space<vmem>>, %arg12: memref<8x128xf32, #tpu.memory_space<vmem>>, %arg13: memref<8x128xbf16, #tpu.memory_space<vmem>>) attributes {dimension_semantics = [#tpu.dimension_semantics<arbitrary>], iteration_bounds = array<i64: 1>, scalar_prefetch = 0 : i64, scratch_operands = 1 : i64, tpu.core_type = #tpu.core_type<tc>, window_params = [{pipeline_mode = #tpu.pipeline_mode<synchronous>, transform_indices = @transform_0, window_bounds = array<i64: 8, 128>}, {pipeline_mode = #tpu.pipeline_mode<synchronous>, transform_indices = @transform_1, window_bounds = array<i64: 8, 8, 128>}, {pipeline_mode = #tpu.pipeline_mode<synchronous>, transform_indices = @transform_2, window_bounds = array<i64: 8, 128>}, {pipeline_mode = #tpu.pipeline_mode<synchronous>, transform_indices = @transform_3, window_bounds = array<i64: 128, 384>}, {pipeline_mode = #tpu.pipeline_mode<synchronous>, transform_indices = @transform_4, window_bounds = array<i64: 128, 384>}, {pipeline_mode = #tpu.pipeline_mode<synchronous>, transform_indices = @transform_5, window_bounds = array<i64: 8, 128>}, {pipeline_mode = #tpu.pipeline_mode<synchronous>, transform_indices = @transform_6, window_bounds = array<i64: 128, 128>}, {pipeline_mode = #tpu.pipeline_mode<synchronous>, transform_indices = @transform_7, window_bounds = array<i64: 128, 128>}, {transform_indices = @transform_8, window_bounds = array<i64: 128, 128>}, {transform_indices = @transform_9, window_bounds = array<i64: 1, 128>}, {transform_indices = @transform_10, window_bounds = array<i64: 8, 128>}, {pipeline_mode = #tpu.pipeline_mode<synchronous>, transform_indices = @transform_11, window_bounds = array<i64: 8, 128>}]} {
    %c0_i32 = arith.constant 0 : i32
    %0 = arith.cmpi eq, %arg0, %c0_i32 : i32
    %1 = arith.extui %0 : i1 to i32
    %c0_i32_0 = arith.constant 0 : i32
    %2 = arith.cmpi ne, %1, %c0_i32_0 : i32
    scf.if %2 {
      %c0_8 = arith.constant 0 : index
      %c0_9 = arith.constant 0 : index
      %10 = vector.load %arg1[%c0_8, %c0_9] : memref<8x128xbf16, #tpu.memory_space<vmem>>, vector<8x128xbf16>
      %c0_10 = arith.constant 0 : index
      %c0_11 = arith.constant 0 : index
      %11 = vector.load %arg3[%c0_10, %c0_11] : memref<8x128xf32, #tpu.memory_space<vmem>>, vector<8x128xf32>
      %c0_12 = arith.constant 0 : index
      %c0_13 = arith.constant 0 : index
      %c0_14 = arith.constant 0 : index
      %12 = vector.load %arg2[%c0_12, %c0_13, %c0_14] : memref<8x8x128xbf16, #tpu.memory_space<vmem>>, vector<8x8x128xbf16>
      %c0_15 = arith.constant 0 : index
      %c0_16 = arith.constant 0 : index
      %13 = vector.load %arg4[%c0_15, %c0_16] : memref<128x384xbf16, #tpu.memory_space<vmem>>, vector<128x384xbf16>
      %cst_17 = arith.constant dense<0.000000e+00> : vector<8x384xf32>
      %14 = tpu.matmul %10, %13, %cst_17 {dimension_numbers = #tpu.dot_dimension_numbers<[1], [0], [0], [1], [0, 0, 1, 1], [], []>} : vector<8x128xbf16>, vector<128x384xbf16>, vector<8x384xf32> -> vector<8x384xf32>
      %15 = arith.truncf %11 : vector<8x128xf32> to vector<8x128xbf16>
      %c0_18 = arith.constant 0 : index
      %c0_19 = arith.constant 0 : index
      %16 = vector.load %arg5[%c0_18, %c0_19] : memref<128x384xbf16, #tpu.memory_space<vmem>>, vector<128x384xbf16>
      %cst_20 = arith.constant dense<0.000000e+00> : vector<8x384xf32>
      %17 = tpu.matmul %15, %16, %cst_20 {dimension_numbers = #tpu.dot_dimension_numbers<[1], [0], [0], [1], [0, 0, 1, 1], [], []>} : vector<8x128xbf16>, vector<128x384xbf16>, vector<8x384xf32> -> vector<8x384xf32>
      %c0_21 = arith.constant 0 : index
      %c0_22 = arith.constant 0 : index
      %18 = vector.load %arg6[%c0_21, %c0_22] : memref<8x128xf32, #tpu.memory_space<vmem>>, vector<8x128xf32>
      %19 = vector.extract_strided_slice %18 {offsets = [0, 0], sizes = [1, 128], strides = [1, 1]} : vector<8x128xf32> to vector<1x128xf32>
      %20 = vector.extract_strided_slice %18 {offsets = [1, 0], sizes = [1, 128], strides = [1, 1]} : vector<8x128xf32> to vector<1x128xf32>
      %21 = vector.extract_strided_slice %18 {offsets = [2, 0], sizes = [1, 128], strides = [1, 1]} : vector<8x128xf32> to vector<1x128xf32>
      %22 = vector.extract_strided_slice %18 {offsets = [3, 0], sizes = [1, 128], strides = [1, 1]} : vector<8x128xf32> to vector<1x128xf32>
      %23 = vector.extract_strided_slice %18 {offsets = [4, 0], sizes = [1, 128], strides = [1, 1]} : vector<8x128xf32> to vector<1x128xf32>
      %24 = vector.extract_strided_slice %14 {offsets = [0, 0], sizes = [8, 128], strides = [1, 1]} : vector<8x384xf32> to vector<8x128xf32>
      %25 = vector.extract_strided_slice %17 {offsets = [0, 0], sizes = [8, 128], strides = [1, 1]} : vector<8x384xf32> to vector<8x128xf32>
      %26 = arith.addf %24, %25 : vector<8x128xf32>
      %27 = vector.broadcast %19 : vector<1x128xf32> to vector<8x128xf32>
      %28 = arith.addf %26, %27 : vector<8x128xf32>
      %29 = arith.negf %28 : vector<8x128xf32>
      %30 = math.exp %29 : vector<8x128xf32>
      %cst_23 = arith.constant 1.000000e+00 : f32
      %31 = vector.broadcast %cst_23 : f32 to vector<8x128xf32>
      %32 = arith.addf %31, %30 : vector<8x128xf32>
      %33 = arith.divf %31, %32 : vector<8x128xf32>
      %34 = vector.extract_strided_slice %14 {offsets = [0, 128], sizes = [8, 128], strides = [1, 1]} : vector<8x384xf32> to vector<8x128xf32>
      %35 = vector.extract_strided_slice %17 {offsets = [0, 128], sizes = [8, 128], strides = [1, 1]} : vector<8x384xf32> to vector<8x128xf32>
      %36 = arith.addf %34, %35 : vector<8x128xf32>
      %37 = vector.broadcast %20 : vector<1x128xf32> to vector<8x128xf32>
      %38 = arith.addf %36, %37 : vector<8x128xf32>
      %39 = arith.negf %38 : vector<8x128xf32>
      %40 = math.exp %39 : vector<8x128xf32>
      %cst_24 = arith.constant 1.000000e+00 : f32
      %41 = vector.broadcast %cst_24 : f32 to vector<8x128xf32>
      %42 = arith.addf %41, %40 : vector<8x128xf32>
      %43 = arith.divf %41, %42 : vector<8x128xf32>
      %44 = vector.extract_strided_slice %14 {offsets = [0, 256], sizes = [8, 128], strides = [1, 1]} : vector<8x384xf32> to vector<8x128xf32>
      %45 = vector.broadcast %21 : vector<1x128xf32> to vector<8x128xf32>
      %46 = arith.addf %44, %45 : vector<8x128xf32>
      %47 = vector.extract_strided_slice %17 {offsets = [0, 256], sizes = [8, 128], strides = [1, 1]} : vector<8x384xf32> to vector<8x128xf32>
      %48 = vector.broadcast %22 : vector<1x128xf32> to vector<8x128xf32>
      %49 = arith.addf %47, %48 : vector<8x128xf32>
      %50 = arith.mulf %33, %49 : vector<8x128xf32>
      %51 = arith.addf %46, %50 : vector<8x128xf32>
      %52 = math.tanh %51 : vector<8x128xf32>
      %cst_25 = arith.constant 1.000000e+00 : f32
      %53 = vector.broadcast %cst_25 : f32 to vector<8x128xf32>
      %54 = arith.subf %53, %43 : vector<8x128xf32>
      %55 = arith.mulf %54, %52 : vector<8x128xf32>
      %56 = arith.mulf %43, %11 : vector<8x128xf32>
      %57 = arith.addf %55, %56 : vector<8x128xf32>
      %58 = arith.extf %12 : vector<8x8x128xbf16> to vector<8x8x128xf32>
      %59 = vector.shape_cast %57 : vector<8x128xf32> to vector<8x1x128xf32>
      %60 = vector.broadcast %59 : vector<8x1x128xf32> to vector<8x8x128xf32>
      %61 = arith.mulf %60, %58 : vector<8x8x128xf32>
      %cst_26 = arith.constant dense<0.000000e+00> : vector<8x8xf32>
      %62 = vector.multi_reduction <add>, %61, %cst_26 [2] : vector<8x8x128xf32> to vector<8x8xf32>
      %cst_27 = arith.constant dense<0xFF800000> : vector<8xf32>
      %63 = vector.multi_reduction <maximumf>, %62, %cst_27 [1] : vector<8x8xf32> to vector<8xf32>
      %64 = vector.shape_cast %63 : vector<8xf32> to vector<8x1xf32>
      %65 = vector.broadcast %64 : vector<8x1xf32> to vector<8x8xf32>
      %66 = arith.subf %62, %65 : vector<8x8xf32>
      %67 = math.exp %66 : vector<8x8xf32>
      %cst_28 = arith.constant dense<0.000000e+00> : vector<8xf32>
      %68 = vector.multi_reduction <add>, %67, %cst_28 [1] : vector<8x8xf32> to vector<8xf32>
      %69 = vector.shape_cast %68 : vector<8xf32> to vector<8x1xf32>
      %70 = tpu.reciprocal %69 {approx = true} : vector<8x1xf32> -> vector<8x1xf32>
      %71 = arith.mulf %69, %70 : vector<8x1xf32>
      %cst_29 = arith.constant 2.000000e+00 : f32
      %72 = vector.broadcast %cst_29 : f32 to vector<8x1xf32>
      %73 = arith.subf %72, %71 : vector<8x1xf32>
      %74 = arith.mulf %70, %73 : vector<8x1xf32>
      %75 = vector.broadcast %74 : vector<8x1xf32> to vector<8x8xf32>
      %76 = arith.mulf %67, %75 : vector<8x8xf32>
      %77 = arith.truncf %76 : vector<8x8xf32> to vector<8x8xbf16>
      %78 = vector.shape_cast %77 : vector<8x8xbf16> to vector<8x1x8xbf16>
      "tpu.trace_start"() <{level = 10 : i32, message = "bms,bsh->bmh"}> : () -> ()
      %cst_30 = arith.constant dense<0.000000e+00> : vector<8x1x128xf32>
      %79 = tpu.matmul %78, %12, %cst_30 {dimension_numbers = #tpu.dot_dimension_numbers<[2], [1], [1], [2], [0, 0, 0, 1, 1, 2], [0], [0]>} : vector<8x1x8xbf16>, vector<8x8x128xbf16>, vector<8x1x128xf32> -> vector<8x1x128xf32>
      "tpu.trace_stop"() : () -> ()
      %80 = vector.shape_cast %79 : vector<8x1x128xf32> to vector<8x128xf32>
      %81 = arith.truncf %80 : vector<8x128xf32> to vector<8x128xbf16>
      %c0_31 = arith.constant 0 : index
      %c0_32 = arith.constant 0 : index
      %82 = vector.load %arg7[%c0_31, %c0_32] : memref<128x128xbf16, #tpu.memory_space<vmem>>, vector<128x128xbf16>
      %cst_33 = arith.constant dense<0.000000e+00> : vector<8x128xf32>
      %83 = tpu.matmul %81, %82, %cst_33 {dimension_numbers = #tpu.dot_dimension_numbers<[1], [0], [0], [1], [0, 0, 1, 1], [], []>} : vector<8x128xbf16>, vector<128x128xbf16>, vector<8x128xf32> -> vector<8x128xf32>
      %84 = arith.truncf %57 : vector<8x128xf32> to vector<8x128xbf16>
      %c0_34 = arith.constant 0 : index
      %c0_35 = arith.constant 0 : index
      %85 = vector.load %arg8[%c0_34, %c0_35] : memref<128x128xbf16, #tpu.memory_space<vmem>>, vector<128x128xbf16>
      %cst_36 = arith.constant dense<0.000000e+00> : vector<8x128xf32>
      %86 = tpu.matmul %84, %85, %cst_36 {dimension_numbers = #tpu.dot_dimension_numbers<[1], [0], [0], [1], [0, 0, 1, 1], [], []>} : vector<8x128xbf16>, vector<128x128xbf16>, vector<8x128xf32> -> vector<8x128xf32>
      %87 = arith.addf %83, %86 : vector<8x128xf32>
      %88 = vector.broadcast %23 : vector<1x128xf32> to vector<8x128xf32>
      %89 = arith.addf %87, %88 : vector<8x128xf32>
      %cst_37 = arith.constant 0.000000e+00 : f32
      %90 = vector.broadcast %cst_37 : f32 to vector<8x128xf32>
      %91 = arith.maximumf %89, %90 : vector<8x128xf32>
      %92 = arith.truncf %91 : vector<8x128xf32> to vector<8x128xbf16>
      %c0_38 = arith.constant 0 : index
      %c0_39 = arith.constant 0 : index
      %93 = vector.load %arg13[%c0_38, %c0_39] : memref<8x128xbf16, #tpu.memory_space<vmem>>, vector<8x128xbf16>
      tpu.vector_store %arg13[%c0_38, %c0_39], %92 {strides = array<i32>} : memref<8x128xbf16, #tpu.memory_space<vmem>>, vector<8x128xbf16>,
      %c0_40 = arith.constant 0 : index
      %c0_41 = arith.constant 0 : index
      %94 = vector.load %arg12[%c0_40, %c0_41] : memref<8x128xf32, #tpu.memory_space<vmem>>, vector<8x128xf32>
      tpu.vector_store %arg12[%c0_40, %c0_41], %57 {strides = array<i32>} : memref<8x128xf32, #tpu.memory_space<vmem>>, vector<8x128xf32>,
    } else {
    }
    %c0 = arith.constant 0 : index
    %c0_1 = arith.constant 0 : index
    %3 = vector.load %arg13[%c0, %c0_1] : memref<8x128xbf16, #tpu.memory_space<vmem>>, vector<8x128xbf16>
    %c0_2 = arith.constant 0 : index
    %c0_3 = arith.constant 0 : index
    %4 = vector.load %arg9[%c0_2, %c0_3] : memref<128x128xbf16, #tpu.memory_space<vmem>>, vector<128x128xbf16>
    %cst = arith.constant dense<0.000000e+00> : vector<8x128xf32>
    %5 = tpu.matmul %3, %4, %cst {dimension_numbers = #tpu.dot_dimension_numbers<[1], [0], [0], [1], [0, 0, 1, 1], [], []>} : vector<8x128xbf16>, vector<128x128xbf16>, vector<8x128xf32> -> vector<8x128xf32>
    %c0_4 = arith.constant 0 : index
    %c0_5 = arith.constant 0 : index
    %6 = vector.load %arg10[%c0_4, %c0_5] : memref<1x128xf32, #tpu.memory_space<vmem>>, vector<1x128xf32>
    %7 = vector.broadcast %6 : vector<1x128xf32> to vector<8x128xf32>
    %8 = arith.addf %5, %7 : vector<8x128xf32>
    %c0_6 = arith.constant 0 : index
    %c0_7 = arith.constant 0 : index
    %9 = vector.load %arg11[%c0_6, %c0_7] : memref<8x128xf32, #tpu.memory_space<vmem>>, vector<8x128xf32>
    tpu.vector_store %arg11[%c0_6, %c0_7], %8 {strides = array<i32>} : memref<8x128xf32, #tpu.memory_space<vmem>>, vector<8x128xf32>,
    return
  }
  func.func @transform_0(%arg0: i32) -> (i32, i32) {
    %c0_i32 = arith.constant 0 : i32
    %c0_i32_0 = arith.constant 0 : i32
    %c0_i32_1 = arith.constant 0 : i32
    return %c0_i32, %c0_i32_0 : i32, i32
  }
  func.func @transform_1(%arg0: i32) -> (i32, i32, i32) {
    %c0_i32 = arith.constant 0 : i32
    %c0_i32_0 = arith.constant 0 : i32
    %c0_i32_1 = arith.constant 0 : i32
    %c0_i32_2 = arith.constant 0 : i32
    return %c0_i32, %c0_i32_0, %c0_i32_1 : i32, i32, i32
  }
  func.func @transform_2(%arg0: i32) -> (i32, i32) {
    %c0_i32 = arith.constant 0 : i32
    %c0_i32_0 = arith.constant 0 : i32
    %c0_i32_1 = arith.constant 0 : i32
    return %c0_i32, %c0_i32_0 : i32, i32
  }
  func.func @transform_3(%arg0: i32) -> (i32, i32) {
    %c0_i32 = arith.constant 0 : i32
    %c0_i32_0 = arith.constant 0 : i32
    %c0_i32_1 = arith.constant 0 : i32
    return %c0_i32, %c0_i32_0 : i32, i32
  }
  func.func @transform_4(%arg0: i32) -> (i32, i32) {
    %c0_i32 = arith.constant 0 : i32
    %c0_i32_0 = arith.constant 0 : i32
    %c0_i32_1 = arith.constant 0 : i32
    return %c0_i32, %c0_i32_0 : i32, i32
  }
  func.func @transform_5(%arg0: i32) -> (i32, i32) {
    %c0_i32 = arith.constant 0 : i32
    %c0_i32_0 = arith.constant 0 : i32
    %c0_i32_1 = arith.constant 0 : i32
    return %c0_i32, %c0_i32_0 : i32, i32
  }
  func.func @transform_6(%arg0: i32) -> (i32, i32) {
    %c0_i32 = arith.constant 0 : i32
    %c0_i32_0 = arith.constant 0 : i32
    %c0_i32_1 = arith.constant 0 : i32
    return %c0_i32, %c0_i32_0 : i32, i32
  }
  func.func @transform_7(%arg0: i32) -> (i32, i32) {
    %c0_i32 = arith.constant 0 : i32
    %c0_i32_0 = arith.constant 0 : i32
    %c0_i32_1 = arith.constant 0 : i32
    return %c0_i32, %c0_i32_0 : i32, i32
  }
  func.func @transform_8(%arg0: i32) -> (i32, i32) {
    %c0_i32 = arith.constant 0 : i32
    %c0_i32_0 = arith.constant 0 : i32
    return %c0_i32, %arg0 : i32, i32
  }
  func.func @transform_9(%arg0: i32) -> (i32, i32) {
    %c0_i32 = arith.constant 0 : i32
    %c0_i32_0 = arith.constant 0 : i32
    return %c0_i32, %arg0 : i32, i32
  }
  func.func @transform_10(%arg0: i32) -> (i32, i32) {
    %c0_i32 = arith.constant 0 : i32
    %c0_i32_0 = arith.constant 0 : i32
    return %c0_i32, %arg0 : i32, i32
  }
  func.func @transform_11(%arg0: i32) -> (i32, i32) {
    %c0_i32 = arith.constant 0 : i32
    %c0_i32_0 = arith.constant 0 : i32
    %c0_i32_1 = arith.constant 0 : i32
    return %c0_i32, %c0_i32_0 : i32, i32
  }
}

</mosaic_0001>

<llo_original>
// kernel: tpu_custom_call.1
$region0: #{tpu_custom_call.1}
  #allocation0 [shape = 'u32[]', space=smem, size = 0x4, offset = 0x4, fixed_abs, tag = 'smem constant byte address 0x4 - core index']
  #allocation1 [shape = 'u32[144,128]{1,0:T(1,128)}', space=vmem, size = 0x12000, scoped, tag = 'internal scratch']
  #allocation2 [shape = 'bf16[8,128]{1,0:T(8,128)(2,1)}', space=vmem, size = 0x800, scoped, tag = 'scratch operand']
  %s0 = inlined_call_operand.hbm [shape: bf16[8,128], index: 0, kind: input, shape index: {}]
  %s1 = inlined_call_operand.hbm [shape: bf16[8,8,128], index: 1, kind: input, shape index: {}]
  %s2 = inlined_call_operand.hbm [shape: f32[8,128], index: 2, kind: input, shape index: {}]
  %s3 = inlined_call_operand.hbm [shape: bf16[128,384], index: 3, kind: input, shape index: {}]
  %s4 = inlined_call_operand.hbm [shape: bf16[128,384], index: 4, kind: input, shape index: {}]
  %s5 = inlined_call_operand.vmem [shape: f32[8,128], index: 5, kind: input, shape index: {}]
  %s6 = inlined_call_operand.hbm [shape: bf16[128,128], index: 6, kind: input, shape index: {}]
  %s7 = inlined_call_operand.hbm [shape: bf16[128,128], index: 7, kind: input, shape index: {}]
  %s8 = inlined_call_operand.hbm [shape: bf16[128,128], index: 8, kind: input, shape index: {}]
  %s9 = inlined_call_operand.vmem [shape: f32[1,128], index: 9, kind: input, shape index: {}]
  %s10 = inlined_call_operand.hbm [shape: f32[8,128], index: 10, kind: output, shape index: {0}]
  %s11 = inlined_call_operand.hbm [shape: f32[8,128], index: 11, kind: output, shape index: {1}]
  %12 = xla_tuple %s10, %s11
  %s13 = sld [smem:[#allocation0]]
  $region94: #{tpu_custom_call.1} parent=0
    _
  %s15 = ssub.s32 1, %s13
  %s16 = scalar_select 0, %s15, %s13
  $region1: #{tpu_custom_call.1} parent=0
    #allocation3 [shape = 'u8[2048]{0}', space=vmem, size = 0x800, scoped, tag = 'input window, operand 0, single buffered']
    #allocation4 [shape = 's32[1]{0}', space=sflag, size = 0x4, scoped, tag = 'scoped memory for tpu_custom_call.1']
    #allocation5 [shape = 's32[1]{0}', space=sflag, size = 0x4, scoped, tag = 'scoped memory for tpu_custom_call.1']
    #allocation6 [shape = 'u8[16384]{0}', space=vmem, size = 0x4000, scoped, tag = 'input window, operand 1, single buffered']
    #allocation7 [shape = 's32[1]{0}', space=sflag, size = 0x4, scoped, tag = 'scoped memory for tpu_custom_call.1']
    #allocation8 [shape = 'u8[4096]{0}', space=vmem, size = 0x1000, scoped, tag = 'input window, operand 2, single buffered']
    #allocation9 [shape = 'u8[98304]{0}', space=vmem, size = 0x18000, scoped, tag = 'input window, operand 3, single buffered']
    #allocation10 [shape = 's32[1]{0}', space=sflag, size = 0x4, scoped, tag = 'scoped memory for tpu_custom_call.1']
    #allocation11 [shape = 'u8[98304]{0}', space=vmem, size = 0x18000, scoped, tag = 'input window, operand 4, single buffered']
    #allocation12 [shape = 'u8[32768]{0}', space=vmem, size = 0x8000, scoped, tag = 'input window, operand 6, single buffered']
    #allocation13 [shape = 's32[1]{0}', space=sflag, size = 0x4, scoped, tag = 'scoped memory for tpu_custom_call.1']
    #allocation14 [shape = 'u8[32768]{0}', space=vmem, size = 0x8000, scoped, tag = 'input window, operand 7, single buffered']
    #allocation15 [shape = 'u8[32768]{0}', space=vmem, size = 0x8000, scoped, tag = 'input window, operand 8, single buffered']
    #allocation16 [shape = 's32[1]{0}', space=sflag, size = 0x4, scoped, tag = 'scoped memory for tpu_custom_call.1']
    #allocation17 [shape = 'u8[4096]{0}', space=vmem, size = 0x1000, scoped, tag = 'output window, operand 0, single buffered']
    #allocation18 [shape = 'u8[4096]{0}', space=vmem, size = 0x1000, scoped, tag = 'output window, operand 1, single buffered']
    #allocation19 [shape = 's32[1]{0}', space=sflag, size = 0x4, scoped, tag = 'scoped memory for tpu_custom_call.1']
    %17 = vsyncpa [#allocation4], 0
    %18 = vsyncpa [#allocation7], 0
    %19 = vsyncpa [#allocation10], 0
    %20 = vsyncpa [#allocation13], 0
    %21 = vsyncpa [#allocation16], 0
    %22 = vsyncpa [#allocation5], 0
    %23 = vsyncpa [#allocation19], 0
    // Predicated region
    $region2: #{tpu_custom_call.1} parent=1 // pred_check
      _
    $region3: #{tpu_custom_call.1} parent=1 // pred_check_branch
      %25 = sbr.rel (0) target = $region5
    $region4: #{tpu_custom_call.1} parent=1 // pred_region
      %s27 = ssub.s32 64, 64
      %28 = vsyncadd [#allocation4], %s27
      %s30 = sshll.u32 [#allocation3], 4
      %s31 = int_to_ptr.vmem [resolvable:$true] %s30
      %33 = dma.hbm_to_vmem [thread:$0]  %s0, 64, %s31, [#allocation4]
    $region5: #{tpu_custom_call.1} parent=1 // pred_fallthru
      _
    // Predicated region
    $region6: #{tpu_custom_call.1} parent=1 // pred_check
      _
    $region7: #{tpu_custom_call.1} parent=1 // pred_check_branch
      %35 = sbr.rel (0) target = $region9
    $region8: #{tpu_custom_call.1} parent=1 // pred_region
      %s37 = ssub.s32 512, 512
      %38 = vsyncadd [#allocation7], %s37
      %s39 = sshll.u32 [#allocation6], 4
      %s40 = int_to_ptr.vmem [resolvable:$true] %s39
      %45 = dma.hbm_to_vmem [thread:$0]  %s1, 512, %s40, [#allocation7], 64, 64, 4
    $region9: #{tpu_custom_call.1} parent=1 // pred_fallthru
      _
    // Predicated region
    $region10: #{tpu_custom_call.1} parent=1 // pred_check
      _
    $region11: #{tpu_custom_call.1} parent=1 // pred_check_branch
      %47 = sbr.rel (0) target = $region13
    $region12: #{tpu_custom_call.1} parent=1 // pred_region
      %s49 = ssub.s32 128, 128
      %50 = vsyncadd [#allocation7], %s49
      %s52 = sshll.u32 [#allocation8], 4
      %s53 = int_to_ptr.vmem [resolvable:$true] %s52
      %55 = dma.hbm_to_vmem [thread:$0]  %s2, 128, %s53, [#allocation7]
    $region13: #{tpu_custom_call.1} parent=1 // pred_fallthru
      _
    // Predicated region
    $region14: #{tpu_custom_call.1} parent=1 // pred_check
      _
    $region15: #{tpu_custom_call.1} parent=1 // pred_check_branch
      %57 = sbr.rel (0) target = $region17
    $region16: #{tpu_custom_call.1} parent=1 // pred_region
      %s59 = ssub.s32 3072, 3072
      %60 = vsyncadd [#allocation10], %s59
      %s61 = sshll.u32 [#allocation9], 4
      %s62 = int_to_ptr.vmem [resolvable:$true] %s61
      %67 = dma.hbm_to_vmem [thread:$0]  %s3, 3072, %s62, [#allocation10], 192, 192, 12
    $region17: #{tpu_custom_call.1} parent=1 // pred_fallthru
      _
    // Predicated region
    $region18: #{tpu_custom_call.1} parent=1 // pred_check
      _
    $region19: #{tpu_custom_call.1} parent=1 // pred_check_branch
      %69 = sbr.rel (0) target = $region21
    $region20: #{tpu_custom_call.1} parent=1 // pred_region
      %s71 = ssub.s32 3072, 3072
      %72 = vsyncadd [#allocation10], %s71
      %s73 = sshll.u32 [#allocation11], 4
      %s74 = int_to_ptr.vmem [resolvable:$true] %s73
      %79 = dma.hbm_to_vmem [thread:$0]  %s4, 3072, %s74, [#allocation10], 192, 192, 12
    $region21: #{tpu_custom_call.1} parent=1 // pred_fallthru
      _
    // Predicated region
    $region22: #{tpu_custom_call.1} parent=1 // pred_check
      _
    $region23: #{tpu_custom_call.1} parent=1 // pred_check_branch
      %81 = sbr.rel (0) target = $region25
    $region24: #{tpu_custom_call.1} parent=1 // pred_region
      _
    $region25: #{tpu_custom_call.1} parent=1 // pred_fallthru
      _
    // Predicated region
    $region26: #{tpu_custom_call.1} parent=1 // pred_check
      _
    $region27: #{tpu_custom_call.1} parent=1 // pred_check_branch
      %83 = sbr.rel (0) target = $region29
    $region28: #{tpu_custom_call.1} parent=1 // pred_region
      %s85 = ssub.s32 1024, 1024
      %86 = vsyncadd [#allocation13], %s85
      %s87 = sshll.u32 [#allocation12], 4
      %s88 = int_to_ptr.vmem [resolvable:$true] %s87
      %93 = dma.hbm_to_vmem [thread:$0]  %s6, 1024, %s88, [#allocation13], 64, 64, 4
    $region29: #{tpu_custom_call.1} parent=1 // pred_fallthru
      _
    // Predicated region
    $region30: #{tpu_custom_call.1} parent=1 // pred_check
      _
    $region31: #{tpu_custom_call.1} parent=1 // pred_check_branch
      %95 = sbr.rel (0) target = $region33
    $region32: #{tpu_custom_call.1} parent=1 // pred_region
      %s97 = ssub.s32 1024, 1024
      %98 = vsyncadd [#allocation13], %s97
      %s99 = sshll.u32 [#allocation14], 4
      %s100 = int_to_ptr.vmem [resolvable:$true] %s99
      %105 = dma.hbm_to_vmem [thread:$0]  %s7, 1024, %s100, [#allocation13], 64, 64, 4
    $region33: #{tpu_custom_call.1} parent=1 // pred_fallthru
      _
    // Predicated region
    $region34: #{tpu_custom_call.1} parent=1 // pred_check
      _
    $region35: #{tpu_custom_call.1} parent=1 // pred_check_branch
      %107 = sbr.rel (0) target = $region37
    $region36: #{tpu_custom_call.1} parent=1 // pred_region
      %s109 = ssub.s32 1024, 1024
      %110 = vsyncadd [#allocation16], %s109
      %s111 = sshll.u32 [#allocation15], 4
      %s112 = int_to_ptr.vmem [resolvable:$true] %s111
      %117 = dma.hbm_to_vmem [thread:$0]  %s8, 1024, %s112, [#allocation16], 64, 64, 4
    $region37: #{tpu_custom_call.1} parent=1 // pred_fallthru
      _
    // Predicated region
    $region38: #{tpu_custom_call.1} parent=1 // pred_check
      _
    $region39: #{tpu_custom_call.1} parent=1 // pred_check_branch
      %119 = sbr.rel (0) target = $region41
    $region40: #{tpu_custom_call.1} parent=1 // pred_region
      _
    $region41: #{tpu_custom_call.1} parent=1 // pred_fallthru
      _
    // Predicated region
    $region42: #{tpu_custom_call.1} parent=1 // pred_check
      _
    $region43: #{tpu_custom_call.1} parent=1 // pred_check_branch
      %121 = sbr.rel (0) target = $region45
    $region44: #{tpu_custom_call.1} parent=1 // pred_region
      %122 = dma.done [#allocation4], 64
    $region45: #{tpu_custom_call.1} parent=1 // pred_fallthru
      _
    // Predicated region
    $region46: #{tpu_custom_call.1} parent=1 // pred_check
      _
    $region47: #{tpu_custom_call.1} parent=1 // pred_check_branch
      %124 = sbr.rel (0) target = $region49
    $region48: #{tpu_custom_call.1} parent=1 // pred_region
      %125 = dma.done [#allocation7], 512
    $region49: #{tpu_custom_call.1} parent=1 // pred_fallthru
      _
    // Predicated region
    $region50: #{tpu_custom_call.1} parent=1 // pred_check
      _
    $region51: #{tpu_custom_call.1} parent=1 // pred_check_branch
      %127 = sbr.rel (0) target = $region53
    $region52: #{tpu_custom_call.1} parent=1 // pred_region
      %128 = dma.done [#allocation7], 128
    $region53: #{tpu_custom_call.1} parent=1 // pred_fallthru
      _
    // Predicated region
    $region54: #{tpu_custom_call.1} parent=1 // pred_check
      _
    $region55: #{tpu_custom_call.1} parent=1 // pred_check_branch
      %130 = sbr.rel (0) target = $region57
    $region56: #{tpu_custom_call.1} parent=1 // pred_region
      %131 = dma.done [#allocation10], 3072
    $region57: #{tpu_custom_call.1} parent=1 // pred_fallthru
      _
    // Predicated region
    $region58: #{tpu_custom_call.1} parent=1 // pred_check
      _
    $region59: #{tpu_custom_call.1} parent=1 // pred_check_branch
      %133 = sbr.rel (0) target = $region61
    $region60: #{tpu_custom_call.1} parent=1 // pred_region
      %134 = dma.done [#allocation10], 3072
    $region61: #{tpu_custom_call.1} parent=1 // pred_fallthru
      _
    // Predicated region
    $region62: #{tpu_custom_call.1} parent=1 // pred_check
      _
    $region63: #{tpu_custom_call.1} parent=1 // pred_check_branch
      %136 = sbr.rel (0) target = $region65
    $region64: #{tpu_custom_call.1} parent=1 // pred_region
      %137 = dma.done [#allocation13], 1024
    $region65: #{tpu_custom_call.1} parent=1 // pred_fallthru
      _
    // Predicated region
    $region66: #{tpu_custom_call.1} parent=1 // pred_check
      _
    $region67: #{tpu_custom_call.1} parent=1 // pred_check_branch
      %139 = sbr.rel (0) target = $region69
    $region68: #{tpu_custom_call.1} parent=1 // pred_region
      %140 = dma.done [#allocation13], 1024
    $region69: #{tpu_custom_call.1} parent=1 // pred_fallthru
      _
    // Predicated region
    $region70: #{tpu_custom_call.1} parent=1 // pred_check
      _
    $region71: #{tpu_custom_call.1} parent=1 // pred_check_branch
      %142 = sbr.rel (0) target = $region73
    $region72: #{tpu_custom_call.1} parent=1 // pred_region
      %143 = dma.done [#allocation16], 1024
    $region73: #{tpu_custom_call.1} parent=1 // pred_fallthru
      _
    %p145 = scmp.eq.s32.totalorder 0, 0
    // Predicated region
    $region74: #{tpu_custom_call.1} parent=1 // pred_check
      %p146 = pneg %p145
    $region75: #{tpu_custom_call.1} parent=1 // pred_check_branch
      %148 = sbr.rel (%p146) target = $region77
    $region76: #{tpu_custom_call.1} parent=1 // pred_region
      %v149 = vld [vmem:[#allocation3] sm:$0xf]
      %v150 = vld [vmem:[#allocation8] sm:$0xff]
      %v151 = vld [vmem:[#allocation6] sm:$0xf]
      %v152 = vld [vmem:[#allocation6 + $0x4] sm:$0xf]
      %v153 = vld [vmem:[#allocation6 + $0x8] sm:$0xf]
      %v154 = vld [vmem:[#allocation6 + $0xc] sm:$0xf]
      %v155 = vld [vmem:[#allocation6 + $0x10] sm:$0xf]
      %v156 = vld [vmem:[#allocation6 + $0x14] sm:$0xf]
      %v157 = vld [vmem:[#allocation6 + $0x18] sm:$0xf]
      %v158 = vld [vmem:[#allocation6 + $0x1c] sm:$0xf]
      %v159 = vld [vmem:[#allocation9] sm:$0xff]
      %v160 = vld [vmem:[#allocation9 + $0x8] sm:$0xf]
      %v161 = vld [vmem:[#allocation9 + $0xc] sm:$0xff]
      %v162 = vld [vmem:[#allocation9 + $0x14] sm:$0xf]
      %v163 = vld [vmem:[#allocation9 + $0x18] sm:$0xff]
      %v164 = vld [vmem:[#allocation9 + $0x20] sm:$0xf]
      %v165 = vld [vmem:[#allocation9 + $0x24] sm:$0xff]
      %v166 = vld [vmem:[#allocation9 + $0x2c] sm:$0xf]
      %v167 = vld [vmem:[#allocation9 + $0x30] sm:$0xff]
      %v168 = vld [vmem:[#allocation9 + $0x38] sm:$0xf]
      %v169 = vld [vmem:[#allocation9 + $0x3c] sm:$0xff]
      %v170 = vld [vmem:[#allocation9 + $0x44] sm:$0xf]
      %v171 = vld [vmem:[#allocation9 + $0x48] sm:$0xff]
      %v172 = vld [vmem:[#allocation9 + $0x50] sm:$0xf]
      %v173 = vld [vmem:[#allocation9 + $0x54] sm:$0xff]
      %v174 = vld [vmem:[#allocation9 + $0x5c] sm:$0xf]
      %v175 = vld [vmem:[#allocation9 + $0x60] sm:$0xff]
      %v176 = vld [vmem:[#allocation9 + $0x68] sm:$0xf]
      %v177 = vld [vmem:[#allocation9 + $0x6c] sm:$0xff]
      %v178 = vld [vmem:[#allocation9 + $0x74] sm:$0xf]
      %v179 = vld [vmem:[#allocation9 + $0x78] sm:$0xff]
      %v180 = vld [vmem:[#allocation9 + $0x80] sm:$0xf]
      %v181 = vld [vmem:[#allocation9 + $0x84] sm:$0xff]
      %v182 = vld [vmem:[#allocation9 + $0x8c] sm:$0xf]
      %v183 = vld [vmem:[#allocation9 + $0x90] sm:$0xff]
      %v184 = vld [vmem:[#allocation9 + $0x98] sm:$0xf]
      %v185 = vld [vmem:[#allocation9 + $0x9c] sm:$0xff]
      %v186 = vld [vmem:[#allocation9 + $0xa4] sm:$0xf]
      %v187 = vld [vmem:[#allocation9 + $0xa8] sm:$0xff]
      %v188 = vld [vmem:[#allocation9 + $0xb0] sm:$0xf]
      %v189 = vld [vmem:[#allocation9 + $0xb4] sm:$0xff]
      %v190 = vld [vmem:[#allocation9 + $0xbc] sm:$0xf]
      %v223 = vunpack.c.l.b16 %v159
      %v224 = vunpack.c.h.b16 %v159
      %v225 = vunpack.c.l.b16 %v160
      %v226 = vunpack.c.l.b16 %v161
      %v227 = vunpack.c.h.b16 %v161
      %v228 = vunpack.c.l.b16 %v162
      %v229 = vunpack.c.l.b16 %v163
      %v230 = vunpack.c.h.b16 %v163
      %v231 = vunpack.c.l.b16 %v164
      %v232 = vunpack.c.l.b16 %v165
      %v233 = vunpack.c.h.b16 %v165
      %v234 = vunpack.c.l.b16 %v166
      %v235 = vunpack.c.l.b16 %v167
      %v236 = vunpack.c.h.b16 %v167
      %v237 = vunpack.c.l.b16 %v168
      %v238 = vunpack.c.l.b16 %v169
      %v239 = vunpack.c.h.b16 %v169
      %v240 = vunpack.c.l.b16 %v170
      %v241 = vunpack.c.l.b16 %v171
      %v242 = vunpack.c.h.b16 %v171
      %v243 = vunpack.c.l.b16 %v172
      %v244 = vunpack.c.l.b16 %v173
      %v245 = vunpack.c.h.b16 %v173
      %v246 = vunpack.c.l.b16 %v174
      %v247 = vunpack.c.l.b16 %v175
      %v248 = vunpack.c.h.b16 %v175
      %v249 = vunpack.c.l.b16 %v176
      %v250 = vunpack.c.l.b16 %v177
      %v251 = vunpack.c.h.b16 %v177
      %v252 = vunpack.c.l.b16 %v178
      %v253 = vunpack.c.l.b16 %v179
      %v254 = vunpack.c.h.b16 %v179
      %v255 = vunpack.c.l.b16 %v180
      %v256 = vunpack.c.l.b16 %v181
      %v257 = vunpack.c.h.b16 %v181
      %v258 = vunpack.c.l.b16 %v182
      %v259 = vunpack.c.l.b16 %v183
      %v260 = vunpack.c.h.b16 %v183
      %v261 = vunpack.c.l.b16 %v184
      %v262 = vunpack.c.l.b16 %v185
      %v263 = vunpack.c.h.b16 %v185
      %v264 = vunpack.c.l.b16 %v186
      %v265 = vunpack.c.l.b16 %v187
      %v266 = vunpack.c.h.b16 %v187
      %v267 = vunpack.c.l.b16 %v188
      %v268 = vunpack.c.l.b16 %v189
      %v269 = vunpack.c.h.b16 %v189
      %v270 = vunpack.c.l.b16 %v190
      %v271 = vpack.c.b16 %v226, %v223
      %v272 = vpack.c.b16 %v227, %v224
      %v273 = vpack.c.b16 %v228, %v225
      %v274 = vpack.c.b16 %v232, %v229
      %v275 = vpack.c.b16 %v233, %v230
      %v276 = vpack.c.b16 %v234, %v231
      %v277 = vpack.c.b16 %v238, %v235
      %v278 = vpack.c.b16 %v239, %v236
      %v279 = vpack.c.b16 %v240, %v237
      %v280 = vpack.c.b16 %v244, %v241
      %v281 = vpack.c.b16 %v245, %v242
      %v282 = vpack.c.b16 %v246, %v243
      %v283 = vpack.c.b16 %v250, %v247
      %v284 = vpack.c.b16 %v251, %v248
      %v285 = vpack.c.b16 %v252, %v249
      %v286 = vpack.c.b16 %v256, %v253
      %v287 = vpack.c.b16 %v257, %v254
      %v288 = vpack.c.b16 %v258, %v255
      %v289 = vpack.c.b16 %v262, %v259
      %v290 = vpack.c.b16 %v263, %v260
      %v291 = vpack.c.b16 %v264, %v261
      %v292 = vpack.c.b16 %v268, %v265
      %v293 = vpack.c.b16 %v269, %v266
      %v294 = vpack.c.b16 %v270, %v267
      %319 = vmatprep.subr.bf16.mxu0 %v272
      %320 = vmatpush1.bf16.msra.mxu0 %v271
      %321 = vmatprep.subr.bf16.mxu0 %v275
      %322 = vmatpush1.bf16.msra.mxu0 %v274
      %323 = vmatprep.subr.bf16.mxu0 %v278
      %324 = vmatpush1.bf16.msra.mxu0 %v277
      %325 = vmatprep.subr.bf16.mxu0 %v281
      %326 = vmatpush1.bf16.msra.mxu0 %v280
      %327 = vmatprep.subr.bf16.mxu0 %v284
      %328 = vmatpush1.bf16.msra.mxu0 %v283
      %329 = vmatprep.subr.bf16.mxu0 %v287
      %330 = vmatpush1.bf16.msra.mxu0 %v286
      %331 = vmatprep.subr.bf16.mxu0 %v290
      %332 = vmatpush1.bf16.msra.mxu0 %v289
      %333 = vmatprep.subr.bf16.mxu0 %v293
      %334 = vmatpush1.bf16.msra.mxu0 %v292
      %335 = vmatprep.subr.bf16.mxu0 0
      %336 = vmatpush1.bf16.msra.mxu0 0
      %337 = vmatprep.subr.bf16.mxu0 0
      %338 = vmatpush1.bf16.msra.mxu0 0
      %339 = vmatprep.subr.bf16.mxu0 0
      %340 = vmatpush1.bf16.msra.mxu0 0
      %341 = vmatprep.subr.bf16.mxu0 0
      %342 = vmatpush1.bf16.msra.mxu0 0
      %343 = vmatprep.subr.bf16.mxu0 0
      %344 = vmatpush1.bf16.msra.mxu0 0
      %345 = vmatprep.subr.bf16.mxu0 0
      %346 = vmatpush1.bf16.msra.mxu0 0
      %347 = vmatprep.subr.bf16.mxu0 0
      %348 = vmatpush1.bf16.msra.mxu0 0
      %349 = vmatprep.subr.bf16.mxu0 0
      %350 = vmatpush1.bf16.msra.mxu0 0
      %351 = vmatprep.mubr.bf16.mxu0 0
      %352 = vmatmul.mubr.bf16.gmra.mrb[0].mxu0 %v149
      %v353 = vpop.f32.mrb[0].mxu0
      %v354 = vadd.f32 0.0, %v353
      %v355 = vpop.f32.mrb[0].mxu0
      %v356 = vadd.f32 0.0, %v355
      %v357 = vpop.f32.mrb[0].mxu0
      %v358 = vpop.f32.mrb[0].mxu0
      %359 = vdwg.mxu0
      %360 = vmatprep.subr.bf16.mxu0 0
      %361 = vmatpush1.bf16.msra.mxu0 %v273
      %362 = vmatprep.subr.bf16.mxu0 0
      %363 = vmatpush1.bf16.msra.mxu0 %v276
      %364 = vmatprep.subr.bf16.mxu0 0
      %365 = vmatpush1.bf16.msra.mxu0 %v279
      %366 = vmatprep.subr.bf16.mxu0 0
      %367 = vmatpush1.bf16.msra.mxu0 %v282
      %368 = vmatprep.subr.bf16.mxu0 0
      %369 = vmatpush1.bf16.msra.mxu0 %v285
      %370 = vmatprep.subr.bf16.mxu0 0
      %371 = vmatpush1.bf16.msra.mxu0 %v288
      %372 = vmatprep.subr.bf16.mxu0 0
      %373 = vmatpush1.bf16.msra.mxu0 %v291
      %374 = vmatprep.subr.bf16.mxu0 0
      %375 = vmatpush1.bf16.msra.mxu0 %v294
      %376 = vmatprep.subr.bf16.mxu0 0
      %377 = vmatpush1.bf16.msra.mxu0 0
      %378 = vmatprep.subr.bf16.mxu0 0
      %379 = vmatpush1.bf16.msra.mxu0 0
      %380 = vmatprep.subr.bf16.mxu0 0
      %381 = vmatpush1.bf16.msra.mxu0 0
      %382 = vmatprep.subr.bf16.mxu0 0
      %383 = vmatpush1.bf16.msra.mxu0 0
      %384 = vmatprep.subr.bf16.mxu0 0
      %385 = vmatpush1.bf16.msra.mxu0 0
      %386 = vmatprep.subr.bf16.mxu0 0
      %387 = vmatpush1.bf16.msra.mxu0 0
      %388 = vmatprep.subr.bf16.mxu0 0
      %389 = vmatpush1.bf16.msra.mxu0 0
      %390 = vmatprep.subr.bf16.mxu0 0
      %391 = vmatpush1.bf16.msra.mxu0 0
      %392 = vmatprep.mubr.bf16.mxu0 0
      %393 = vmatmul.mubr.bf16.gmra.mrb[0].mxu0 %v149
      %v394 = vpop.f32.mrb[0].mxu0
      %v395 = vadd.f32 0.0, %v394
      %v396 = vpop.f32.mrb[0].mxu0
      %v397 = vpop.f32.mrb[0].mxu0
      %v398 = vpop.f32.mrb[0].mxu0
      %399 = vdwg.mxu0
      %v400 = vpack.c.bf16 %v150, %v150
      %v401 = vld [vmem:[#allocation11] sm:$0xff]
      %v402 = vld [vmem:[#allocation11 + $0x8] sm:$0xf]
      %v403 = vld [vmem:[#allocation11 + $0xc] sm:$0xff]
      %v404 = vld [vmem:[#allocation11 + $0x14] sm:$0xf]
      %v405 = vld [vmem:[#allocation11 + $0x18] sm:$0xff]
      %v406 = vld [vmem:[#allocation11 + $0x20] sm:$0xf]
      %v407 = vld [vmem:[#allocation11 + $0x24] sm:$0xff]
      %v408 = vld [vmem:[#allocation11 + $0x2c] sm:$0xf]
      %v409 = vld [vmem:[#allocation11 + $0x30] sm:$0xff]
      %v410 = vld [vmem:[#allocation11 + $0x38] sm:$0xf]
      %v411 = vld [vmem:[#allocation11 + $0x3c] sm:$0xff]
      %v412 = vld [vmem:[#allocation11 + $0x44] sm:$0xf]
      %v413 = vld [vmem:[#allocation11 + $0x48] sm:$0xff]
      %v414 = vld [vmem:[#allocation11 + $0x50] sm:$0xf]
      %v415 = vld [vmem:[#allocation11 + $0x54] sm:$0xff]
      %v416 = vld [vmem:[#allocation11 + $0x5c] sm:$0xf]
      %v417 = vld [vmem:[#allocation11 + $0x60] sm:$0xff]
      %v418 = vld [vmem:[#allocation11 + $0x68] sm:$0xf]
      %v419 = vld [vmem:[#allocation11 + $0x6c] sm:$0xff]
      %v420 = vld [vmem:[#allocation11 + $0x74] sm:$0xf]
      %v421 = vld [vmem:[#allocation11 + $0x78] sm:$0xff]
      %v422 = vld [vmem:[#allocation11 + $0x80] sm:$0xf]
      %v423 = vld [vmem:[#allocation11 + $0x84] sm:$0xff]
      %v424 = vld [vmem:[#allocation11 + $0x8c] sm:$0xf]
      %v425 = vld [vmem:[#allocation11 + $0x90] sm:$0xff]
      %v426 = vld [vmem:[#allocation11 + $0x98] sm:$0xf]
      %v427 = vld [vmem:[#allocation11 + $0x9c] sm:$0xff]
      %v428 = vld [vmem:[#allocation11 + $0xa4] sm:$0xf]
      %v429 = vld [vmem:[#allocation11 + $0xa8] sm:$0xff]
      %v430 = vld [vmem:[#allocation11 + $0xb0] sm:$0xf]
      %v431 = vld [vmem:[#allocation11 + $0xb4] sm:$0xff]
      %v432 = vld [vmem:[#allocation11 + $0xbc] sm:$0xf]
      %v465 = vunpack.c.l.b16 %v401
      %v466 = vunpack.c.h.b16 %v401
      %v467 = vunpack.c.l.b16 %v402
      %v468 = vunpack.c.l.b16 %v403
      %v469 = vunpack.c.h.b16 %v403
      %v470 = vunpack.c.l.b16 %v404
      %v471 = vunpack.c.l.b16 %v405
      %v472 = vunpack.c.h.b16 %v405
      %v473 = vunpack.c.l.b16 %v406
      %v474 = vunpack.c.l.b16 %v407
      %v475 = vunpack.c.h.b16 %v407
      %v476 = vunpack.c.l.b16 %v408
      %v477 = vunpack.c.l.b16 %v409
      %v478 = vunpack.c.h.b16 %v409
      %v479 = vunpack.c.l.b16 %v410
      %v480 = vunpack.c.l.b16 %v411
      %v481 = vunpack.c.h.b16 %v411
      %v482 = vunpack.c.l.b16 %v412
      %v483 = vunpack.c.l.b16 %v413
      %v484 = vunpack.c.h.b16 %v413
      %v485 = vunpack.c.l.b16 %v414
      %v486 = vunpack.c.l.b16 %v415
      %v487 = vunpack.c.h.b16 %v415
      %v488 = vunpack.c.l.b16 %v416
      %v489 = vunpack.c.l.b16 %v417
      %v490 = vunpack.c.h.b16 %v417
      %v491 = vunpack.c.l.b16 %v418
      %v492 = vunpack.c.l.b16 %v419
      %v493 = vunpack.c.h.b16 %v419
      %v494 = vunpack.c.l.b16 %v420
      %v495 = vunpack.c.l.b16 %v421
      %v496 = vunpack.c.h.b16 %v421
      %v497 = vunpack.c.l.b16 %v422
      %v498 = vunpack.c.l.b16 %v423
      %v499 = vunpack.c.h.b16 %v423
      %v500 = vunpack.c.l.b16 %v424
      %v501 = vunpack.c.l.b16 %v425
      %v502 = vunpack.c.h.b16 %v425
      %v503 = vunpack.c.l.b16 %v426
      %v504 = vunpack.c.l.b16 %v427
      %v505 = vunpack.c.h.b16 %v427
      %v506 = vunpack.c.l.b16 %v428
      %v507 = vunpack.c.l.b16 %v429
      %v508 = vunpack.c.h.b16 %v429
      %v509 = vunpack.c.l.b16 %v430
      %v510 = vunpack.c.l.b16 %v431
      %v511 = vunpack.c.h.b16 %v431
      %v512 = vunpack.c.l.b16 %v432
      %v513 = vpack.c.b16 %v468, %v465
      %v514 = vpack.c.b16 %v469, %v466
      %v515 = vpack.c.b16 %v470, %v467
      %v516 = vpack.c.b16 %v474, %v471
      %v517 = vpack.c.b16 %v475, %v472
      %v518 = vpack.c.b16 %v476, %v473
      %v519 = vpack.c.b16 %v480, %v477
      %v520 = vpack.c.b16 %v481, %v478
      %v521 = vpack.c.b16 %v482, %v479
      %v522 = vpack.c.b16 %v486, %v483
      %v523 = vpack.c.b16 %v487, %v484
      %v524 = vpack.c.b16 %v488, %v485
      %v525 = vpack.c.b16 %v492, %v489
      %v526 = vpack.c.b16 %v493, %v490
      %v527 = vpack.c.b16 %v494, %v491
      %v528 = vpack.c.b16 %v498, %v495
      %v529 = vpack.c.b16 %v499, %v496
      %v530 = vpack.c.b16 %v500, %v497
      %v531 = vpack.c.b16 %v504, %v501
      %v532 = vpack.c.b16 %v505, %v502
      %v533 = vpack.c.b16 %v506, %v503
      %v534 = vpack.c.b16 %v510, %v507
      %v535 = vpack.c.b16 %v511, %v508
      %v536 = vpack.c.b16 %v512, %v509
      %561 = vmatprep.subr.bf16.mxu0 %v514
      %562 = vmatpush1.bf16.msra.mxu0 %v513
      %563 = vmatprep.subr.bf16.mxu0 %v517
      %564 = vmatpush1.bf16.msra.mxu0 %v516
      %565 = vmatprep.subr.bf16.mxu0 %v520
      %566 = vmatpush1.bf16.msra.mxu0 %v519
      %567 = vmatprep.subr.bf16.mxu0 %v523
      %568 = vmatpush1.bf16.msra.mxu0 %v522
      %569 = vmatprep.subr.bf16.mxu0 %v526
      %570 = vmatpush1.bf16.msra.mxu0 %v525
      %571 = vmatprep.subr.bf16.mxu0 %v529
      %572 = vmatpush1.bf16.msra.mxu0 %v528
      %573 = vmatprep.subr.bf16.mxu0 %v532
      %574 = vmatpush1.bf16.msra.mxu0 %v531
      %575 = vmatprep.subr.bf16.mxu0 %v535
      %576 = vmatpush1.bf16.msra.mxu0 %v534
      %577 = vmatprep.subr.bf16.mxu0 0
      %578 = vmatpush1.bf16.msra.mxu0 0
      %579 = vmatprep.subr.bf16.mxu0 0
      %580 = vmatpush1.bf16.msra.mxu0 0
      %581 = vmatprep.subr.bf16.mxu0 0
      %582 = vmatpush1.bf16.msra.mxu0 0
      %583 = vmatprep.subr.bf16.mxu0 0
      %584 = vmatpush1.bf16.msra.mxu0 0
      %585 = vmatprep.subr.bf16.mxu0 0
      %586 = vmatpush1.bf16.msra.mxu0 0
      %587 = vmatprep.subr.bf16.mxu0 0
      %588 = vmatpush1.bf16.msra.mxu0 0
      %589 = vmatprep.subr.bf16.mxu0 0
      %590 = vmatpush1.bf16.msra.mxu0 0
      %591 = vmatprep.subr.bf16.mxu0 0
      %592 = vmatpush1.bf16.msra.mxu0 0
      %593 = vmatprep.mubr.bf16.mxu0 0
      %594 = vmatmul.mubr.bf16.gmra.mrb[0].mxu0 %v400
      %v595 = vpop.f32.mrb[0].mxu0
      %v596 = vadd.f32 0.0, %v595
      %v597 = vpop.f32.mrb[0].mxu0
      %v598 = vadd.f32 0.0, %v597
      %v599 = vpop.f32.mrb[0].mxu0
      %v600 = vpop.f32.mrb[0].mxu0
      %601 = vdwg.mxu0
      %602 = vmatprep.subr.bf16.mxu0 0
      %603 = vmatpush1.bf16.msra.mxu0 %v515
      %604 = vmatprep.subr.bf16.mxu0 0
      %605 = vmatpush1.bf16.msra.mxu0 %v518
      %606 = vmatprep.subr.bf16.mxu0 0
      %607 = vmatpush1.bf16.msra.mxu0 %v521
      %608 = vmatprep.subr.bf16.mxu0 0
      %609 = vmatpush1.bf16.msra.mxu0 %v524
      %610 = vmatprep.subr.bf16.mxu0 0
      %611 = vmatpush1.bf16.msra.mxu0 %v527
      %612 = vmatprep.subr.bf16.mxu0 0
      %613 = vmatpush1.bf16.msra.mxu0 %v530
      %614 = vmatprep.subr.bf16.mxu0 0
      %615 = vmatpush1.bf16.msra.mxu0 %v533
      %616 = vmatprep.subr.bf16.mxu0 0
      %617 = vmatpush1.bf16.msra.mxu0 %v536
      %618 = vmatprep.subr.bf16.mxu0 0
      %619 = vmatpush1.bf16.msra.mxu0 0
      %620 = vmatprep.subr.bf16.mxu0 0
      %621 = vmatpush1.bf16.msra.mxu0 0
      %622 = vmatprep.subr.bf16.mxu0 0
      %623 = vmatpush1.bf16.msra.mxu0 0
      %624 = vmatprep.subr.bf16.mxu0 0
      %625 = vmatpush1.bf16.msra.mxu0 0
      %626 = vmatprep.subr.bf16.mxu0 0
      %627 = vmatpush1.bf16.msra.mxu0 0
      %628 = vmatprep.subr.bf16.mxu0 0
      %629 = vmatpush1.bf16.msra.mxu0 0
      %630 = vmatprep.subr.bf16.mxu0 0
      %631 = vmatpush1.bf16.msra.mxu0 0
      %632 = vmatprep.subr.bf16.mxu0 0
      %633 = vmatpush1.bf16.msra.mxu0 0
      %634 = vmatprep.mubr.bf16.mxu0 0
      %635 = vmatmul.mubr.bf16.gmra.mrb[0].mxu0 %v400
      %v636 = vpop.f32.mrb[0].mxu0
      %v637 = vadd.f32 0.0, %v636
      %v638 = vpop.f32.mrb[0].mxu0
      %v639 = vpop.f32.mrb[0].mxu0
      %v640 = vpop.f32.mrb[0].mxu0
      %641 = vdwg.mxu0
      %v642 = vld [vmem:[%s5] sm:$0xff]
      %v643 = vadd.f32 %v354, %v596
      %v644 = vlaneseq
      %v645 = vshrl.u32 %v644, 7
      %v646 = vsub.s32 0, %v645
      %v647 = vrot.slane %v642, %v646
      %v648 = vadd.f32 %v643, %v647
      %v649 = vxor.u32 %v648, 2147483648
      %v650 = vmul.f32 %v649, 1.442695
      %v651 = vpow.pop %v650
      %v652 = vadd.f32 %v651, 1.0
      %v653 = vrcp.pop %v652
      %v654 = vmul.f32 1.0, %v653
      %v655 = vadd.f32 %v356, %v598
      %v656 = vlaneseq
      %v657 = vshrl.u32 %v656, 7
      %v658 = vsub.s32 1, %v657
      %v659 = vrot.slane %v642, %v658
      %v660 = vadd.f32 %v655, %v659
      %v661 = vxor.u32 %v660, 2147483648
      %v662 = vmul.f32 %v661, 1.442695
      %v663 = vpow.pop %v662
      %v664 = vadd.f32 %v663, 1.0
      %v665 = vrcp.pop %v664
      %v666 = vmul.f32 1.0, %v665
      %v667 = vlaneseq
      %v668 = vshrl.u32 %v667, 7
      %v669 = vsub.s32 2, %v668
      %v670 = vrot.slane %v642, %v669
      %v671 = vadd.f32 %v395, %v670
      %v672 = vlaneseq
      %v673 = vshrl.u32 %v672, 7
      %v674 = vsub.s32 3, %v673
      %v675 = vrot.slane %v642, %v674
      %v676 = vadd.f32 %v637, %v675
      %v677 = vmul.f32 %v654, %v676
      %v678 = vadd.f32 %v671, %v677
      %v679 = vtanh.pop %v678
      %v680 = vsub.f32 1.0, %v666
      %v681 = vmul.f32 %v680, %v679
      %v682 = vmul.f32 %v666, %v150
      %v683 = vadd.f32 %v681, %v682
      %v684 = vunpack.c.l.bf16 %v151
      %v685 = vunpack.c.l.bf16 %v152
      %v686 = vunpack.c.l.bf16 %v153
      %v687 = vunpack.c.l.bf16 %v154
      %v688 = vunpack.c.l.bf16 %v155
      %v689 = vunpack.c.l.bf16 %v156
      %v690 = vunpack.c.l.bf16 %v157
      %v691 = vunpack.c.l.bf16 %v158
      %v693 = vcombine.high %v683, %v683
      %v695 = vunpack.c.l.s4 1966171168
      %v696 = vunpack.c.0.s8 %v695
      %v697 = vlaneseq
      %v698 = vshrl.u32 %v697, 7
      %v699 = vsub.s32 %v696, %v698
      %v700 = vrot.slane %v683, %v699
      %v702 = vunpack.c.l.s4 1966171168
      %v703 = vunpack.c.0.s8 %v702
      %v704 = vlaneseq
      %v705 = vshrl.u32 %v704, 7
      %v706 = vsub.s32 %v703, %v705
      %v707 = vrot.slane %v693, %v706
      %v708 = vcombine.high %v700, %v700
      %v709 = vcombine.high %v707, %v707
      %v711 = vunpack.c.l.s4 1966171168
      %v712 = vunpack.c.0.s8 %v711
      %v713 = vlaneseq
      %v714 = vshrl.u32 %v713, 7
      %v715 = vsub.s32 %v712, %v714
      %v716 = vrot.slane %v700, %v715
      %v718 = vunpack.c.l.s4 1966171168
      %v719 = vunpack.c.0.s8 %v718
      %v720 = vlaneseq
      %v721 = vshrl.u32 %v720, 7
      %v722 = vsub.s32 %v719, %v721
      %v723 = vrot.slane %v707, %v722
      %v725 = vunpack.c.l.s4 1966171168
      %v726 = vunpack.c.0.s8 %v725
      %v727 = vlaneseq
      %v728 = vshrl.u32 %v727, 7
      %v729 = vsub.s32 %v726, %v728
      %v730 = vrot.slane %v708, %v729
      %v732 = vunpack.c.l.s4 1966171168
      %v733 = vunpack.c.0.s8 %v732
      %v734 = vlaneseq
      %v735 = vshrl.u32 %v734, 7
      %v736 = vsub.s32 %v733, %v735
      %v737 = vrot.slane %v709, %v736
      %v738 = vcombine.high %v716, %v716
      %v739 = vcombine.high %v723, %v723
      %v740 = vcombine.high %v730, %v730
      %v741 = vcombine.high %v737, %v737
      %v742 = vlaneseq
      %v743 = vshrl.u32 %v742, 7
      %v744 = vsub.s32 0, %v743
      %v745 = vrot.slane %v716, %v744
      %v746 = vlaneseq
      %v747 = vshrl.u32 %v746, 7
      %v748 = vsub.s32 0, %v747
      %v749 = vrot.slane %v730, %v748
      %v750 = vlaneseq
      %v751 = vshrl.u32 %v750, 7
      %v752 = vsub.s32 0, %v751
      %v753 = vrot.slane %v738, %v752
      %v754 = vlaneseq
      %v755 = vshrl.u32 %v754, 7
      %v756 = vsub.s32 0, %v755
      %v757 = vrot.slane %v740, %v756
      %v758 = vlaneseq
      %v759 = vshrl.u32 %v758, 7
      %v760 = vsub.s32 0, %v759
      %v761 = vrot.slane %v723, %v760
      %v762 = vlaneseq
      %v763 = vshrl.u32 %v762, 7
      %v764 = vsub.s32 0, %v763
      %v765 = vrot.slane %v737, %v764
      %v766 = vlaneseq
      %v767 = vshrl.u32 %v766, 7
      %v768 = vsub.s32 0, %v767
      %v769 = vrot.slane %v739, %v768
      %v770 = vlaneseq
      %v771 = vshrl.u32 %v770, 7
      %v772 = vsub.s32 0, %v771
      %v773 = vrot.slane %v741, %v772
      %v782 = vmul.f32 %v745, %v684
      %v783 = vmul.f32 %v749, %v685
      %v784 = vmul.f32 %v753, %v686
      %v785 = vmul.f32 %v757, %v687
      %v786 = vmul.f32 %v761, %v688
      %v787 = vmul.f32 %v765, %v689
      %v788 = vmul.f32 %v769, %v690
      %v789 = vmul.f32 %v773, %v691
      %790 = vadd.xlane.f32.xlu0 %v782
      %v791 = vpop.xlane.xlu0 %790
      %792 = vadd.xlane.f32.xlu0 %v783
      %v793 = vpop.xlane.xlu0 %792
      %794 = vadd.xlane.f32.xlu0 %v784
      %v795 = vpop.xlane.xlu0 %794
      %796 = vadd.xlane.f32.xlu0 %v785
      %v797 = vpop.xlane.xlu0 %796
      %798 = vadd.xlane.f32.xlu0 %v786
      %v799 = vpop.xlane.xlu0 %798
      %800 = vadd.xlane.f32.xlu0 %v787
      %v801 = vpop.xlane.xlu0 %800
      %802 = vadd.xlane.f32.xlu0 %v788
      %v803 = vpop.xlane.xlu0 %802
      %804 = vadd.xlane.f32.xlu0 %v789
      %v805 = vpop.xlane.xlu0 %804
      %v814 = vlaneseq
      %v815 = vand.u32 %v814, 127
      %v816 = vlaneseq
      %v817 = vshrl.u32 %v816, 7
      %v818 = vsub.s32 %v815, %v817
      %v819 = vrot.slane %v791, %v818
      %v820 = vlaneseq
      %v821 = vshrl.u32 %v820, 7
      %v822 = vsub.s32 %v815, %v821
      %v823 = vrot.slane %v793, %v822
      %v824 = vlaneseq
      %v825 = vshrl.u32 %v824, 7
      %v826 = vsub.s32 %v815, %v825
      %v827 = vrot.slane %v795, %v826
      %v828 = vlaneseq
      %v829 = vshrl.u32 %v828, 7
      %v830 = vsub.s32 %v815, %v829
      %v831 = vrot.slane %v797, %v830
      %v832 = vlaneseq
      %v833 = vshrl.u32 %v832, 7
      %v834 = vsub.s32 %v815, %v833
      %v835 = vrot.slane %v799, %v834
      %v836 = vlaneseq
      %v837 = vshrl.u32 %v836, 7
      %v838 = vsub.s32 %v815, %v837
      %v839 = vrot.slane %v801, %v838
      %v840 = vlaneseq
      %v841 = vshrl.u32 %v840, 7
      %v842 = vsub.s32 %v815, %v841
      %v843 = vrot.slane %v803, %v842
      %v844 = vlaneseq
      %v845 = vshrl.u32 %v844, 7
      %v846 = vsub.s32 %v815, %v845
      %v847 = vrot.slane %v805, %v846
      %vm848 = vcmask 1041409
      %v849 = vsel %vm848, %v823, %v819
      %vm850 = vcmask 1042434
      %v851 = vsel %vm850, %v827, %v849
      %vm852 = vcmask 1043459
      %v853 = vsel %vm852, %v831, %v851
      %vm854 = vcmask 1044484
      %v855 = vsel %vm854, %v835, %v853
      %vm856 = vcmask 1045509
      %v857 = vsel %vm856, %v839, %v855
      %vm858 = vcmask 1046534
      %v859 = vsel %vm858, %v843, %v857
      %vm860 = vcmask 1047559
      %v861 = vsel %vm860, %v847, %v859
      %vm863 = vcmask 64512
      %v864 = vsel %vm863, %v861, -inf
      %865 = vmax.xlane.f32.xlu0 %v864
      %v866 = vpop.xlane.xlu0 %865
      %v868 = vlaneseq
      %v869 = vshrl.u32 %v868, 7
      %v870 = vsub.s32 0, %v869
      %v871 = vrot.slane %v866, %v870
      %v872 = vlaneseq
      %v873 = vshrl.u32 %v872, 7
      %v874 = vsub.s32 1, %v873
      %v875 = vrot.slane %v866, %v874
      %v876 = vlaneseq
      %v877 = vshrl.u32 %v876, 7
      %v878 = vsub.s32 2, %v877
      %v879 = vrot.slane %v866, %v878
      %v880 = vlaneseq
      %v881 = vshrl.u32 %v880, 7
      %v882 = vsub.s32 3, %v881
      %v883 = vrot.slane %v866, %v882
      %v884 = vlaneseq
      %v885 = vshrl.u32 %v884, 7
      %v886 = vsub.s32 4, %v885
      %v887 = vrot.slane %v866, %v886
      %v888 = vlaneseq
      %v889 = vshrl.u32 %v888, 7
      %v890 = vsub.s32 5, %v889
      %v891 = vrot.slane %v866, %v890
      %v892 = vlaneseq
      %v893 = vshrl.u32 %v892, 7
      %v894 = vsub.s32 6, %v893
      %v895 = vrot.slane %v866, %v894
      %v896 = vlaneseq
      %v897 = vshrl.u32 %v896, 7
      %v898 = vsub.s32 7, %v897
      %v899 = vrot.slane %v866, %v898
      %v908 = vsub.f32 %v791, %v871
      %v909 = vsub.f32 %v793, %v875
      %v910 = vsub.f32 %v795, %v879
      %v911 = vsub.f32 %v797, %v883
      %v912 = vsub.f32 %v799, %v887
      %v913 = vsub.f32 %v801, %v891
      %v914 = vsub.f32 %v803, %v895
      %v915 = vsub.f32 %v805, %v899
      %v916 = vmul.f32 %v908, 1.442695
      %v917 = vpow.pop %v916
      %v918 = vmul.f32 %v909, 1.442695
      %v919 = vpow.pop %v918
      %v920 = vmul.f32 %v910, 1.442695
      %v921 = vpow.pop %v920
      %v922 = vmul.f32 %v911, 1.442695
      %v923 = vpow.pop %v922
      %v924 = vmul.f32 %v912, 1.442695
      %v925 = vpow.pop %v924
      %v926 = vmul.f32 %v913, 1.442695
      %v927 = vpow.pop %v926
      %v928 = vmul.f32 %v914, 1.442695
      %v929 = vpow.pop %v928
      %v930 = vmul.f32 %v915, 1.442695
      %v931 = vpow.pop %v930
      %940 = vset.pattern.permute.xlu0 0
      %941 = vperm.xlu0 %940, %v917
      %v942 = vpop.permute.xlu0 %941
      %943 = vset.pattern.permute.xlu0 0
      %944 = vperm.xlu0 %943, %v919
      %v945 = vpop.permute.xlu0 %944
      %946 = vset.pattern.permute.xlu0 0
      %947 = vperm.xlu0 %946, %v921
      %v948 = vpop.permute.xlu0 %947
      %949 = vset.pattern.permute.xlu0 0
      %950 = vperm.xlu0 %949, %v923
      %v951 = vpop.permute.xlu0 %950
      %952 = vset.pattern.permute.xlu0 0
      %953 = vperm.xlu0 %952, %v925
      %v954 = vpop.permute.xlu0 %953
      %955 = vset.pattern.permute.xlu0 0
      %956 = vperm.xlu0 %955, %v927
      %v957 = vpop.permute.xlu0 %956
      %958 = vset.pattern.permute.xlu0 0
      %959 = vperm.xlu0 %958, %v929
      %v960 = vpop.permute.xlu0 %959
      %961 = vset.pattern.permute.xlu0 0
      %962 = vperm.xlu0 %961, %v931
      %v963 = vpop.permute.xlu0 %962
      %v964 = vlaneseq
      %v965 = vshrl.u32 %v964, 7
      %v966 = vsub.s32 %v815, %v965
      %v967 = vrot.slane %v942, %v966
      %v968 = vlaneseq
      %v969 = vshrl.u32 %v968, 7
      %v970 = vsub.s32 %v815, %v969
      %v971 = vrot.slane %v945, %v970
      %v972 = vlaneseq
      %v973 = vshrl.u32 %v972, 7
      %v974 = vsub.s32 %v815, %v973
      %v975 = vrot.slane %v948, %v974
      %v976 = vlaneseq
      %v977 = vshrl.u32 %v976, 7
      %v978 = vsub.s32 %v815, %v977
      %v979 = vrot.slane %v951, %v978
      %v980 = vlaneseq
      %v981 = vshrl.u32 %v980, 7
      %v982 = vsub.s32 %v815, %v981
      %v983 = vrot.slane %v954, %v982
      %v984 = vlaneseq
      %v985 = vshrl.u32 %v984, 7
      %v986 = vsub.s32 %v815, %v985
      %v987 = vrot.slane %v957, %v986
      %v988 = vlaneseq
      %v989 = vshrl.u32 %v988, 7
      %v990 = vsub.s32 %v815, %v989
      %v991 = vrot.slane %v960, %v990
      %v992 = vlaneseq
      %v993 = vshrl.u32 %v992, 7
      %v994 = vsub.s32 %v815, %v993
      %v995 = vrot.slane %v963, %v994
      %v996 = vsel %vm848, %v971, %v967
      %v997 = vsel %vm850, %v975, %v996
      %v998 = vsel %vm852, %v979, %v997
      %v999 = vsel %vm854, %v983, %v998
      %v1000 = vsel %vm856, %v987, %v999
      %v1001 = vsel %vm858, %v991, %v1000
      %v1002 = vsel %vm860, %v995, %v1001
      %v1004 = vsel %vm863, %v1002, 0.0
      %1005 = vadd.xlane.f32.xlu0 %v1004
      %v1006 = vpop.xlane.xlu0 %1005
      %v1007 = vrcp.pop %v1006
      %v1008 = vmul.f32 %v1006, %v1007
      %v1009 = vsub.f32 2.0, %v1008
      %v1010 = vmul.f32 %v1007, %v1009
      %v1012 = vlaneseq
      %v1013 = vshrl.u32 %v1012, 7
      %v1014 = vsub.s32 0, %v1013
      %v1015 = vrot.slane %v1010, %v1014
      %v1016 = vlaneseq
      %v1017 = vshrl.u32 %v1016, 7
      %v1018 = vsub.s32 1, %v1017
      %v1019 = vrot.slane %v1010, %v1018
      %v1020 = vlaneseq
      %v1021 = vshrl.u32 %v1020, 7
      %v1022 = vsub.s32 2, %v1021
      %v1023 = vrot.slane %v1010, %v1022
      %v1024 = vlaneseq
      %v1025 = vshrl.u32 %v1024, 7
      %v1026 = vsub.s32 3, %v1025
      %v1027 = vrot.slane %v1010, %v1026
      %v1028 = vlaneseq
      %v1029 = vshrl.u32 %v1028, 7
      %v1030 = vsub.s32 4, %v1029
      %v1031 = vrot.slane %v1010, %v1030
      %v1032 = vlaneseq
      %v1033 = vshrl.u32 %v1032, 7
      %v1034 = vsub.s32 5, %v1033
      %v1035 = vrot.slane %v1010, %v1034
      %v1036 = vlaneseq
      %v1037 = vshrl.u32 %v1036, 7
      %v1038 = vsub.s32 6, %v1037
      %v1039 = vrot.slane %v1010, %v1038
      %v1040 = vlaneseq
      %v1041 = vshrl.u32 %v1040, 7
      %v1042 = vsub.s32 7, %v1041
      %v1043 = vrot.slane %v1010, %v1042
      %v1052 = vmul.f32 %v917, %v1015
      %v1053 = vmul.f32 %v919, %v1019
      %v1054 = vmul.f32 %v921, %v1023
      %v1055 = vmul.f32 %v923, %v1027
      %v1056 = vmul.f32 %v925, %v1031
      %v1057 = vmul.f32 %v927, %v1035
      %v1058 = vmul.f32 %v929, %v1039
      %v1059 = vmul.f32 %v931, %v1043
      %v1060 = vpack.c.bf16 %v1052, %v1052
      %v1061 = vpack.c.bf16 %v1053, %v1053
      %v1062 = vpack.c.bf16 %v1054, %v1054
      %v1063 = vpack.c.bf16 %v1055, %v1055
      %v1064 = vpack.c.bf16 %v1056, %v1056
      %v1065 = vpack.c.bf16 %v1057, %v1057
      %v1066 = vpack.c.bf16 %v1058, %v1058
      %v1067 = vpack.c.bf16 %v1059, %v1059
      %v1069 = vunpack.c.l.b16 %v1060
      %1070 = vset.pattern.permute.xlu0 0
      %1071 = vperm.xlu0 %1070, %v1069
      %v1072 = vpop.permute.xlu0 %1071
      %v1073 = vlaneseq
      %v1074 = vshrl.u32 %v1073, 7
      %v1075 = vsub.s32 %v815, %v1074
      %v1076 = vrot.slane %v1072, %v1075
      %v1077 = vpack.c.b16 %v1076, %v1076
      %v1079 = vsel %vm863, %v1077, 0
      %vm1081 = vcmask 1043456
      %v1083 = vsel %vm1081, %v151, 0
      %1085 = vmatprep.subr.bf16.mxu0 0
      %1086 = vmatpush1.bf16.msra.mxu0 %v1083
      %1087 = vmatprep.subr.bf16.mxu0 0
      %1088 = vmatpush1.bf16.msra.mxu0 0
      %1089 = vmatprep.subr.bf16.mxu0 0
      %1090 = vmatpush1.bf16.msra.mxu0 0
      %1091 = vmatprep.subr.bf16.mxu0 0
      %1092 = vmatpush1.bf16.msra.mxu0 0
      %1093 = vmatprep.subr.bf16.mxu0 0
      %1094 = vmatpush1.bf16.msra.mxu0 0
      %1095 = vmatprep.subr.bf16.mxu0 0
      %1096 = vmatpush1.bf16.msra.mxu0 0
      %1097 = vmatprep.subr.bf16.mxu0 0
      %1098 = vmatpush1.bf16.msra.mxu0 0
      %1099 = vmatprep.subr.bf16.mxu0 0
      %1100 = vmatpush1.bf16.msra.mxu0 0
      %1101 = vmatprep.subr.bf16.mxu0 0
      %1102 = vmatpush1.bf16.msra.mxu0 0
      %1103 = vmatprep.subr.bf16.mxu0 0
      %1104 = vmatpush1.bf16.msra.mxu0 0
      %1105 = vmatprep.subr.bf16.mxu0 0
      %1106 = vmatpush1.bf16.msra.mxu0 0
      %1107 = vmatprep.subr.bf16.mxu0 0
      %1108 = vmatpush1.bf16.msra.mxu0 0
      %1109 = vmatprep.subr.bf16.mxu0 0
      %1110 = vmatpush1.bf16.msra.mxu0 0
      %1111 = vmatprep.subr.bf16.mxu0 0
      %1112 = vmatpush1.bf16.msra.mxu0 0
      %1113 = vmatprep.subr.bf16.mxu0 0
      %1114 = vmatpush1.bf16.msra.mxu0 0
      %1115 = vmatprep.subr.bf16.mxu0 0
      %1116 = vmatpush1.bf16.msra.mxu0 0
      %1117 = vmatprep.mubr.bf16.mxu0 0
      %1118 = vmatmul.mubr.bf16.gmra.mrb[0].mxu0 %v1079
      %v1119 = vpop.f32.mrb[0].mxu0
      %v1120 = vadd.f32 0.0, %v1119
      %v1121 = vpop.f32.mrb[0].mxu0
      %v1122 = vpop.f32.mrb[0].mxu0
      %v1123 = vpop.f32.mrb[0].mxu0
      %1124 = vdwg.mxu0
      %v1126 = vunpack.c.l.b16 %v1061
      %1127 = vset.pattern.permute.xlu0 0
      %1128 = vperm.xlu0 %1127, %v1126
      %v1129 = vpop.permute.xlu0 %1128
      %v1130 = vlaneseq
      %v1131 = vshrl.u32 %v1130, 7
      %v1132 = vsub.s32 %v815, %v1131
      %v1133 = vrot.slane %v1129, %v1132
      %v1134 = vpack.c.b16 %v1133, %v1133
      %v1136 = vsel %vm863, %v1134, 0
      %v1139 = vsel %vm1081, %v152, 0
      %1141 = vmatprep.subr.bf16.mxu0 0
      %1142 = vmatpush1.bf16.msra.mxu0 %v1139
      %1143 = vmatprep.subr.bf16.mxu0 0
      %1144 = vmatpush1.bf16.msra.mxu0 0
      %1145 = vmatprep.subr.bf16.mxu0 0
      %1146 = vmatpush1.bf16.msra.mxu0 0
      %1147 = vmatprep.subr.bf16.mxu0 0
      %1148 = vmatpush1.bf16.msra.mxu0 0
      %1149 = vmatprep.subr.bf16.mxu0 0
      %1150 = vmatpush1.bf16.msra.mxu0 0
      %1151 = vmatprep.subr.bf16.mxu0 0
      %1152 = vmatpush1.bf16.msra.mxu0 0
      %1153 = vmatprep.subr.bf16.mxu0 0
      %1154 = vmatpush1.bf16.msra.mxu0 0
      %1155 = vmatprep.subr.bf16.mxu0 0
      %1156 = vmatpush1.bf16.msra.mxu0 0
      %1157 = vmatprep.subr.bf16.mxu0 0
      %1158 = vmatpush1.bf16.msra.mxu0 0
      %1159 = vmatprep.subr.bf16.mxu0 0
      %1160 = vmatpush1.bf16.msra.mxu0 0
      %1161 = vmatprep.subr.bf16.mxu0 0
      %1162 = vmatpush1.bf16.msra.mxu0 0
      %1163 = vmatprep.subr.bf16.mxu0 0
      %1164 = vmatpush1.bf16.msra.mxu0 0
      %1165 = vmatprep.subr.bf16.mxu0 0
      %1166 = vmatpush1.bf16.msra.mxu0 0
      %1167 = vmatprep.subr.bf16.mxu0 0
      %1168 = vmatpush1.bf16.msra.mxu0 0
      %1169 = vmatprep.subr.bf16.mxu0 0
      %1170 = vmatpush1.bf16.msra.mxu0 0
      %1171 = vmatprep.subr.bf16.mxu0 0
      %1172 = vmatpush1.bf16.msra.mxu0 0
      %1173 = vmatprep.mubr.bf16.mxu0 0
      %1174 = vmatmul.mubr.bf16.gmra.mrb[0].mxu0 %v1136
      %v1175 = vpop.f32.mrb[0].mxu0
      %v1176 = vadd.f32 0.0, %v1175
      %v1177 = vpop.f32.mrb[0].mxu0
      %v1178 = vpop.f32.mrb[0].mxu0
      %v1179 = vpop.f32.mrb[0].mxu0
      %1180 = vdwg.mxu0
      %v1182 = vunpack.c.l.b16 %v1062
      %1183 = vset.pattern.permute.xlu0 0
      %1184 = vperm.xlu0 %1183, %v1182
      %v1185 = vpop.permute.xlu0 %1184
      %v1186 = vlaneseq
      %v1187 = vshrl.u32 %v1186, 7
      %v1188 = vsub.s32 %v815, %v1187
      %v1189 = vrot.slane %v1185, %v1188
      %v1190 = vpack.c.b16 %v1189, %v1189
      %v1192 = vsel %vm863, %v1190, 0
      %v1195 = vsel %vm1081, %v153, 0
      %1197 = vmatprep.subr.bf16.mxu0 0
      %1198 = vmatpush1.bf16.msra.mxu0 %v1195
      %1199 = vmatprep.subr.bf16.mxu0 0
      %1200 = vmatpush1.bf16.msra.mxu0 0
      %1201 = vmatprep.subr.bf16.mxu0 0
      %1202 = vmatpush1.bf16.msra.mxu0 0
      %1203 = vmatprep.subr.bf16.mxu0 0
      %1204 = vmatpush1.bf16.msra.mxu0 0
      %1205 = vmatprep.subr.bf16.mxu0 0
      %1206 = vmatpush1.bf16.msra.mxu0 0
      %1207 = vmatprep.subr.bf16.mxu0 0
      %1208 = vmatpush1.bf16.msra.mxu0 0
      %1209 = vmatprep.subr.bf16.mxu0 0
      %1210 = vmatpush1.bf16.msra.mxu0 0
      %1211 = vmatprep.subr.bf16.mxu0 0
      %1212 = vmatpush1.bf16.msra.mxu0 0
      %1213 = vmatprep.subr.bf16.mxu0 0
      %1214 = vmatpush1.bf16.msra.mxu0 0
      %1215 = vmatprep.subr.bf16.mxu0 0
      %1216 = vmatpush1.bf16.msra.mxu0 0
      %1217 = vmatprep.subr.bf16.mxu0 0
      %1218 = vmatpush1.bf16.msra.mxu0 0
      %1219 = vmatprep.subr.bf16.mxu0 0
      %1220 = vmatpush1.bf16.msra.mxu0 0
      %1221 = vmatprep.subr.bf16.mxu0 0
      %1222 = vmatpush1.bf16.msra.mxu0 0
      %1223 = vmatprep.subr.bf16.mxu0 0
      %1224 = vmatpush1.bf16.msra.mxu0 0
      %1225 = vmatprep.subr.bf16.mxu0 0
      %1226 = vmatpush1.bf16.msra.mxu0 0
      %1227 = vmatprep.subr.bf16.mxu0 0
      %1228 = vmatpush1.bf16.msra.mxu0 0
      %1229 = vmatprep.mubr.bf16.mxu0 0
      %1230 = vmatmul.mubr.bf16.gmra.mrb[0].mxu0 %v1192
      %v1231 = vpop.f32.mrb[0].mxu0
      %v1232 = vadd.f32 0.0, %v1231
      %v1233 = vpop.f32.mrb[0].mxu0
      %v1234 = vpop.f32.mrb[0].mxu0
      %v1235 = vpop.f32.mrb[0].mxu0
      %1236 = vdwg.mxu0
      %v1238 = vunpack.c.l.b16 %v1063
      %1239 = vset.pattern.permute.xlu0 0
      %1240 = vperm.xlu0 %1239, %v1238
      %v1241 = vpop.permute.xlu0 %1240
      %v1242 = vlaneseq
      %v1243 = vshrl.u32 %v1242, 7
      %v1244 = vsub.s32 %v815, %v1243
      %v1245 = vrot.slane %v1241, %v1244
      %v1246 = vpack.c.b16 %v1245, %v1245
      %v1248 = vsel %vm863, %v1246, 0
      %v1251 = vsel %vm1081, %v154, 0
      %1253 = vmatprep.subr.bf16.mxu0 0
      %1254 = vmatpush1.bf16.msra.mxu0 %v1251
      %1255 = vmatprep.subr.bf16.mxu0 0
      %1256 = vmatpush1.bf16.msra.mxu0 0
      %1257 = vmatprep.subr.bf16.mxu0 0
      %1258 = vmatpush1.bf16.msra.mxu0 0
      %1259 = vmatprep.subr.bf16.mxu0 0
      %1260 = vmatpush1.bf16.msra.mxu0 0
      %1261 = vmatprep.subr.bf16.mxu0 0
      %1262 = vmatpush1.bf16.msra.mxu0 0
      %1263 = vmatprep.subr.bf16.mxu0 0
      %1264 = vmatpush1.bf16.msra.mxu0 0
      %1265 = vmatprep.subr.bf16.mxu0 0
      %1266 = vmatpush1.bf16.msra.mxu0 0
      %1267 = vmatprep.subr.bf16.mxu0 0
      %1268 = vmatpush1.bf16.msra.mxu0 0
      %1269 = vmatprep.subr.bf16.mxu0 0
      %1270 = vmatpush1.bf16.msra.mxu0 0
      %1271 = vmatprep.subr.bf16.mxu0 0
      %1272 = vmatpush1.bf16.msra.mxu0 0
      %1273 = vmatprep.subr.bf16.mxu0 0
      %1274 = vmatpush1.bf16.msra.mxu0 0
      %1275 = vmatprep.subr.bf16.mxu0 0
      %1276 = vmatpush1.bf16.msra.mxu0 0
      %1277 = vmatprep.subr.bf16.mxu0 0
      %1278 = vmatpush1.bf16.msra.mxu0 0
      %1279 = vmatprep.subr.bf16.mxu0 0
      %1280 = vmatpush1.bf16.msra.mxu0 0
      %1281 = vmatprep.subr.bf16.mxu0 0
      %1282 = vmatpush1.bf16.msra.mxu0 0
      %1283 = vmatprep.subr.bf16.mxu0 0
      %1284 = vmatpush1.bf16.msra.mxu0 0
      %1285 = vmatprep.mubr.bf16.mxu0 0
      %1286 = vmatmul.mubr.bf16.gmra.mrb[0].mxu0 %v1248
      %v1287 = vpop.f32.mrb[0].mxu0
      %v1288 = vadd.f32 0.0, %v1287
      %v1289 = vpop.f32.mrb[0].mxu0
      %v1290 = vpop.f32.mrb[0].mxu0
      %v1291 = vpop.f32.mrb[0].mxu0
      %1292 = vdwg.mxu0
      %v1294 = vunpack.c.l.b16 %v1064
      %1295 = vset.pattern.permute.xlu0 0
      %1296 = vperm.xlu0 %1295, %v1294
      %v1297 = vpop.permute.xlu0 %1296
      %v1298 = vlaneseq
      %v1299 = vshrl.u32 %v1298, 7
      %v1300 = vsub.s32 %v815, %v1299
      %v1301 = vrot.slane %v1297, %v1300
      %v1302 = vpack.c.b16 %v1301, %v1301
      %v1304 = vsel %vm863, %v1302, 0
      %v1307 = vsel %vm1081, %v155, 0
      %1309 = vmatprep.subr.bf16.mxu0 0
      %1310 = vmatpush1.bf16.msra.mxu0 %v1307
      %1311 = vmatprep.subr.bf16.mxu0 0
      %1312 = vmatpush1.bf16.msra.mxu0 0
      %1313 = vmatprep.subr.bf16.mxu0 0
      %1314 = vmatpush1.bf16.msra.mxu0 0
      %1315 = vmatprep.subr.bf16.mxu0 0
      %1316 = vmatpush1.bf16.msra.mxu0 0
      %1317 = vmatprep.subr.bf16.mxu0 0
      %1318 = vmatpush1.bf16.msra.mxu0 0
      %1319 = vmatprep.subr.bf16.mxu0 0
      %1320 = vmatpush1.bf16.msra.mxu0 0
      %1321 = vmatprep.subr.bf16.mxu0 0
      %1322 = vmatpush1.bf16.msra.mxu0 0
      %1323 = vmatprep.subr.bf16.mxu0 0
      %1324 = vmatpush1.bf16.msra.mxu0 0
      %1325 = vmatprep.subr.bf16.mxu0 0
      %1326 = vmatpush1.bf16.msra.mxu0 0
      %1327 = vmatprep.subr.bf16.mxu0 0
      %1328 = vmatpush1.bf16.msra.mxu0 0
      %1329 = vmatprep.subr.bf16.mxu0 0
      %1330 = vmatpush1.bf16.msra.mxu0 0
      %1331 = vmatprep.subr.bf16.mxu0 0
      %1332 = vmatpush1.bf16.msra.mxu0 0
      %1333 = vmatprep.subr.bf16.mxu0 0
      %1334 = vmatpush1.bf16.msra.mxu0 0
      %1335 = vmatprep.subr.bf16.mxu0 0
      %1336 = vmatpush1.bf16.msra.mxu0 0
      %1337 = vmatprep.subr.bf16.mxu0 0
      %1338 = vmatpush1.bf16.msra.mxu0 0
      %1339 = vmatprep.subr.bf16.mxu0 0
      %1340 = vmatpush1.bf16.msra.mxu0 0
      %1341 = vmatprep.mubr.bf16.mxu0 0
      %1342 = vmatmul.mubr.bf16.gmra.mrb[0].mxu0 %v1304
      %v1343 = vpop.f32.mrb[0].mxu0
      %v1344 = vadd.f32 0.0, %v1343
      %v1345 = vpop.f32.mrb[0].mxu0
      %v1346 = vpop.f32.mrb[0].mxu0
      %v1347 = vpop.f32.mrb[0].mxu0
      %1348 = vdwg.mxu0
      %v1350 = vunpack.c.l.b16 %v1065
      %1351 = vset.pattern.permute.xlu0 0
      %1352 = vperm.xlu0 %1351, %v1350
      %v1353 = vpop.permute.xlu0 %1352
      %v1354 = vlaneseq
      %v1355 = vshrl.u32 %v1354, 7
      %v1356 = vsub.s32 %v815, %v1355
      %v1357 = vrot.slane %v1353, %v1356
      %v1358 = vpack.c.b16 %v1357, %v1357
      %v1360 = vsel %vm863, %v1358, 0
      %v1363 = vsel %vm1081, %v156, 0
      %1365 = vmatprep.subr.bf16.mxu0 0
      %1366 = vmatpush1.bf16.msra.mxu0 %v1363
      %1367 = vmatprep.subr.bf16.mxu0 0
      %1368 = vmatpush1.bf16.msra.mxu0 0
      %1369 = vmatprep.subr.bf16.mxu0 0
      %1370 = vmatpush1.bf16.msra.mxu0 0
      %1371 = vmatprep.subr.bf16.mxu0 0
      %1372 = vmatpush1.bf16.msra.mxu0 0
      %1373 = vmatprep.subr.bf16.mxu0 0
      %1374 = vmatpush1.bf16.msra.mxu0 0
      %1375 = vmatprep.subr.bf16.mxu0 0
      %1376 = vmatpush1.bf16.msra.mxu0 0
      %1377 = vmatprep.subr.bf16.mxu0 0
      %1378 = vmatpush1.bf16.msra.mxu0 0
      %1379 = vmatprep.subr.bf16.mxu0 0
      %1380 = vmatpush1.bf16.msra.mxu0 0
      %1381 = vmatprep.subr.bf16.mxu0 0
      %1382 = vmatpush1.bf16.msra.mxu0 0
      %1383 = vmatprep.subr.bf16.mxu0 0
      %1384 = vmatpush1.bf16.msra.mxu0 0
      %1385 = vmatprep.subr.bf16.mxu0 0
      %1386 = vmatpush1.bf16.msra.mxu0 0
      %1387 = vmatprep.subr.bf16.mxu0 0
      %1388 = vmatpush1.bf16.msra.mxu0 0
      %1389 = vmatprep.subr.bf16.mxu0 0
      %1390 = vmatpush1.bf16.msra.mxu0 0
      %1391 = vmatprep.subr.bf16.mxu0 0
      %1392 = vmatpush1.bf16.msra.mxu0 0
      %1393 = vmatprep.subr.bf16.mxu0 0
      %1394 = vmatpush1.bf16.msra.mxu0 0
      %1395 = vmatprep.subr.bf16.mxu0 0
      %1396 = vmatpush1.bf16.msra.mxu0 0
      %1397 = vmatprep.mubr.bf16.mxu0 0
      %1398 = vmatmul.mubr.bf16.gmra.mrb[0].mxu0 %v1360
      %v1399 = vpop.f32.mrb[0].mxu0
      %v1400 = vadd.f32 0.0, %v1399
      %v1401 = vpop.f32.mrb[0].mxu0
      %v1402 = vpop.f32.mrb[0].mxu0
      %v1403 = vpop.f32.mrb[0].mxu0
      %1404 = vdwg.mxu0
      %v1406 = vunpack.c.l.b16 %v1066
      %1407 = vset.pattern.permute.xlu0 0
      %1408 = vperm.xlu0 %1407, %v1406
      %v1409 = vpop.permute.xlu0 %1408
      %v1410 = vlaneseq
      %v1411 = vshrl.u32 %v1410, 7
      %v1412 = vsub.s32 %v815, %v1411
      %v1413 = vrot.slane %v1409, %v1412
      %v1414 = vpack.c.b16 %v1413, %v1413
      %v1416 = vsel %vm863, %v1414, 0
      %v1419 = vsel %vm1081, %v157, 0
      %1421 = vmatprep.subr.bf16.mxu0 0
      %1422 = vmatpush1.bf16.msra.mxu0 %v1419
      %1423 = vmatprep.subr.bf16.mxu0 0
      %1424 = vmatpush1.bf16.msra.mxu0 0
      %1425 = vmatprep.subr.bf16.mxu0 0
      %1426 = vmatpush1.bf16.msra.mxu0 0
      %1427 = vmatprep.subr.bf16.mxu0 0
      %1428 = vmatpush1.bf16.msra.mxu0 0
      %1429 = vmatprep.subr.bf16.mxu0 0
      %1430 = vmatpush1.bf16.msra.mxu0 0
      %1431 = vmatprep.subr.bf16.mxu0 0
      %1432 = vmatpush1.bf16.msra.mxu0 0
      %1433 = vmatprep.subr.bf16.mxu0 0
      %1434 = vmatpush1.bf16.msra.mxu0 0
      %1435 = vmatprep.subr.bf16.mxu0 0
      %1436 = vmatpush1.bf16.msra.mxu0 0
      %1437 = vmatprep.subr.bf16.mxu0 0
      %1438 = vmatpush1.bf16.msra.mxu0 0
      %1439 = vmatprep.subr.bf16.mxu0 0
      %1440 = vmatpush1.bf16.msra.mxu0 0
      %1441 = vmatprep.subr.bf16.mxu0 0
      %1442 = vmatpush1.bf16.msra.mxu0 0
      %1443 = vmatprep.subr.bf16.mxu0 0
      %1444 = vmatpush1.bf16.msra.mxu0 0
      %1445 = vmatprep.subr.bf16.mxu0 0
      %1446 = vmatpush1.bf16.msra.mxu0 0
      %1447 = vmatprep.subr.bf16.mxu0 0
      %1448 = vmatpush1.bf16.msra.mxu0 0
      %1449 = vmatprep.subr.bf16.mxu0 0
      %1450 = vmatpush1.bf16.msra.mxu0 0
      %1451 = vmatprep.subr.bf16.mxu0 0
      %1452 = vmatpush1.bf16.msra.mxu0 0
      %1453 = vmatprep.mubr.bf16.mxu0 0
      %1454 = vmatmul.mubr.bf16.gmra.mrb[0].mxu0 %v1416
      %v1455 = vpop.f32.mrb[0].mxu0
      %v1456 = vadd.f32 0.0, %v1455
      %v1457 = vpop.f32.mrb[0].mxu0
      %v1458 = vpop.f32.mrb[0].mxu0
      %v1459 = vpop.f32.mrb[0].mxu0
      %1460 = vdwg.mxu0
      %v1462 = vunpack.c.l.b16 %v1067
      %1463 = vset.pattern.permute.xlu0 0
      %1464 = vperm.xlu0 %1463, %v1462
      %v1465 = vpop.permute.xlu0 %1464
      %v1466 = vlaneseq
      %v1467 = vshrl.u32 %v1466, 7
      %v1468 = vsub.s32 %v815, %v1467
      %v1469 = vrot.slane %v1465, %v1468
      %v1470 = vpack.c.b16 %v1469, %v1469
      %v1472 = vsel %vm863, %v1470, 0
      %v1475 = vsel %vm1081, %v158, 0
      %1477 = vmatprep.subr.bf16.mxu0 0
      %1478 = vmatpush1.bf16.msra.mxu0 %v1475
      %1479 = vmatprep.subr.bf16.mxu0 0
      %1480 = vmatpush1.bf16.msra.mxu0 0
      %1481 = vmatprep.subr.bf16.mxu0 0
      %1482 = vmatpush1.bf16.msra.mxu0 0
      %1483 = vmatprep.subr.bf16.mxu0 0
      %1484 = vmatpush1.bf16.msra.mxu0 0
      %1485 = vmatprep.subr.bf16.mxu0 0
      %1486 = vmatpush1.bf16.msra.mxu0 0
      %1487 = vmatprep.subr.bf16.mxu0 0
      %1488 = vmatpush1.bf16.msra.mxu0 0
      %1489 = vmatprep.subr.bf16.mxu0 0
      %1490 = vmatpush1.bf16.msra.mxu0 0
      %1491 = vmatprep.subr.bf16.mxu0 0
      %1492 = vmatpush1.bf16.msra.mxu0 0
      %1493 = vmatprep.subr.bf16.mxu0 0
      %1494 = vmatpush1.bf16.msra.mxu0 0
      %1495 = vmatprep.subr.bf16.mxu0 0
      %1496 = vmatpush1.bf16.msra.mxu0 0
      %1497 = vmatprep.subr.bf16.mxu0 0
      %1498 = vmatpush1.bf16.msra.mxu0 0
      %1499 = vmatprep.subr.bf16.mxu0 0
      %1500 = vmatpush1.bf16.msra.mxu0 0
      %1501 = vmatprep.subr.bf16.mxu0 0
      %1502 = vmatpush1.bf16.msra.mxu0 0
      %1503 = vmatprep.subr.bf16.mxu0 0
      %1504 = vmatpush1.bf16.msra.mxu0 0
      %1505 = vmatprep.subr.bf16.mxu0 0
      %1506 = vmatpush1.bf16.msra.mxu0 0
      %1507 = vmatprep.subr.bf16.mxu0 0
      %1508 = vmatpush1.bf16.msra.mxu0 0
      %1509 = vmatprep.mubr.bf16.mxu0 0
      %1510 = vmatmul.mubr.bf16.gmra.mrb[0].mxu0 %v1472
      %v1511 = vpop.f32.mrb[0].mxu0
      %v1512 = vadd.f32 0.0, %v1511
      %v1513 = vpop.f32.mrb[0].mxu0
      %v1514 = vpop.f32.mrb[0].mxu0
      %v1515 = vpop.f32.mrb[0].mxu0
      %1516 = vdwg.mxu0
      %v1517 = vpack.c.bf16 %v1120, %v1120
      %v1518 = vpack.c.bf16 %v1176, %v1176
      %v1519 = vpack.c.bf16 %v1232, %v1232
      %v1520 = vpack.c.bf16 %v1288, %v1288
      %v1521 = vpack.c.bf16 %v1344, %v1344
      %v1522 = vpack.c.bf16 %v1400, %v1400
      %v1523 = vpack.c.bf16 %v1456, %v1456
      %v1524 = vpack.c.bf16 %v1512, %v1512
      %v1525 = vld [vmem:[#allocation12] sm:$0xf]
      %v1526 = vld [vmem:[#allocation12 + $0x4] sm:$0xf]
      %v1527 = vld [vmem:[#allocation12 + $0x8] sm:$0xf]
      %v1528 = vld [vmem:[#allocation12 + $0xc] sm:$0xf]
      %v1529 = vld [vmem:[#allocation12 + $0x10] sm:$0xf]
      %v1530 = vld [vmem:[#allocation12 + $0x14] sm:$0xf]
      %v1531 = vld [vmem:[#allocation12 + $0x18] sm:$0xf]
      %v1532 = vld [vmem:[#allocation12 + $0x1c] sm:$0xf]
      %v1533 = vld [vmem:[#allocation12 + $0x20] sm:$0xf]
      %v1534 = vld [vmem:[#allocation12 + $0x24] sm:$0xf]
      %v1535 = vld [vmem:[#allocation12 + $0x28] sm:$0xf]
      %v1536 = vld [vmem:[#allocation12 + $0x2c] sm:$0xf]
      %v1537 = vld [vmem:[#allocation12 + $0x30] sm:$0xf]
      %v1538 = vld [vmem:[#allocation12 + $0x34] sm:$0xf]
      %v1539 = vld [vmem:[#allocation12 + $0x38] sm:$0xf]
      %v1540 = vld [vmem:[#allocation12 + $0x3c] sm:$0xf]
      %v1541 = vpack.c.bf16 %v683, %v683
      %v1542 = vld [vmem:[#allocation14] sm:$0xf]
      %v1543 = vld [vmem:[#allocation14 + $0x4] sm:$0xf]
      %v1544 = vld [vmem:[#allocation14 + $0x8] sm:$0xf]
      %v1545 = vld [vmem:[#allocation14 + $0xc] sm:$0xf]
      %v1546 = vld [vmem:[#allocation14 + $0x10] sm:$0xf]
      %v1547 = vld [vmem:[#allocation14 + $0x14] sm:$0xf]
      %v1548 = vld [vmem:[#allocation14 + $0x18] sm:$0xf]
      %v1549 = vld [vmem:[#allocation14 + $0x1c] sm:$0xf]
      %v1550 = vld [vmem:[#allocation14 + $0x20] sm:$0xf]
      %v1551 = vld [vmem:[#allocation14 + $0x24] sm:$0xf]
      %v1552 = vld [vmem:[#allocation14 + $0x28] sm:$0xf]
      %v1553 = vld [vmem:[#allocation14 + $0x2c] sm:$0xf]
      %v1554 = vld [vmem:[#allocation14 + $0x30] sm:$0xf]
      %v1555 = vld [vmem:[#allocation14 + $0x34] sm:$0xf]
      %v1556 = vld [vmem:[#allocation14 + $0x38] sm:$0xf]
      %v1557 = vld [vmem:[#allocation14 + $0x3c] sm:$0xf]
      %v1574 = vunpack.c.l.b16 %v1542
      %v1575 = vunpack.c.l.b16 %v1543
      %v1576 = vunpack.c.l.b16 %v1544
      %v1577 = vunpack.c.l.b16 %v1545
      %v1578 = vunpack.c.l.b16 %v1546
      %v1579 = vunpack.c.l.b16 %v1547
      %v1580 = vunpack.c.l.b16 %v1548
      %v1581 = vunpack.c.l.b16 %v1549
      %v1582 = vunpack.c.l.b16 %v1550
      %v1583 = vunpack.c.l.b16 %v1551
      %v1584 = vunpack.c.l.b16 %v1552
      %v1585 = vunpack.c.l.b16 %v1553
      %v1586 = vunpack.c.l.b16 %v1554
      %v1587 = vunpack.c.l.b16 %v1555
      %v1588 = vunpack.c.l.b16 %v1556
      %v1589 = vunpack.c.l.b16 %v1557
      %v1590 = vpack.c.b16 %v1575, %v1574
      %v1591 = vpack.c.b16 %v1577, %v1576
      %v1592 = vpack.c.b16 %v1579, %v1578
      %v1593 = vpack.c.b16 %v1581, %v1580
      %v1594 = vpack.c.b16 %v1583, %v1582
      %v1595 = vpack.c.b16 %v1585, %v1584
      %v1596 = vpack.c.b16 %v1587, %v1586
      %v1597 = vpack.c.b16 %v1589, %v1588
      %1606 = vmatprep.subr.bf16.mxu0 0
      %1607 = vmatpush1.bf16.msra.mxu0 %v1590
      %1608 = vmatprep.subr.bf16.mxu0 0
      %1609 = vmatpush1.bf16.msra.mxu0 %v1591
      %1610 = vmatprep.subr.bf16.mxu0 0
      %1611 = vmatpush1.bf16.msra.mxu0 %v1592
      %1612 = vmatprep.subr.bf16.mxu0 0
      %1613 = vmatpush1.bf16.msra.mxu0 %v1593
      %1614 = vmatprep.subr.bf16.mxu0 0
      %1615 = vmatpush1.bf16.msra.mxu0 %v1594
      %1616 = vmatprep.subr.bf16.mxu0 0
      %1617 = vmatpush1.bf16.msra.mxu0 %v1595
      %1618 = vmatprep.subr.bf16.mxu0 0
      %1619 = vmatpush1.bf16.msra.mxu0 %v1596
      %1620 = vmatprep.subr.bf16.mxu0 0
      %1621 = vmatpush1.bf16.msra.mxu0 %v1597
      %1622 = vmatprep.subr.bf16.mxu0 0
      %1623 = vmatpush1.bf16.msra.mxu0 0
      %1624 = vmatprep.subr.bf16.mxu0 0
      %1625 = vmatpush1.bf16.msra.mxu0 0
      %1626 = vmatprep.subr.bf16.mxu0 0
      %1627 = vmatpush1.bf16.msra.mxu0 0
      %1628 = vmatprep.subr.bf16.mxu0 0
      %1629 = vmatpush1.bf16.msra.mxu0 0
      %1630 = vmatprep.subr.bf16.mxu0 0
      %1631 = vmatpush1.bf16.msra.mxu0 0
      %1632 = vmatprep.subr.bf16.mxu0 0
      %1633 = vmatpush1.bf16.msra.mxu0 0
      %1634 = vmatprep.subr.bf16.mxu0 0
      %1635 = vmatpush1.bf16.msra.mxu0 0
      %1636 = vmatprep.subr.bf16.mxu0 0
      %1637 = vmatpush1.bf16.msra.mxu0 0
      %1638 = vmatprep.mubr.bf16.mxu0 0
      %1639 = vmatmul.mubr.bf16.gmra.mrb[0].mxu0 %v1541
      %v1640 = vpop.f32.mrb[0].mxu0
      %v1641 = vadd.f32 0.0, %v1640
      %v1642 = vpop.f32.mrb[0].mxu0
      %v1643 = vpop.f32.mrb[0].mxu0
      %v1644 = vpop.f32.mrb[0].mxu0
      %1645 = vdwg.mxu0
      %v1654 = vunpack.c.l.b16 %v1517
      %v1655 = vunpack.c.l.b16 %v1518
      %v1656 = vunpack.c.l.b16 %v1519
      %v1657 = vunpack.c.l.b16 %v1520
      %v1658 = vunpack.c.l.b16 %v1521
      %v1659 = vunpack.c.l.b16 %v1522
      %v1660 = vunpack.c.l.b16 %v1523
      %v1661 = vunpack.c.l.b16 %v1524
      %v1662 = vrot.slane %v1655, 7
      %v1663 = vsel %vm848, %v1662, %v1654
      %v1664 = vrot.slane %v1656, 6
      %v1665 = vsel %vm850, %v1664, %v1663
      %v1666 = vrot.slane %v1657, 5
      %v1667 = vsel %vm852, %v1666, %v1665
      %v1668 = vrot.slane %v1658, 4
      %v1669 = vsel %vm854, %v1668, %v1667
      %v1670 = vrot.slane %v1659, 3
      %v1671 = vsel %vm856, %v1670, %v1669
      %v1672 = vrot.slane %v1660, 2
      %v1673 = vsel %vm858, %v1672, %v1671
      %v1674 = vrot.slane %v1661, 1
      %v1675 = vsel %vm860, %v1674, %v1673
      %v1676 = vpack.c.b16 %v1675, %v1675
      %v1694 = vunpack.c.l.b16 %v1525
      %v1695 = vunpack.c.l.b16 %v1526
      %v1696 = vunpack.c.l.b16 %v1527
      %v1697 = vunpack.c.l.b16 %v1528
      %v1698 = vunpack.c.l.b16 %v1529
      %v1699 = vunpack.c.l.b16 %v1530
      %v1700 = vunpack.c.l.b16 %v1531
      %v1701 = vunpack.c.l.b16 %v1532
      %v1702 = vunpack.c.l.b16 %v1533
      %v1703 = vunpack.c.l.b16 %v1534
      %v1704 = vunpack.c.l.b16 %v1535
      %v1705 = vunpack.c.l.b16 %v1536
      %v1706 = vunpack.c.l.b16 %v1537
      %v1707 = vunpack.c.l.b16 %v1538
      %v1708 = vunpack.c.l.b16 %v1539
      %v1709 = vunpack.c.l.b16 %v1540
      %v1710 = vpack.c.b16 %v1695, %v1694
      %v1711 = vpack.c.b16 %v1697, %v1696
      %v1712 = vpack.c.b16 %v1699, %v1698
      %v1713 = vpack.c.b16 %v1701, %v1700
      %v1714 = vpack.c.b16 %v1703, %v1702
      %v1715 = vpack.c.b16 %v1705, %v1704
      %v1716 = vpack.c.b16 %v1707, %v1706
      %v1717 = vpack.c.b16 %v1709, %v1708
      %1726 = vmatprep.subr.bf16.mxu0 0
      %1727 = vmatpush1.bf16.msra.mxu0 %v1710
      %1728 = vmatprep.subr.bf16.mxu0 0
      %1729 = vmatpush1.bf16.msra.mxu0 %v1711
      %1730 = vmatprep.subr.bf16.mxu0 0
      %1731 = vmatpush1.bf16.msra.mxu0 %v1712
      %1732 = vmatprep.subr.bf16.mxu0 0
      %1733 = vmatpush1.bf16.msra.mxu0 %v1713
      %1734 = vmatprep.subr.bf16.mxu0 0
      %1735 = vmatpush1.bf16.msra.mxu0 %v1714
      %1736 = vmatprep.subr.bf16.mxu0 0
      %1737 = vmatpush1.bf16.msra.mxu0 %v1715
      %1738 = vmatprep.subr.bf16.mxu0 0
      %1739 = vmatpush1.bf16.msra.mxu0 %v1716
      %1740 = vmatprep.subr.bf16.mxu0 0
      %1741 = vmatpush1.bf16.msra.mxu0 %v1717
      %1742 = vmatprep.subr.bf16.mxu0 0
      %1743 = vmatpush1.bf16.msra.mxu0 0
      %1744 = vmatprep.subr.bf16.mxu0 0
      %1745 = vmatpush1.bf16.msra.mxu0 0
      %1746 = vmatprep.subr.bf16.mxu0 0
      %1747 = vmatpush1.bf16.msra.mxu0 0
      %1748 = vmatprep.subr.bf16.mxu0 0
      %1749 = vmatpush1.bf16.msra.mxu0 0
      %1750 = vmatprep.subr.bf16.mxu0 0
      %1751 = vmatpush1.bf16.msra.mxu0 0
      %1752 = vmatprep.subr.bf16.mxu0 0
      %1753 = vmatpush1.bf16.msra.mxu0 0
      %1754 = vmatprep.subr.bf16.mxu0 0
      %1755 = vmatpush1.bf16.msra.mxu0 0
      %1756 = vmatprep.subr.bf16.mxu0 0
      %1757 = vmatpush1.bf16.msra.mxu0 0
      %1758 = vmatprep.mubr.bf16.mxu0 0
      %1759 = vmatmul.mubr.bf16.gmra.mrb[0].mxu0 %v1676
      %v1760 = vpop.f32.mrb[0].mxu0
      %v1761 = vadd.f32 %v1641, %v1760
      %v1762 = vpop.f32.mrb[0].mxu0
      %v1763 = vpop.f32.mrb[0].mxu0
      %v1764 = vpop.f32.mrb[0].mxu0
      %1765 = vdwg.mxu0
      %v1766 = vlaneseq
      %v1767 = vshrl.u32 %v1766, 7
      %v1768 = vsub.s32 4, %v1767
      %v1769 = vrot.slane %v642, %v1768
      %v1770 = vadd.f32 %v1761, %v1769
      %v1771 = vmax.f32 %v1770, 0.0
      %v1772 = vpack.c.bf16 %v1771, %v1771
      %1773 = vst [vmem:[#allocation2] sm:$0xf] %v1772
      %1774 = vst [vmem:[#allocation18] sm:$0xff] %v683
    $region77: #{tpu_custom_call.1} parent=1 // pred_fallthru
      _
    %v1775 = vld [vmem:[#allocation2] sm:$0xf]
    %v1776 = vld [vmem:[#allocation15] sm:$0xf]
    %v1777 = vld [vmem:[#allocation15 + $0x4] sm:$0xf]
    %v1778 = vld [vmem:[#allocation15 + $0x8] sm:$0xf]
    %v1779 = vld [vmem:[#allocation15 + $0xc] sm:$0xf]
    %v1780 = vld [vmem:[#allocation15 + $0x10] sm:$0xf]
    %v1781 = vld [vmem:[#allocation15 + $0x14] sm:$0xf]
    %v1782 = vld [vmem:[#allocation15 + $0x18] sm:$0xf]
    %v1783 = vld [vmem:[#allocation15 + $0x1c] sm:$0xf]
    %v1784 = vld [vmem:[#allocation15 + $0x20] sm:$0xf]
    %v1785 = vld [vmem:[#allocation15 + $0x24] sm:$0xf]
    %v1786 = vld [vmem:[#allocation15 + $0x28] sm:$0xf]
    %v1787 = vld [vmem:[#allocation15 + $0x2c] sm:$0xf]
    %v1788 = vld [vmem:[#allocation15 + $0x30] sm:$0xf]
    %v1789 = vld [vmem:[#allocation15 + $0x34] sm:$0xf]
    %v1790 = vld [vmem:[#allocation15 + $0x38] sm:$0xf]
    %v1791 = vld [vmem:[#allocation15 + $0x3c] sm:$0xf]
    %v1792 = vld [vmem:[%s9] sm:$0x1]
    %v1794 = vlaneseq
    %v1795 = vshrl.u32 %v1794, 7
    %v1796 = vsub.s32 0, %v1795
    %v1797 = vrot.slane %v1792, %v1796
    %v1815 = vunpack.c.l.b16 %v1776
    %v1816 = vunpack.c.l.b16 %v1777
    %v1817 = vunpack.c.l.b16 %v1778
    %v1818 = vunpack.c.l.b16 %v1779
    %v1819 = vunpack.c.l.b16 %v1780
    %v1820 = vunpack.c.l.b16 %v1781
    %v1821 = vunpack.c.l.b16 %v1782
    %v1822 = vunpack.c.l.b16 %v1783
    %v1823 = vunpack.c.l.b16 %v1784
    %v1824 = vunpack.c.l.b16 %v1785
    %v1825 = vunpack.c.l.b16 %v1786
    %v1826 = vunpack.c.l.b16 %v1787
    %v1827 = vunpack.c.l.b16 %v1788
    %v1828 = vunpack.c.l.b16 %v1789
    %v1829 = vunpack.c.l.b16 %v1790
    %v1830 = vunpack.c.l.b16 %v1791
    %v1831 = vpack.c.b16 %v1816, %v1815
    %v1832 = vpack.c.b16 %v1818, %v1817
    %v1833 = vpack.c.b16 %v1820, %v1819
    %v1834 = vpack.c.b16 %v1822, %v1821
    %v1835 = vpack.c.b16 %v1824, %v1823
    %v1836 = vpack.c.b16 %v1826, %v1825
    %v1837 = vpack.c.b16 %v1828, %v1827
    %v1838 = vpack.c.b16 %v1830, %v1829
    %1847 = vmatprep.subr.bf16.mxu0 0
    %1848 = vmatpush1.bf16.msra.mxu0 %v1831
    %1849 = vmatprep.subr.bf16.mxu0 0
    %1850 = vmatpush1.bf16.msra.mxu0 %v1832
    %1851 = vmatprep.subr.bf16.mxu0 0
    %1852 = vmatpush1.bf16.msra.mxu0 %v1833
    %1853 = vmatprep.subr.bf16.mxu0 0
    %1854 = vmatpush1.bf16.msra.mxu0 %v1834
    %1855 = vmatprep.subr.bf16.mxu0 0
    %1856 = vmatpush1.bf16.msra.mxu0 %v1835
    %1857 = vmatprep.subr.bf16.mxu0 0
    %1858 = vmatpush1.bf16.msra.mxu0 %v1836
    %1859 = vmatprep.subr.bf16.mxu0 0
    %1860 = vmatpush1.bf16.msra.mxu0 %v1837
    %1861 = vmatprep.subr.bf16.mxu0 0
    %1862 = vmatpush1.bf16.msra.mxu0 %v1838
    %1863 = vmatprep.subr.bf16.mxu0 0
    %1864 = vmatpush1.bf16.msra.mxu0 0
    %1865 = vmatprep.subr.bf16.mxu0 0
    %1866 = vmatpush1.bf16.msra.mxu0 0
    %1867 = vmatprep.subr.bf16.mxu0 0
    %1868 = vmatpush1.bf16.msra.mxu0 0
    %1869 = vmatprep.subr.bf16.mxu0 0
    %1870 = vmatpush1.bf16.msra.mxu0 0
    %1871 = vmatprep.subr.bf16.mxu0 0
    %1872 = vmatpush1.bf16.msra.mxu0 0
    %1873 = vmatprep.subr.bf16.mxu0 0
    %1874 = vmatpush1.bf16.msra.mxu0 0
    %1875 = vmatprep.subr.bf16.mxu0 0
    %1876 = vmatpush1.bf16.msra.mxu0 0
    %1877 = vmatprep.subr.bf16.mxu0 0
    %1878 = vmatpush1.bf16.msra.mxu0 0
    %1879 = vmatprep.mubr.bf16.mxu0 0
    %1880 = vmatmul.mubr.bf16.gmra.mrb[0].mxu0 %v1775
    %v1881 = vpop.f32.mrb[0].mxu0
    %v1882 = vadd.f32 %v1797, %v1881
    %v1883 = vpop.f32.mrb[0].mxu0
    %v1884 = vpop.f32.mrb[0].mxu0
    %v1885 = vpop.f32.mrb[0].mxu0
    %1886 = vdwg.mxu0
    %1887 = vst [vmem:[#allocation17] sm:$0xff] %v1882
    // Predicated region
    $region78: #{tpu_custom_call.1} parent=1 // pred_check
      _
    $region79: #{tpu_custom_call.1} parent=1 // pred_check_branch
      %1889 = sbr.rel (0) target = $region81
    $region80: #{tpu_custom_call.1} parent=1 // pred_region
      %s1891 = ssub.s32 128, 128
      %1892 = vsyncadd [#allocation5], %s1891
      %s1894 = sshll.u32 [#allocation17], 4
      %s1895 = int_to_ptr.vmem [resolvable:$true] %s1894
      %1897 = dma.vmem_to_hbm [thread:$0]  %s1895, 128, %s10, [#allocation5]
    $region81: #{tpu_custom_call.1} parent=1 // pred_fallthru
      _
    // Predicated region
    $region82: #{tpu_custom_call.1} parent=1 // pred_check
      _
    $region83: #{tpu_custom_call.1} parent=1 // pred_check_branch
      %1899 = sbr.rel (0) target = $region85
    $region84: #{tpu_custom_call.1} parent=1 // pred_region
      %s1901 = ssub.s32 128, 128
      %1902 = vsyncadd [#allocation19], %s1901
      %s1904 = sshll.u32 [#allocation18], 4
      %s1905 = int_to_ptr.vmem [resolvable:$true] %s1904
      %1907 = dma.vmem_to_hbm [thread:$0]  %s1905, 128, %s11, [#allocation19]
    $region85: #{tpu_custom_call.1} parent=1 // pred_fallthru
      _
    // Predicated region
    $region86: #{tpu_custom_call.1} parent=1 // pred_check
      _
    $region87: #{tpu_custom_call.1} parent=1 // pred_check_branch
      %1909 = sbr.rel (0) target = $region89
    $region88: #{tpu_custom_call.1} parent=1 // pred_region
      %1910 = dma.done [#allocation5], 128
    $region89: #{tpu_custom_call.1} parent=1 // pred_fallthru
      _
    // Predicated region
    $region90: #{tpu_custom_call.1} parent=1 // pred_check
      _
    $region91: #{tpu_custom_call.1} parent=1 // pred_check_branch
      %1912 = sbr.rel (0) target = $region93
    $region92: #{tpu_custom_call.1} parent=1 // pred_region
      %1913 = dma.done [#allocation19], 128
    $region93: #{tpu_custom_call.1} parent=1 // pred_fallthru
      _
    %1914 = vsyncpa [#allocation4], 1
    %1915 = vsyncpa [#allocation7], 1
    %1916 = vsyncpa [#allocation10], 1
    %1917 = vsyncpa [#allocation13], 1
    %1918 = vsyncpa [#allocation16], 1
    %1919 = vsyncpa [#allocation5], 1
    %1920 = vsyncpa [#allocation19], 1

// kernel: tpu_custom_call.1
$region0: #{tpu_custom_call.1}
  #allocation0 [shape = 'u32[]', space=smem, size = 0x4, offset = 0x4, fixed_abs, tag = 'smem constant byte address 0x4 - core index']
  #allocation1 [shape = 'u32[144,128]{1,0:T(1,128)}', space=vmem, size = 0x12000, scoped, tag = 'internal scratch']
  #allocation2 [shape = 'bf16[8,128]{1,0:T(8,128)(2,1)}', space=vmem, size = 0x800, scoped, tag = 'scratch operand']
  %s0 = inlined_call_operand.hbm [shape: bf16[8,128], index: 0, kind: input, shape index: {}]
  %s1 = inlined_call_operand.hbm [shape: bf16[8,8,128], index: 1, kind: input, shape index: {}]
  %s2 = inlined_call_operand.hbm [shape: f32[8,128], index: 2, kind: input, shape index: {}]
  %s3 = inlined_call_operand.hbm [shape: bf16[128,384], index: 3, kind: input, shape index: {}]
  %s4 = inlined_call_operand.hbm [shape: bf16[128,384], index: 4, kind: input, shape index: {}]
  %s5 = inlined_call_operand.vmem [shape: f32[8,128], index: 5, kind: input, shape index: {}]
  %s6 = inlined_call_operand.hbm [shape: bf16[128,128], index: 6, kind: input, shape index: {}]
  %s7 = inlined_call_operand.hbm [shape: bf16[128,128], index: 7, kind: input, shape index: {}]
  %s8 = inlined_call_operand.hbm [shape: bf16[128,128], index: 8, kind: input, shape index: {}]
  %s9 = inlined_call_operand.vmem [shape: f32[1,128], index: 9, kind: input, shape index: {}]
  %s10 = inlined_call_operand.hbm [shape: f32[8,128], index: 10, kind: output, shape index: {0}]
  %s11 = inlined_call_operand.hbm [shape: f32[8,128], index: 11, kind: output, shape index: {1}]
  %12 = xla_tuple %s10, %s11
  %s13 = sld [smem:[#allocation0]]
  $region94: #{tpu_custom_call.1} parent=0
    _
  %s15 = ssub.s32 1, %s13
  %s16 = scalar_select 0, %s15, %s13
  $region1: #{tpu_custom_call.1} parent=0
    #allocation3 [shape = 'u8[2048]{0}', space=vmem, size = 0x800, scoped, tag = 'input window, operand 0, single buffered']
    #allocation4 [shape = 's32[1]{0}', space=sflag, size = 0x4, scoped, tag = 'scoped memory for tpu_custom_call.1']
    #allocation5 [shape = 's32[1]{0}', space=sflag, size = 0x4, scoped, tag = 'scoped memory for tpu_custom_call.1']
    #allocation6 [shape = 'u8[16384]{0}', space=vmem, size = 0x4000, scoped, tag = 'input window, operand 1, single buffered']
    #allocation7 [shape = 's32[1]{0}', space=sflag, size = 0x4, scoped, tag = 'scoped memory for tpu_custom_call.1']
    #allocation8 [shape = 'u8[4096]{0}', space=vmem, size = 0x1000, scoped, tag = 'input window, operand 2, single buffered']
    #allocation9 [shape = 'u8[98304]{0}', space=vmem, size = 0x18000, scoped, tag = 'input window, operand 3, single buffered']
    #allocation10 [shape = 's32[1]{0}', space=sflag, size = 0x4, scoped, tag = 'scoped memory for tpu_custom_call.1']
    #allocation11 [shape = 'u8[98304]{0}', space=vmem, size = 0x18000, scoped, tag = 'input window, operand 4, single buffered']
    #allocation12 [shape = 'u8[32768]{0}', space=vmem, size = 0x8000, scoped, tag = 'input window, operand 6, single buffered']
    #allocation13 [shape = 's32[1]{0}', space=sflag, size = 0x4, scoped, tag = 'scoped memory for tpu_custom_call.1']
    #allocation14 [shape = 'u8[32768]{0}', space=vmem, size = 0x8000, scoped, tag = 'input window, operand 7, single buffered']
    #allocation15 [shape = 'u8[32768]{0}', space=vmem, size = 0x8000, scoped, tag = 'input window, operand 8, single buffered']
    #allocation16 [shape = 's32[1]{0}', space=sflag, size = 0x4, scoped, tag = 'scoped memory for tpu_custom_call.1']
    #allocation17 [shape = 'u8[4096]{0}', space=vmem, size = 0x1000, scoped, tag = 'output window, operand 0, single buffered']
    #allocation18 [shape = 'u8[4096]{0}', space=vmem, size = 0x1000, scoped, tag = 'output window, operand 1, single buffered']
    #allocation19 [shape = 's32[1]{0}', space=sflag, size = 0x4, scoped, tag = 'scoped memory for tpu_custom_call.1']
    %17 = vsyncpa [#allocation4], 0
    %18 = vsyncpa [#allocation7], 0
    %19 = vsyncpa [#allocation10], 0
    %20 = vsyncpa [#allocation13], 0
    %21 = vsyncpa [#allocation16], 0
    %22 = vsyncpa [#allocation5], 0
    %23 = vsyncpa [#allocation19], 0
    // Predicated region
    $region2: #{tpu_custom_call.1} parent=1 // pred_check
      _
    $region3: #{tpu_custom_call.1} parent=1 // pred_check_branch
      %25 = sbr.rel (0) target = $region5
    $region4: #{tpu_custom_call.1} parent=1 // pred_region
      %s27 = ssub.s32 64, 64
      %28 = vsyncadd [#allocation4], %s27
      %s30 = sshll.u32 [#allocation3], 4
      %s31 = int_to_ptr.vmem [resolvable:$true] %s30
      %33 = dma.hbm_to_vmem [thread:$0]  %s0, 64, %s31, [#allocation4]
    $region5: #{tpu_custom_call.1} parent=1 // pred_fallthru
      _
    // Predicated region
    $region6: #{tpu_custom_call.1} parent=1 // pred_check
      _
    $region7: #{tpu_custom_call.1} parent=1 // pred_check_branch
      %35 = sbr.rel (0) target = $region9
    $region8: #{tpu_custom_call.1} parent=1 // pred_region
      %s37 = ssub.s32 512, 512
      %38 = vsyncadd [#allocation7], %s37
      %s39 = sshll.u32 [#allocation6], 4
      %s40 = int_to_ptr.vmem [resolvable:$true] %s39
      %45 = dma.hbm_to_vmem [thread:$0]  %s1, 512, %s40, [#allocation7], 64, 64, 4
    $region9: #{tpu_custom_call.1} parent=1 // pred_fallthru
      _
    // Predicated region
    $region10: #{tpu_custom_call.1} parent=1 // pred_check
      _
    $region11: #{tpu_custom_call.1} parent=1 // pred_check_branch
      %47 = sbr.rel (0) target = $region13
    $region12: #{tpu_custom_call.1} parent=1 // pred_region
      %s49 = ssub.s32 128, 128
      %50 = vsyncadd [#allocation7], %s49
      %s52 = sshll.u32 [#allocation8], 4
      %s53 = int_to_ptr.vmem [resolvable:$true] %s52
      %55 = dma.hbm_to_vmem [thread:$0]  %s2, 128, %s53, [#allocation7]
    $region13: #{tpu_custom_call.1} parent=1 // pred_fallthru
      _
    // Predicated region
    $region14: #{tpu_custom_call.1} parent=1 // pred_check
      _
    $region15: #{tpu_custom_call.1} parent=1 // pred_check_branch
      %57 = sbr.rel (0) target = $region17
    $region16: #{tpu_custom_call.1} parent=1 // pred_region
      %s59 = ssub.s32 3072, 3072
      %60 = vsyncadd [#allocation10], %s59
      %s61 = sshll.u32 [#allocation9], 4
      %s62 = int_to_ptr.vmem [resolvable:$true] %s61
      %67 = dma.hbm_to_vmem [thread:$0]  %s3, 3072, %s62, [#allocation10], 192, 192, 12
    $region17: #{tpu_custom_call.1} parent=1 // pred_fallthru
      _
    // Predicated region
    $region18: #{tpu_custom_call.1} parent=1 // pred_check
      _
    $region19: #{tpu_custom_call.1} parent=1 // pred_check_branch
      %69 = sbr.rel (0) target = $region21
    $region20: #{tpu_custom_call.1} parent=1 // pred_region
      %s71 = ssub.s32 3072, 3072
      %72 = vsyncadd [#allocation10], %s71
      %s73 = sshll.u32 [#allocation11], 4
      %s74 = int_to_ptr.vmem [resolvable:$true] %s73
      %79 = dma.hbm_to_vmem [thread:$0]  %s4, 3072, %s74, [#allocation10], 192, 192, 12
    $region21: #{tpu_custom_call.1} parent=1 // pred_fallthru
      _
    // Predicated region
    $region22: #{tpu_custom_call.1} parent=1 // pred_check
      _
    $region23: #{tpu_custom_call.1} parent=1 // pred_check_branch
      %81 = sbr.rel (0) target = $region25
    $region24: #{tpu_custom_call.1} parent=1 // pred_region
      _
    $region25: #{tpu_custom_call.1} parent=1 // pred_fallthru
      _
    // Predicated region
    $region26: #{tpu_custom_call.1} parent=1 // pred_check
      _
    $region27: #{tpu_custom_call.1} parent=1 // pred_check_branch
      %83 = sbr.rel (0) target = $region29
    $region28: #{tpu_custom_call.1} parent=1 // pred_region
      %s85 = ssub.s32 1024, 1024
      %86 = vsyncadd [#allocation13], %s85
      %s87 = sshll.u32 [#allocation12], 4
      %s88 = int_to_ptr.vmem [resolvable:$true] %s87
      %93 = dma.hbm_to_vmem [thread:$0]  %s6, 1024, %s88, [#allocation13], 64, 64, 4
    $region29: #{tpu_custom_call.1} parent=1 // pred_fallthru
      _
    // Predicated region
    $region30: #{tpu_custom_call.1} parent=1 // pred_check
      _
    $region31: #{tpu_custom_call.1} parent=1 // pred_check_branch
      %95 = sbr.rel (0) target = $region33
    $region32: #{tpu_custom_call.1} parent=1 // pred_region
      %s97 = ssub.s32 1024, 1024
      %98 = vsyncadd [#allocation13], %s97
      %s99 = sshll.u32 [#allocation14], 4
      %s100 = int_to_ptr.vmem [resolvable:$true] %s99
      %105 = dma.hbm_to_vmem [thread:$0]  %s7, 1024, %s100, [#allocation13], 64, 64, 4
    $region33: #{tpu_custom_call.1} parent=1 // pred_fallthru
      _
    // Predicated region
    $region34: #{tpu_custom_call.1} parent=1 // pred_check
      _
    $region35: #{tpu_custom_call.1} parent=1 // pred_check_branch
      %107 = sbr.rel (0) target = $region37
    $region36: #{tpu_custom_call.1} parent=1 // pred_region
      %s109 = ssub.s32 1024, 1024
      %110 = vsyncadd [#allocation16], %s109
      %s111 = sshll.u32 [#allocation15], 4
      %s112 = int_to_ptr.vmem [resolvable:$true] %s111
      %117 = dma.hbm_to_vmem [thread:$0]  %s8, 1024, %s112, [#allocation16], 64, 64, 4
    $region37: #{tpu_custom_call.1} parent=1 // pred_fallthru
      _
    // Predicated region
    $region38: #{tpu_custom_call.1} parent=1 // pred_check
      _
    $region39: #{tpu_custom_call.1} parent=1 // pred_check_branch
      %119 = sbr.rel (0) target = $region41
    $region40: #{tpu_custom_call.1} parent=1 // pred_region
      _
    $region41: #{tpu_custom_call.1} parent=1 // pred_fallthru
      _
    // Predicated region
    $region42: #{tpu_custom_call.1} parent=1 // pred_check
      _
    $region43: #{tpu_custom_call.1} parent=1 // pred_check_branch
      %121 = sbr.rel (0) target = $region45
    $region44: #{tpu_custom_call.1} parent=1 // pred_region
      %122 = dma.done [#allocation4], 64
    $region45: #{tpu_custom_call.1} parent=1 // pred_fallthru
      _
    // Predicated region
    $region46: #{tpu_custom_call.1} parent=1 // pred_check
      _
    $region47: #{tpu_custom_call.1} parent=1 // pred_check_branch
      %124 = sbr.rel (0) target = $region49
    $region48: #{tpu_custom_call.1} parent=1 // pred_region
      %125 = dma.done [#allocation7], 512
    $region49: #{tpu_custom_call.1} parent=1 // pred_fallthru
      _
    // Predicated region
    $region50: #{tpu_custom_call.1} parent=1 // pred_check
      _
    $region51: #{tpu_custom_call.1} parent=1 // pred_check_branch
      %127 = sbr.rel (0) target = $region53
    $region52: #{tpu_custom_call.1} parent=1 // pred_region
      %128 = dma.done [#allocation7], 128
    $region53: #{tpu_custom_call.1} parent=1 // pred_fallthru
      _
    // Predicated region
    $region54: #{tpu_custom_call.1} parent=1 // pred_check
      _
    $region55: #{tpu_custom_call.1} parent=1 // pred_check_branch
      %130 = sbr.rel (0) target = $region57
    $region56: #{tpu_custom_call.1} parent=1 // pred_region
      %131 = dma.done [#allocation10], 3072
    $region57: #{tpu_custom_call.1} parent=1 // pred_fallthru
      _
    // Predicated region
    $region58: #{tpu_custom_call.1} parent=1 // pred_check
      _
    $region59: #{tpu_custom_call.1} parent=1 // pred_check_branch
      %133 = sbr.rel (0) target = $region61
    $region60: #{tpu_custom_call.1} parent=1 // pred_region
      %134 = dma.done [#allocation10], 3072
    $region61: #{tpu_custom_call.1} parent=1 // pred_fallthru
      _
    // Predicated region
    $region62: #{tpu_custom_call.1} parent=1 // pred_check
      _
    $region63: #{tpu_custom_call.1} parent=1 // pred_check_branch
      %136 = sbr.rel (0) target = $region65
    $region64: #{tpu_custom_call.1} parent=1 // pred_region
      %137 = dma.done [#allocation13], 1024
    $region65: #{tpu_custom_call.1} parent=1 // pred_fallthru
      _
    // Predicated region
    $region66: #{tpu_custom_call.1} parent=1 // pred_check
      _
    $region67: #{tpu_custom_call.1} parent=1 // pred_check_branch
      %139 = sbr.rel (0) target = $region69
    $region68: #{tpu_custom_call.1} parent=1 // pred_region
      %140 = dma.done [#allocation13], 1024
    $region69: #{tpu_custom_call.1} parent=1 // pred_fallthru
      _
    // Predicated region
    $region70: #{tpu_custom_call.1} parent=1 // pred_check
      _
    $region71: #{tpu_custom_call.1} parent=1 // pred_check_branch
      %142 = sbr.rel (0) target = $region73
    $region72: #{tpu_custom_call.1} parent=1 // pred_region
      %143 = dma.done [#allocation16], 1024
    $region73: #{tpu_custom_call.1} parent=1 // pred_fallthru
      _
    %p145 = scmp.eq.s32.totalorder 0, 0
    // Predicated region
    $region74: #{tpu_custom_call.1} parent=1 // pred_check
      %p146 = pneg %p145
    $region75: #{tpu_custom_call.1} parent=1 // pred_check_branch
      %148 = sbr.rel (%p146) target = $region77
    $region76: #{tpu_custom_call.1} parent=1 // pred_region
      %v149 = vld [vmem:[#allocation3] sm:$0xf]
      %v150 = vld [vmem:[#allocation8] sm:$0xff]
      %v151 = vld [vmem:[#allocation6] sm:$0xf]
      %v152 = vld [vmem:[#allocation6 + $0x4] sm:$0xf]
      %v153 = vld [vmem:[#allocation6 + $0x8] sm:$0xf]
      %v154 = vld [vmem:[#allocation6 + $0xc] sm:$0xf]
      %v155 = vld [vmem:[#allocation6 + $0x10] sm:$0xf]
      %v156 = vld [vmem:[#allocation6 + $0x14] sm:$0xf]
      %v157 = vld [vmem:[#allocation6 + $0x18] sm:$0xf]
      %v158 = vld [vmem:[#allocation6 + $0x1c] sm:$0xf]
      %v159 = vld [vmem:[#allocation9] sm:$0xff]
      %v160 = vld [vmem:[#allocation9 + $0x8] sm:$0xf]
      %v161 = vld [vmem:[#allocation9 + $0xc] sm:$0xff]
      %v162 = vld [vmem:[#allocation9 + $0x14] sm:$0xf]
      %v163 = vld [vmem:[#allocation9 + $0x18] sm:$0xff]
      %v164 = vld [vmem:[#allocation9 + $0x20] sm:$0xf]
      %v165 = vld [vmem:[#allocation9 + $0x24] sm:$0xff]
      %v166 = vld [vmem:[#allocation9 + $0x2c] sm:$0xf]
      %v167 = vld [vmem:[#allocation9 + $0x30] sm:$0xff]
      %v168 = vld [vmem:[#allocation9 + $0x38] sm:$0xf]
      %v169 = vld [vmem:[#allocation9 + $0x3c] sm:$0xff]
      %v170 = vld [vmem:[#allocation9 + $0x44] sm:$0xf]
      %v171 = vld [vmem:[#allocation9 + $0x48] sm:$0xff]
      %v172 = vld [vmem:[#allocation9 + $0x50] sm:$0xf]
      %v173 = vld [vmem:[#allocation9 + $0x54] sm:$0xff]
      %v174 = vld [vmem:[#allocation9 + $0x5c] sm:$0xf]
      %v175 = vld [vmem:[#allocation9 + $0x60] sm:$0xff]
      %v176 = vld [vmem:[#allocation9 + $0x68] sm:$0xf]
      %v177 = vld [vmem:[#allocation9 + $0x6c] sm:$0xff]
      %v178 = vld [vmem:[#allocation9 + $0x74] sm:$0xf]
      %v179 = vld [vmem:[#allocation9 + $0x78] sm:$0xff]
      %v180 = vld [vmem:[#allocation9 + $0x80] sm:$0xf]
      %v181 = vld [vmem:[#allocation9 + $0x84] sm:$0xff]
      %v182 = vld [vmem:[#allocation9 + $0x8c] sm:$0xf]
      %v183 = vld [vmem:[#allocation9 + $0x90] sm:$0xff]
      %v184 = vld [vmem:[#allocation9 + $0x98] sm:$0xf]
      %v185 = vld [vmem:[#allocation9 + $0x9c] sm:$0xff]
      %v186 = vld [vmem:[#allocation9 + $0xa4] sm:$0xf]
      %v187 = vld [vmem:[#allocation9 + $0xa8] sm:$0xff]
      %v188 = vld [vmem:[#allocation9 + $0xb0] sm:$0xf]
      %v189 = vld [vmem:[#allocation9 + $0xb4] sm:$0xff]
      %v190 = vld [vmem:[#allocation9 + $0xbc] sm:$0xf]
      %v223 = vunpack.c.l.b16 %v159
      %v224 = vunpack.c.h.b16 %v159
      %v225 = vunpack.c.l.b16 %v160
      %v226 = vunpack.c.l.b16 %v161
      %v227 = vunpack.c.h.b16 %v161
      %v228 = vunpack.c.l.b16 %v162
      %v229 = vunpack.c.l.b16 %v163
      %v230 = vunpack.c.h.b16 %v163
      %v231 = vunpack.c.l.b16 %v164
      %v232 = vunpack.c.l.b16 %v165
      %v233 = vunpack.c.h.b16 %v165
      %v234 = vunpack.c.l.b16 %v166
      %v235 = vunpack.c.l.b16 %v167
      %v236 = vunpack.c.h.b16 %v167
      %v237 = vunpack.c.l.b16 %v168
      %v238 = vunpack.c.l.b16 %v169
      %v239 = vunpack.c.h.b16 %v169
      %v240 = vunpack.c.l.b16 %v170
      %v241 = vunpack.c.l.b16 %v171
      %v242 = vunpack.c.h.b16 %v171
      %v243 = vunpack.c.l.b16 %v172
      %v244 = vunpack.c.l.b16 %v173
      %v245 = vunpack.c.h.b16 %v173
      %v246 = vunpack.c.l.b16 %v174
      %v247 = vunpack.c.l.b16 %v175
      %v248 = vunpack.c.h.b16 %v175
      %v249 = vunpack.c.l.b16 %v176
      %v250 = vunpack.c.l.b16 %v177
      %v251 = vunpack.c.h.b16 %v177
      %v252 = vunpack.c.l.b16 %v178
      %v253 = vunpack.c.l.b16 %v179
      %v254 = vunpack.c.h.b16 %v179
      %v255 = vunpack.c.l.b16 %v180
      %v256 = vunpack.c.l.b16 %v181
      %v257 = vunpack.c.h.b16 %v181
      %v258 = vunpack.c.l.b16 %v182
      %v259 = vunpack.c.l.b16 %v183
      %v260 = vunpack.c.h.b16 %v183
      %v261 = vunpack.c.l.b16 %v184
      %v262 = vunpack.c.l.b16 %v185
      %v263 = vunpack.c.h.b16 %v185
      %v264 = vunpack.c.l.b16 %v186
      %v265 = vunpack.c.l.b16 %v187
      %v266 = vunpack.c.h.b16 %v187
      %v267 = vunpack.c.l.b16 %v188
      %v268 = vunpack.c.l.b16 %v189
      %v269 = vunpack.c.h.b16 %v189
      %v270 = vunpack.c.l.b16 %v190
      %v271 = vpack.c.b16 %v226, %v223
      %v272 = vpack.c.b16 %v227, %v224
      %v273 = vpack.c.b16 %v228, %v225
      %v274 = vpack.c.b16 %v232, %v229
      %v275 = vpack.c.b16 %v233, %v230
      %v276 = vpack.c.b16 %v234, %v231
      %v277 = vpack.c.b16 %v238, %v235
      %v278 = vpack.c.b16 %v239, %v236
      %v279 = vpack.c.b16 %v240, %v237
      %v280 = vpack.c.b16 %v244, %v241
      %v281 = vpack.c.b16 %v245, %v242
      %v282 = vpack.c.b16 %v246, %v243
      %v283 = vpack.c.b16 %v250, %v247
      %v284 = vpack.c.b16 %v251, %v248
      %v285 = vpack.c.b16 %v252, %v249
      %v286 = vpack.c.b16 %v256, %v253
      %v287 = vpack.c.b16 %v257, %v254
      %v288 = vpack.c.b16 %v258, %v255
      %v289 = vpack.c.b16 %v262, %v259
      %v290 = vpack.c.b16 %v263, %v260
      %v291 = vpack.c.b16 %v264, %v261
      %v292 = vpack.c.b16 %v268, %v265
      %v293 = vpack.c.b16 %v269, %v266
      %v294 = vpack.c.b16 %v270, %v267
      %319 = vmatprep.subr.bf16.mxu0 %v272
      %320 = vmatpush1.bf16.msra.mxu0 %v271
      %321 = vmatprep.subr.bf16.mxu0 %v275
      %322 = vmatpush1.bf16.msra.mxu0 %v274
      %323 = vmatprep.subr.bf16.mxu0 %v278
      %324 = vmatpush1.bf16.msra.mxu0 %v277
      %325 = vmatprep.subr.bf16.mxu0 %v281
      %326 = vmatpush1.bf16.msra.mxu0 %v280
      %327 = vmatprep.subr.bf16.mxu0 %v284
      %328 = vmatpush1.bf16.msra.mxu0 %v283
      %329 = vmatprep.subr.bf16.mxu0 %v287
      %330 = vmatpush1.bf16.msra.mxu0 %v286
      %331 = vmatprep.subr.bf16.mxu0 %v290
      %332 = vmatpush1.bf16.msra.mxu0 %v289
      %333 = vmatprep.subr.bf16.mxu0 %v293
      %334 = vmatpush1.bf16.msra.mxu0 %v292
      %335 = vmatprep.subr.bf16.mxu0 0
      %336 = vmatpush1.bf16.msra.mxu0 0
      %337 = vmatprep.subr.bf16.mxu0 0
      %338 = vmatpush1.bf16.msra.mxu0 0
      %339 = vmatprep.subr.bf16.mxu0 0
      %340 = vmatpush1.bf16.msra.mxu0 0
      %341 = vmatprep.subr.bf16.mxu0 0
      %342 = vmatpush1.bf16.msra.mxu0 0
      %343 = vmatprep.subr.bf16.mxu0 0
      %344 = vmatpush1.bf16.msra.mxu0 0
      %345 = vmatprep.subr.bf16.mxu0 0
      %346 = vmatpush1.bf16.msra.mxu0 0
      %347 = vmatprep.subr.bf16.mxu0 0
      %348 = vmatpush1.bf16.msra.mxu0 0
      %349 = vmatprep.subr.bf16.mxu0 0
      %350 = vmatpush1.bf16.msra.mxu0 0
      %351 = vmatprep.mubr.bf16.mxu0 0
      %352 = vmatmul.mubr.bf16.gmra.mrb[0].mxu0 %v149
      %v353 = vpop.f32.mrb[0].mxu0
      %v354 = vadd.f32 0.0, %v353
      %v355 = vpop.f32.mrb[0].mxu0
      %v356 = vadd.f32 0.0, %v355
      %v357 = vpop.f32.mrb[0].mxu0
      %v358 = vpop.f32.mrb[0].mxu0
      %359 = vdwg.mxu0
      %360 = vmatprep.subr.bf16.mxu0 0
      %361 = vmatpush1.bf16.msra.mxu0 %v273
      %362 = vmatprep.subr.bf16.mxu0 0
      %363 = vmatpush1.bf16.msra.mxu0 %v276
      %364 = vmatprep.subr.bf16.mxu0 0
      %365 = vmatpush1.bf16.msra.mxu0 %v279
      %366 = vmatprep.subr.bf16.mxu0 0
      %367 = vmatpush1.bf16.msra.mxu0 %v282
      %368 = vmatprep.subr.bf16.mxu0 0
      %369 = vmatpush1.bf16.msra.mxu0 %v285
      %370 = vmatprep.subr.bf16.mxu0 0
      %371 = vmatpush1.bf16.msra.mxu0 %v288
      %372 = vmatprep.subr.bf16.mxu0 0
      %373 = vmatpush1.bf16.msra.mxu0 %v291
      %374 = vmatprep.subr.bf16.mxu0 0
      %375 = vmatpush1.bf16.msra.mxu0 %v294
      %376 = vmatprep.subr.bf16.mxu0 0
      %377 = vmatpush1.bf16.msra.mxu0 0
      %378 = vmatprep.subr.bf16.mxu0 0
      %379 = vmatpush1.bf16.msra.mxu0 0
      %380 = vmatprep.subr.bf16.mxu0 0
      %381 = vmatpush1.bf16.msra.mxu0 0
      %382 = vmatprep.subr.bf16.mxu0 0
      %383 = vmatpush1.bf16.msra.mxu0 0
      %384 = vmatprep.subr.bf16.mxu0 0
      %385 = vmatpush1.bf16.msra.mxu0 0
      %386 = vmatprep.subr.bf16.mxu0 0
      %387 = vmatpush1.bf16.msra.mxu0 0
      %388 = vmatprep.subr.bf16.mxu0 0
      %389 = vmatpush1.bf16.msra.mxu0 0
      %390 = vmatprep.subr.bf16.mxu0 0
      %391 = vmatpush1.bf16.msra.mxu0 0
      %392 = vmatprep.mubr.bf16.mxu0 0
      %393 = vmatmul.mubr.bf16.gmra.mrb[0].mxu0 %v149
      %v394 = vpop.f32.mrb[0].mxu0
      %v395 = vadd.f32 0.0, %v394
      %v396 = vpop.f32.mrb[0].mxu0
      %v397 = vpop.f32.mrb[0].mxu0
      %v398 = vpop.f32.mrb[0].mxu0
      %399 = vdwg.mxu0
      %v400 = vpack.c.bf16 %v150, %v150
      %v401 = vld [vmem:[#allocation11] sm:$0xff]
      %v402 = vld [vmem:[#allocation11 + $0x8] sm:$0xf]
      %v403 = vld [vmem:[#allocation11 + $0xc] sm:$0xff]
      %v404 = vld [vmem:[#allocation11 + $0x14] sm:$0xf]
      %v405 = vld [vmem:[#allocation11 + $0x18] sm:$0xff]
      %v406 = vld [vmem:[#allocation11 + $0x20] sm:$0xf]
      %v407 = vld [vmem:[#allocation11 + $0x24] sm:$0xff]
      %v408 = vld [vmem:[#allocation11 + $0x2c] sm:$0xf]
      %v409 = vld [vmem:[#allocation11 + $0x30] sm:$0xff]
      %v410 = vld [vmem:[#allocation11 + $0x38] sm:$0xf]
      %v411 = vld [vmem:[#allocation11 + $0x3c] sm:$0xff]
      %v412 = vld [vmem:[#allocation11 + $0x44] sm:$0xf]
      %v413 = vld [vmem:[#allocation11 + $0x48] sm:$0xff]
      %v414 = vld [vmem:[#allocation11 + $0x50] sm:$0xf]
      %v415 = vld [vmem:[#allocation11 + $0x54] sm:$0xff]
      %v416 = vld [vmem:[#allocation11 + $0x5c] sm:$0xf]
      %v417 = vld [vmem:[#allocation11 + $0x60] sm:$0xff]
      %v418 = vld [vmem:[#allocation11 + $0x68] sm:$0xf]
      %v419 = vld [vmem:[#allocation11 + $0x6c] sm:$0xff]
      %v420 = vld [vmem:[#allocation11 + $0x74] sm:$0xf]
      %v421 = vld [vmem:[#allocation11 + $0x78] sm:$0xff]
      %v422 = vld [vmem:[#allocation11 + $0x80] sm:$0xf]
      %v423 = vld [vmem:[#allocation11 + $0x84] sm:$0xff]
      %v424 = vld [vmem:[#allocation11 + $0x8c] sm:$0xf]
      %v425 = vld [vmem:[#allocation11 + $0x90] sm:$0xff]
      %v426 = vld [vmem:[#allocation11 + $0x98] sm:$0xf]
      %v427 = vld [vmem:[#allocation11 + $0x9c] sm:$0xff]
      %v428 = vld [vmem:[#allocation11 + $0xa4] sm:$0xf]
      %v429 = vld [vmem:[#allocation11 + $0xa8] sm:$0xff]
      %v430 = vld [vmem:[#allocation11 + $0xb0] sm:$0xf]
      %v431 = vld [vmem:[#allocation11 + $0xb4] sm:$0xff]
      %v432 = vld [vmem:[#allocation11 + $0xbc] sm:$0xf]
      %v465 = vunpack.c.l.b16 %v401
      %v466 = vunpack.c.h.b16 %v401
      %v467 = vunpack.c.l.b16 %v402
      %v468 = vunpack.c.l.b16 %v403
      %v469 = vunpack.c.h.b16 %v403
      %v470 = vunpack.c.l.b16 %v404
      %v471 = vunpack.c.l.b16 %v405
      %v472 = vunpack.c.h.b16 %v405
      %v473 = vunpack.c.l.b16 %v406
      %v474 = vunpack.c.l.b16 %v407
      %v475 = vunpack.c.h.b16 %v407
      %v476 = vunpack.c.l.b16 %v408
      %v477 = vunpack.c.l.b16 %v409
      %v478 = vunpack.c.h.b16 %v409
      %v479 = vunpack.c.l.b16 %v410
      %v480 = vunpack.c.l.b16 %v411
      %v481 = vunpack.c.h.b16 %v411
      %v482 = vunpack.c.l.b16 %v412
      %v483 = vunpack.c.l.b16 %v413
      %v484 = vunpack.c.h.b16 %v413
      %v485 = vunpack.c.l.b16 %v414
      %v486 = vunpack.c.l.b16 %v415
      %v487 = vunpack.c.h.b16 %v415
      %v488 = vunpack.c.l.b16 %v416
      %v489 = vunpack.c.l.b16 %v417
      %v490 = vunpack.c.h.b16 %v417
      %v491 = vunpack.c.l.b16 %v418
      %v492 = vunpack.c.l.b16 %v419
      %v493 = vunpack.c.h.b16 %v419
      %v494 = vunpack.c.l.b16 %v420
      %v495 = vunpack.c.l.b16 %v421
      %v496 = vunpack.c.h.b16 %v421
      %v497 = vunpack.c.l.b16 %v422
      %v498 = vunpack.c.l.b16 %v423
      %v499 = vunpack.c.h.b16 %v423
      %v500 = vunpack.c.l.b16 %v424
      %v501 = vunpack.c.l.b16 %v425
      %v502 = vunpack.c.h.b16 %v425
      %v503 = vunpack.c.l.b16 %v426
      %v504 = vunpack.c.l.b16 %v427
      %v505 = vunpack.c.h.b16 %v427
      %v506 = vunpack.c.l.b16 %v428
      %v507 = vunpack.c.l.b16 %v429
      %v508 = vunpack.c.h.b16 %v429
      %v509 = vunpack.c.l.b16 %v430
      %v510 = vunpack.c.l.b16 %v431
      %v511 = vunpack.c.h.b16 %v431
      %v512 = vunpack.c.l.b16 %v432
      %v513 = vpack.c.b16 %v468, %v465
      %v514 = vpack.c.b16 %v469, %v466
      %v515 = vpack.c.b16 %v470, %v467
      %v516 = vpack.c.b16 %v474, %v471
      %v517 = vpack.c.b16 %v475, %v472
      %v518 = vpack.c.b16 %v476, %v473
      %v519 = vpack.c.b16 %v480, %v477
      %v520 = vpack.c.b16 %v481, %v478
      %v521 = vpack.c.b16 %v482, %v479
      %v522 = vpack.c.b16 %v486, %v483
      %v523 = vpack.c.b16 %v487, %v484
      %v524 = vpack.c.b16 %v488, %v485
      %v525 = vpack.c.b16 %v492, %v489
      %v526 = vpack.c.b16 %v493, %v490
      %v527 = vpack.c.b16 %v494, %v491
      %v528 = vpack.c.b16 %v498, %v495
      %v529 = vpack.c.b16 %v499, %v496
      %v530 = vpack.c.b16 %v500, %v497
      %v531 = vpack.c.b16 %v504, %v501
      %v532 = vpack.c.b16 %v505, %v502
      %v533 = vpack.c.b16 %v506, %v503
      %v534 = vpack.c.b16 %v510, %v507
      %v535 = vpack.c.b16 %v511, %v508
      %v536 = vpack.c.b16 %v512, %v509
      %561 = vmatprep.subr.bf16.mxu0 %v514
      %562 = vmatpush1.bf16.msra.mxu0 %v513
      %563 = vmatprep.subr.bf16.mxu0 %v517
      %564 = vmatpush1.bf16.msra.mxu0 %v516
      %565 = vmatprep.subr.bf16.mxu0 %v520
      %566 = vmatpush1.bf16.msra.mxu0 %v519
      %567 = vmatprep.subr.bf16.mxu0 %v523
      %568 = vmatpush1.bf16.msra.mxu0 %v522
      %569 = vmatprep.subr.bf16.mxu0 %v526
      %570 = vmatpush1.bf16.msra.mxu0 %v525
      %571 = vmatprep.subr.bf16.mxu0 %v529
      %572 = vmatpush1.bf16.msra.mxu0 %v528
      %573 = vmatprep.subr.bf16.mxu0 %v532
      %574 = vmatpush1.bf16.msra.mxu0 %v531
      %575 = vmatprep.subr.bf16.mxu0 %v535
      %576 = vmatpush1.bf16.msra.mxu0 %v534
      %577 = vmatprep.subr.bf16.mxu0 0
      %578 = vmatpush1.bf16.msra.mxu0 0
      %579 = vmatprep.subr.bf16.mxu0 0
      %580 = vmatpush1.bf16.msra.mxu0 0
      %581 = vmatprep.subr.bf16.mxu0 0
      %582 = vmatpush1.bf16.msra.mxu0 0
      %583 = vmatprep.subr.bf16.mxu0 0
      %584 = vmatpush1.bf16.msra.mxu0 0
      %585 = vmatprep.subr.bf16.mxu0 0
      %586 = vmatpush1.bf16.msra.mxu0 0
      %587 = vmatprep.subr.bf16.mxu0 0
      %588 = vmatpush1.bf16.msra.mxu0 0
      %589 = vmatprep.subr.bf16.mxu0 0
      %590 = vmatpush1.bf16.msra.mxu0 0
      %591 = vmatprep.subr.bf16.mxu0 0
      %592 = vmatpush1.bf16.msra.mxu0 0
      %593 = vmatprep.mubr.bf16.mxu0 0
      %594 = vmatmul.mubr.bf16.gmra.mrb[0].mxu0 %v400
      %v595 = vpop.f32.mrb[0].mxu0
      %v596 = vadd.f32 0.0, %v595
      %v597 = vpop.f32.mrb[0].mxu0
      %v598 = vadd.f32 0.0, %v597
      %v599 = vpop.f32.mrb[0].mxu0
      %v600 = vpop.f32.mrb[0].mxu0
      %601 = vdwg.mxu0
      %602 = vmatprep.subr.bf16.mxu0 0
      %603 = vmatpush1.bf16.msra.mxu0 %v515
      %604 = vmatprep.subr.bf16.mxu0 0
      %605 = vmatpush1.bf16.msra.mxu0 %v518
      %606 = vmatprep.subr.bf16.mxu0 0
      %607 = vmatpush1.bf16.msra.mxu0 %v521
      %608 = vmatprep.subr.bf16.mxu0 0
      %609 = vmatpush1.bf16.msra.mxu0 %v524
      %610 = vmatprep.subr.bf16.mxu0 0
      %611 = vmatpush1.bf16.msra.mxu0 %v527
      %612 = vmatprep.subr.bf16.mxu0 0
      %613 = vmatpush1.bf16.msra.mxu0 %v530
      %614 = vmatprep.subr.bf16.mxu0 0
      %615 = vmatpush1.bf16.msra.mxu0 %v533
      %616 = vmatprep.subr.bf16.mxu0 0
      %617 = vmatpush1.bf16.msra.mxu0 %v536
      %618 = vmatprep.subr.bf16.mxu0 0
      %619 = vmatpush1.bf16.msra.mxu0 0
      %620 = vmatprep.subr.bf16.mxu0 0
      %621 = vmatpush1.bf16.msra.mxu0 0
      %622 = vmatprep.subr.bf16.mxu0 0
      %623 = vmatpush1.bf16.msra.mxu0 0
      %624 = vmatprep.subr.bf16.mxu0 0
      %625 = vmatpush1.bf16.msra.mxu0 0
      %626 = vmatprep.subr.bf16.mxu0 0
      %627 = vmatpush1.bf16.msra.mxu0 0
      %628 = vmatprep.subr.bf16.mxu0 0
      %629 = vmatpush1.bf16.msra.mxu0 0
      %630 = vmatprep.subr.bf16.mxu0 0
      %631 = vmatpush1.bf16.msra.mxu0 0
      %632 = vmatprep.subr.bf16.mxu0 0
      %633 = vmatpush1.bf16.msra.mxu0 0
      %634 = vmatprep.mubr.bf16.mxu0 0
      %635 = vmatmul.mubr.bf16.gmra.mrb[0].mxu0 %v400
      %v636 = vpop.f32.mrb[0].mxu0
      %v637 = vadd.f32 0.0, %v636
      %v638 = vpop.f32.mrb[0].mxu0
      %v639 = vpop.f32.mrb[0].mxu0
      %v640 = vpop.f32.mrb[0].mxu0
      %641 = vdwg.mxu0
      %v642 = vld [vmem:[%s5] sm:$0xff]
      %v643 = vadd.f32 %v354, %v596
      %v644 = vlaneseq
      %v645 = vshrl.u32 %v644, 7
      %v646 = vsub.s32 0, %v645
      %v647 = vrot.slane %v642, %v646
      %v648 = vadd.f32 %v643, %v647
      %v649 = vxor.u32 %v648, 2147483648
      %v650 = vmul.f32 %v649, 1.442695
      %v651 = vpow.pop %v650
      %v652 = vadd.f32 %v651, 1.0
      %v653 = vrcp.pop %v652
      %v654 = vmul.f32 1.0, %v653
      %v655 = vadd.f32 %v356, %v598
      %v656 = vlaneseq
      %v657 = vshrl.u32 %v656, 7
      %v658 = vsub.s32 1, %v657
      %v659 = vrot.slane %v642, %v658
      %v660 = vadd.f32 %v655, %v659
      %v661 = vxor.u32 %v660, 2147483648
      %v662 = vmul.f32 %v661, 1.442695
      %v663 = vpow.pop %v662
      %v664 = vadd.f32 %v663, 1.0
      %v665 = vrcp.pop %v664
      %v666 = vmul.f32 1.0, %v665
      %v667 = vlaneseq
      %v668 = vshrl.u32 %v667, 7
      %v669 = vsub.s32 2, %v668
      %v670 = vrot.slane %v642, %v669
      %v671 = vadd.f32 %v395, %v670
      %v672 = vlaneseq
      %v673 = vshrl.u32 %v672, 7
      %v674 = vsub.s32 3, %v673
      %v675 = vrot.slane %v642, %v674
      %v676 = vadd.f32 %v637, %v675
      %v677 = vmul.f32 %v654, %v676
      %v678 = vadd.f32 %v671, %v677
      %v679 = vtanh.pop %v678
      %v680 = vsub.f32 1.0, %v666
      %v681 = vmul.f32 %v680, %v679
      %v682 = vmul.f32 %v666, %v150
      %v683 = vadd.f32 %v681, %v682
      %v684 = vunpack.c.l.bf16 %v151
      %v685 = vunpack.c.l.bf16 %v152
      %v686 = vunpack.c.l.bf16 %v153
      %v687 = vunpack.c.l.bf16 %v154
      %v688 = vunpack.c.l.bf16 %v155
      %v689 = vunpack.c.l.bf16 %v156
      %v690 = vunpack.c.l.bf16 %v157
      %v691 = vunpack.c.l.bf16 %v158
      %v693 = vcombine.high %v683, %v683
      %v695 = vunpack.c.l.s4 1966171168
      %v696 = vunpack.c.0.s8 %v695
      %v697 = vlaneseq
      %v698 = vshrl.u32 %v697, 7
      %v699 = vsub.s32 %v696, %v698
      %v700 = vrot.slane %v683, %v699
      %v702 = vunpack.c.l.s4 1966171168
      %v703 = vunpack.c.0.s8 %v702
      %v704 = vlaneseq
      %v705 = vshrl.u32 %v704, 7
      %v706 = vsub.s32 %v703, %v705
      %v707 = vrot.slane %v693, %v706
      %v708 = vcombine.high %v700, %v700
      %v709 = vcombine.high %v707, %v707
      %v711 = vunpack.c.l.s4 1966171168
      %v712 = vunpack.c.0.s8 %v711
      %v713 = vlaneseq
      %v714 = vshrl.u32 %v713, 7
      %v715 = vsub.s32 %v712, %v714
      %v716 = vrot.slane %v700, %v715
      %v718 = vunpack.c.l.s4 1966171168
      %v719 = vunpack.c.0.s8 %v718
      %v720 = vlaneseq
      %v721 = vshrl.u32 %v720, 7
      %v722 = vsub.s32 %v719, %v721
      %v723 = vrot.slane %v707, %v722
      %v725 = vunpack.c.l.s4 1966171168
      %v726 = vunpack.c.0.s8 %v725
      %v727 = vlaneseq
      %v728 = vshrl.u32 %v727, 7
      %v729 = vsub.s32 %v726, %v728
      %v730 = vrot.slane %v708, %v729
      %v732 = vunpack.c.l.s4 1966171168
      %v733 = vunpack.c.0.s8 %v732
      %v734 = vlaneseq
      %v735 = vshrl.u32 %v734, 7
      %v736 = vsub.s32 %v733, %v735
      %v737 = vrot.slane %v709, %v736
      %v738 = vcombine.high %v716, %v716
      %v739 = vcombine.high %v723, %v723
      %v740 = vcombine.high %v730, %v730
      %v741 = vcombine.high %v737, %v737
      %v742 = vlaneseq
      %v743 = vshrl.u32 %v742, 7
      %v744 = vsub.s32 0, %v743
      %v745 = vrot.slane %v716, %v744
      %v746 = vlaneseq
      %v747 = vshrl.u32 %v746, 7
      %v748 = vsub.s32 0, %v747
      %v749 = vrot.slane %v730, %v748
      %v750 = vlaneseq
      %v751 = vshrl.u32 %v750, 7
      %v752 = vsub.s32 0, %v751
      %v753 = vrot.slane %v738, %v752
      %v754 = vlaneseq
      %v755 = vshrl.u32 %v754, 7
      %v756 = vsub.s32 0, %v755
      %v757 = vrot.slane %v740, %v756
      %v758 = vlaneseq
      %v759 = vshrl.u32 %v758, 7
      %v760 = vsub.s32 0, %v759
      %v761 = vrot.slane %v723, %v760
      %v762 = vlaneseq
      %v763 = vshrl.u32 %v762, 7
      %v764 = vsub.s32 0, %v763
      %v765 = vrot.slane %v737, %v764
      %v766 = vlaneseq
      %v767 = vshrl.u32 %v766, 7
      %v768 = vsub.s32 0, %v767
      %v769 = vrot.slane %v739, %v768
      %v770 = vlaneseq
      %v771 = vshrl.u32 %v770, 7
      %v772 = vsub.s32 0, %v771
      %v773 = vrot.slane %v741, %v772
      %v782 = vmul.f32 %v745, %v684
      %v783 = vmul.f32 %v749, %v685
      %v784 = vmul.f32 %v753, %v686
      %v785 = vmul.f32 %v757, %v687
      %v786 = vmul.f32 %v761, %v688
      %v787 = vmul.f32 %v765, %v689
      %v788 = vmul.f32 %v769, %v690
      %v789 = vmul.f32 %v773, %v691
      %790 = vadd.xlane.f32.xlu0 %v782
      %v791 = vpop.xlane.xlu0 %790
      %792 = vadd.xlane.f32.xlu0 %v783
      %v793 = vpop.xlane.xlu0 %792
      %794 = vadd.xlane.f32.xlu0 %v784
      %v795 = vpop.xlane.xlu0 %794
      %796 = vadd.xlane.f32.xlu0 %v785
      %v797 = vpop.xlane.xlu0 %796
      %798 = vadd.xlane.f32.xlu0 %v786
      %v799 = vpop.xlane.xlu0 %798
      %800 = vadd.xlane.f32.xlu0 %v787
      %v801 = vpop.xlane.xlu0 %800
      %802 = vadd.xlane.f32.xlu0 %v788
      %v803 = vpop.xlane.xlu0 %802
      %804 = vadd.xlane.f32.xlu0 %v789
      %v805 = vpop.xlane.xlu0 %804
      %v814 = vlaneseq
      %v815 = vand.u32 %v814, 127
      %v816 = vlaneseq
      %v817 = vshrl.u32 %v816, 7
      %v818 = vsub.s32 %v815, %v817
      %v819 = vrot.slane %v791, %v818
      %v820 = vlaneseq
      %v821 = vshrl.u32 %v820, 7
      %v822 = vsub.s32 %v815, %v821
      %v823 = vrot.slane %v793, %v822
      %v824 = vlaneseq
      %v825 = vshrl.u32 %v824, 7
      %v826 = vsub.s32 %v815, %v825
      %v827 = vrot.slane %v795, %v826
      %v828 = vlaneseq
      %v829 = vshrl.u32 %v828, 7
      %v830 = vsub.s32 %v815, %v829
      %v831 = vrot.slane %v797, %v830
      %v832 = vlaneseq
      %v833 = vshrl.u32 %v832, 7
      %v834 = vsub.s32 %v815, %v833
      %v835 = vrot.slane %v799, %v834
      %v836 = vlaneseq
      %v837 = vshrl.u32 %v836, 7
      %v838 = vsub.s32 %v815, %v837
      %v839 = vrot.slane %v801, %v838
      %v840 = vlaneseq
      %v841 = vshrl.u32 %v840, 7
      %v842 = vsub.s32 %v815, %v841
      %v843 = vrot.slane %v803, %v842
      %v844 = vlaneseq
      %v845 = vshrl.u32 %v844, 7
      %v846 = vsub.s32 %v815, %v845
      %v847 = vrot.slane %v805, %v846
      %vm848 = vcmask 1041409
      %v849 = vsel %vm848, %v823, %v819
      %vm850 = vcmask 1042434
      %v851 = vsel %vm850, %v827, %v849
      %vm852 = vcmask 1043459
      %v853 = vsel %vm852, %v831, %v851
      %vm854 = vcmask 1044484
      %v855 = vsel %vm854, %v835, %v853
      %vm856 = vcmask 1045509
      %v857 = vsel %vm856, %v839, %v855
      %vm858 = vcmask 1046534
      %v859 = vsel %vm858, %v843, %v857
      %vm860 = vcmask 1047559
      %v861 = vsel %vm860, %v847, %v859
      %vm863 = vcmask 64512
      %v864 = vsel %vm863, %v861, -inf
      %865 = vmax.xlane.f32.xlu0 %v864
      %v866 = vpop.xlane.xlu0 %865
      %v868 = vlaneseq
      %v869 = vshrl.u32 %v868, 7
      %v870 = vsub.s32 0, %v869
      %v871 = vrot.slane %v866, %v870
      %v872 = vlaneseq
      %v873 = vshrl.u32 %v872, 7
      %v874 = vsub.s32 1, %v873
      %v875 = vrot.slane %v866, %v874
      %v876 = vlaneseq
      %v877 = vshrl.u32 %v876, 7
      %v878 = vsub.s32 2, %v877
      %v879 = vrot.slane %v866, %v878
      %v880 = vlaneseq
      %v881 = vshrl.u32 %v880, 7
      %v882 = vsub.s32 3, %v881
      %v883 = vrot.slane %v866, %v882
      %v884 = vlaneseq
      %v885 = vshrl.u32 %v884, 7
      %v886 = vsub.s32 4, %v885
      %v887 = vrot.slane %v866, %v886
      %v888 = vlaneseq
      %v889 = vshrl.u32 %v888, 7
      %v890 = vsub.s32 5, %v889
      %v891 = vrot.slane %v866, %v890
      %v892 = vlaneseq
      %v893 = vshrl.u32 %v892, 7
      %v894 = vsub.s32 6, %v893
      %v895 = vrot.slane %v866, %v894
      %v896 = vlaneseq
      %v897 = vshrl.u32 %v896, 7
      %v898 = vsub.s32 7, %v897
      %v899 = vrot.slane %v866, %v898
      %v908 = vsub.f32 %v791, %v871
      %v909 = vsub.f32 %v793, %v875
      %v910 = vsub.f32 %v795, %v879
      %v911 = vsub.f32 %v797, %v883
      %v912 = vsub.f32 %v799, %v887
      %v913 = vsub.f32 %v801, %v891
      %v914 = vsub.f32 %v803, %v895
      %v915 = vsub.f32 %v805, %v899
      %v916 = vmul.f32 %v908, 1.442695
      %v917 = vpow.pop %v916
      %v918 = vmul.f32 %v909, 1.442695
      %v919 = vpow.pop %v918
      %v920 = vmul.f32 %v910, 1.442695
      %v921 = vpow.pop %v920
      %v922 = vmul.f32 %v911, 1.442695
      %v923 = vpow.pop %v922
      %v924 = vmul.f32 %v912, 1.442695
      %v925 = vpow.pop %v924
      %v926 = vmul.f32 %v913, 1.442695
      %v927 = vpow.pop %v926
      %v928 = vmul.f32 %v914, 1.442695
      %v929 = vpow.pop %v928
      %v930 = vmul.f32 %v915, 1.442695
      %v931 = vpow.pop %v930
      %940 = vset.pattern.permute.xlu0 0
      %941 = vperm.xlu0 %940, %v917
      %v942 = vpop.permute.xlu0 %941
      %943 = vset.pattern.permute.xlu0 0
      %944 = vperm.xlu0 %943, %v919
      %v945 = vpop.permute.xlu0 %944
      %946 = vset.pattern.permute.xlu0 0
      %947 = vperm.xlu0 %946, %v921
      %v948 = vpop.permute.xlu0 %947
      %949 = vset.pattern.permute.xlu0 0
      %950 = vperm.xlu0 %949, %v923
      %v951 = vpop.permute.xlu0 %950
      %952 = vset.pattern.permute.xlu0 0
      %953 = vperm.xlu0 %952, %v925
      %v954 = vpop.permute.xlu0 %953
      %955 = vset.pattern.permute.xlu0 0
      %956 = vperm.xlu0 %955, %v927
      %v957 = vpop.permute.xlu0 %956
      %958 = vset.pattern.permute.xlu0 0
      %959 = vperm.xlu0 %958, %v929
      %v960 = vpop.permute.xlu0 %959
      %961 = vset.pattern.permute.xlu0 0
      %962 = vperm.xlu0 %961, %v931
      %v963 = vpop.permute.xlu0 %962
      %v964 = vlaneseq
      %v965 = vshrl.u32 %v964, 7
      %v966 = vsub.s32 %v815, %v965
      %v967 = vrot.slane %v942, %v966
      %v968 = vlaneseq
      %v969 = vshrl.u32 %v968, 7
      %v970 = vsub.s32 %v815, %v969
      %v971 = vrot.slane %v945, %v970
      %v972 = vlaneseq
      %v973 = vshrl.u32 %v972, 7
      %v974 = vsub.s32 %v815, %v973
      %v975 = vrot.slane %v948, %v974
      %v976 = vlaneseq
      %v977 = vshrl.u32 %v976, 7
      %v978 = vsub.s32 %v815, %v977
      %v979 = vrot.slane %v951, %v978
      %v980 = vlaneseq
      %v981 = vshrl.u32 %v980, 7
      %v982 = vsub.s32 %v815, %v981
      %v983 = vrot.slane %v954, %v982
      %v984 = vlaneseq
      %v985 = vshrl.u32 %v984, 7
      %v986 = vsub.s32 %v815, %v985
      %v987 = vrot.slane %v957, %v986
      %v988 = vlaneseq
      %v989 = vshrl.u32 %v988, 7
      %v990 = vsub.s32 %v815, %v989
      %v991 = vrot.slane %v960, %v990
      %v992 = vlaneseq
      %v993 = vshrl.u32 %v992, 7
      %v994 = vsub.s32 %v815, %v993
      %v995 = vrot.slane %v963, %v994
      %v996 = vsel %vm848, %v971, %v967
      %v997 = vsel %vm850, %v975, %v996
      %v998 = vsel %vm852, %v979, %v997
      %v999 = vsel %vm854, %v983, %v998
      %v1000 = vsel %vm856, %v987, %v999
      %v1001 = vsel %vm858, %v991, %v1000
      %v1002 = vsel %vm860, %v995, %v1001
      %v1004 = vsel %vm863, %v1002, 0.0
      %1005 = vadd.xlane.f32.xlu0 %v1004
      %v1006 = vpop.xlane.xlu0 %1005
      %v1007 = vrcp.pop %v1006
      %v1008 = vmul.f32 %v1006, %v1007
      %v1009 = vsub.f32 2.0, %v1008
      %v1010 = vmul.f32 %v1007, %v1009
      %v1012 = vlaneseq
      %v1013 = vshrl.u32 %v1012, 7
      %v1014 = vsub.s32 0, %v1013
      %v1015 = vrot.slane %v1010, %v1014
      %v1016 = vlaneseq
      %v1017 = vshrl.u32 %v1016, 7
      %v1018 = vsub.s32 1, %v1017
      %v1019 = vrot.slane %v1010, %v1018
      %v1020 = vlaneseq
      %v1021 = vshrl.u32 %v1020, 7
      %v1022 = vsub.s32 2, %v1021
      %v1023 = vrot.slane %v1010, %v1022
      %v1024 = vlaneseq
      %v1025 = vshrl.u32 %v1024, 7
      %v1026 = vsub.s32 3, %v1025
      %v1027 = vrot.slane %v1010, %v1026
      %v1028 = vlaneseq
      %v1029 = vshrl.u32 %v1028, 7
      %v1030 = vsub.s32 4, %v1029
      %v1031 = vrot.slane %v1010, %v1030
      %v1032 = vlaneseq
      %v1033 = vshrl.u32 %v1032, 7
      %v1034 = vsub.s32 5, %v1033
      %v1035 = vrot.slane %v1010, %v1034
      %v1036 = vlaneseq
      %v1037 = vshrl.u32 %v1036, 7
      %v1038 = vsub.s32 6, %v1037
      %v1039 = vrot.slane %v1010, %v1038
      %v1040 = vlaneseq
      %v1041 = vshrl.u32 %v1040, 7
      %v1042 = vsub.s32 7, %v1041
      %v1043 = vrot.slane %v1010, %v1042
      %v1052 = vmul.f32 %v917, %v1015
      %v1053 = vmul.f32 %v919, %v1019
      %v1054 = vmul.f32 %v921, %v1023
      %v1055 = vmul.f32 %v923, %v1027
      %v1056 = vmul.f32 %v925, %v1031
      %v1057 = vmul.f32 %v927, %v1035
      %v1058 = vmul.f32 %v929, %v1039
      %v1059 = vmul.f32 %v931, %v1043
      %v1060 = vpack.c.bf16 %v1052, %v1052
      %v1061 = vpack.c.bf16 %v1053, %v1053
      %v1062 = vpack.c.bf16 %v1054, %v1054
      %v1063 = vpack.c.bf16 %v1055, %v1055
      %v1064 = vpack.c.bf16 %v1056, %v1056
      %v1065 = vpack.c.bf16 %v1057, %v1057
      %v1066 = vpack.c.bf16 %v1058, %v1058
      %v1067 = vpack.c.bf16 %v1059, %v1059
      %v1069 = vunpack.c.l.b16 %v1060
      %1070 = vset.pattern.permute.xlu0 0
      %1071 = vperm.xlu0 %1070, %v1069
      %v1072 = vpop.permute.xlu0 %1071
      %v1073 = vlaneseq
      %v1074 = vshrl.u32 %v1073, 7
      %v1075 = vsub.s32 %v815, %v1074
      %v1076 = vrot.slane %v1072, %v1075
      %v1077 = vpack.c.b16 %v1076, %v1076
      %v1079 = vsel %vm863, %v1077, 0
      %vm1081 = vcmask 1043456
      %v1083 = vsel %vm1081, %v151, 0
      %1085 = vmatprep.subr.bf16.mxu0 0
      %1086 = vmatpush1.bf16.msra.mxu0 %v1083
      %1087 = vmatprep.subr.bf16.mxu0 0
      %1088 = vmatpush1.bf16.msra.mxu0 0
      %1089 = vmatprep.subr.bf16.mxu0 0
      %1090 = vmatpush1.bf16.msra.mxu0 0
      %1091 = vmatprep.subr.bf16.mxu0 0
      %1092 = vmatpush1.bf16.msra.mxu0 0
      %1093 = vmatprep.subr.bf16.mxu0 0
      %1094 = vmatpush1.bf16.msra.mxu0 0
      %1095 = vmatprep.subr.bf16.mxu0 0
      %1096 = vmatpush1.bf16.msra.mxu0 0
      %1097 = vmatprep.subr.bf16.mxu0 0
      %1098 = vmatpush1.bf16.msra.mxu0 0
      %1099 = vmatprep.subr.bf16.mxu0 0
      %1100 = vmatpush1.bf16.msra.mxu0 0
      %1101 = vmatprep.subr.bf16.mxu0 0
      %1102 = vmatpush1.bf16.msra.mxu0 0
      %1103 = vmatprep.subr.bf16.mxu0 0
      %1104 = vmatpush1.bf16.msra.mxu0 0
      %1105 = vmatprep.subr.bf16.mxu0 0
      %1106 = vmatpush1.bf16.msra.mxu0 0
      %1107 = vmatprep.subr.bf16.mxu0 0
      %1108 = vmatpush1.bf16.msra.mxu0 0
      %1109 = vmatprep.subr.bf16.mxu0 0
      %1110 = vmatpush1.bf16.msra.mxu0 0
      %1111 = vmatprep.subr.bf16.mxu0 0
      %1112 = vmatpush1.bf16.msra.mxu0 0
      %1113 = vmatprep.subr.bf16.mxu0 0
      %1114 = vmatpush1.bf16.msra.mxu0 0
      %1115 = vmatprep.subr.bf16.mxu0 0
      %1116 = vmatpush1.bf16.msra.mxu0 0
      %1117 = vmatprep.mubr.bf16.mxu0 0
      %1118 = vmatmul.mubr.bf16.gmra.mrb[0].mxu0 %v1079
      %v1119 = vpop.f32.mrb[0].mxu0
      %v1120 = vadd.f32 0.0, %v1119
      %v1121 = vpop.f32.mrb[0].mxu0
      %v1122 = vpop.f32.mrb[0].mxu0
      %v1123 = vpop.f32.mrb[0].mxu0
      %1124 = vdwg.mxu0
      %v1126 = vunpack.c.l.b16 %v1061
      %1127 = vset.pattern.permute.xlu0 0
      %1128 = vperm.xlu0 %1127, %v1126
      %v1129 = vpop.permute.xlu0 %1128
      %v1130 = vlaneseq
      %v1131 = vshrl.u32 %v1130, 7
      %v1132 = vsub.s32 %v815, %v1131
      %v1133 = vrot.slane %v1129, %v1132
      %v1134 = vpack.c.b16 %v1133, %v1133
      %v1136 = vsel %vm863, %v1134, 0
      %v1139 = vsel %vm1081, %v152, 0
      %1141 = vmatprep.subr.bf16.mxu0 0
      %1142 = vmatpush1.bf16.msra.mxu0 %v1139
      %1143 = vmatprep.subr.bf16.mxu0 0
      %1144 = vmatpush1.bf16.msra.mxu0 0
      %1145 = vmatprep.subr.bf16.mxu0 0
      %1146 = vmatpush1.bf16.msra.mxu0 0
      %1147 = vmatprep.subr.bf16.mxu0 0
      %1148 = vmatpush1.bf16.msra.mxu0 0
      %1149 = vmatprep.subr.bf16.mxu0 0
      %1150 = vmatpush1.bf16.msra.mxu0 0
      %1151 = vmatprep.subr.bf16.mxu0 0
      %1152 = vmatpush1.bf16.msra.mxu0 0
      %1153 = vmatprep.subr.bf16.mxu0 0
      %1154 = vmatpush1.bf16.msra.mxu0 0
      %1155 = vmatprep.subr.bf16.mxu0 0
      %1156 = vmatpush1.bf16.msra.mxu0 0
      %1157 = vmatprep.subr.bf16.mxu0 0
      %1158 = vmatpush1.bf16.msra.mxu0 0
      %1159 = vmatprep.subr.bf16.mxu0 0
      %1160 = vmatpush1.bf16.msra.mxu0 0
      %1161 = vmatprep.subr.bf16.mxu0 0
      %1162 = vmatpush1.bf16.msra.mxu0 0
      %1163 = vmatprep.subr.bf16.mxu0 0
      %1164 = vmatpush1.bf16.msra.mxu0 0
      %1165 = vmatprep.subr.bf16.mxu0 0
      %1166 = vmatpush1.bf16.msra.mxu0 0
      %1167 = vmatprep.subr.bf16.mxu0 0
      %1168 = vmatpush1.bf16.msra.mxu0 0
      %1169 = vmatprep.subr.bf16.mxu0 0
      %1170 = vmatpush1.bf16.msra.mxu0 0
      %1171 = vmatprep.subr.bf16.mxu0 0
      %1172 = vmatpush1.bf16.msra.mxu0 0
      %1173 = vmatprep.mubr.bf16.mxu0 0
      %1174 = vmatmul.mubr.bf16.gmra.mrb[0].mxu0 %v1136
      %v1175 = vpop.f32.mrb[0].mxu0
      %v1176 = vadd.f32 0.0, %v1175
      %v1177 = vpop.f32.mrb[0].mxu0
      %v1178 = vpop.f32.mrb[0].mxu0
      %v1179 = vpop.f32.mrb[0].mxu0
      %1180 = vdwg.mxu0
      %v1182 = vunpack.c.l.b16 %v1062
      %1183 = vset.pattern.permute.xlu0 0
      %1184 = vperm.xlu0 %1183, %v1182
      %v1185 = vpop.permute.xlu0 %1184
      %v1186 = vlaneseq
      %v1187 = vshrl.u32 %v1186, 7
      %v1188 = vsub.s32 %v815, %v1187
      %v1189 = vrot.slane %v1185, %v1188
      %v1190 = vpack.c.b16 %v1189, %v1189
      %v1192 = vsel %vm863, %v1190, 0
      %v1195 = vsel %vm1081, %v153, 0
      %1197 = vmatprep.subr.bf16.mxu0 0
      %1198 = vmatpush1.bf16.msra.mxu0 %v1195
      %1199 = vmatprep.subr.bf16.mxu0 0
      %1200 = vmatpush1.bf16.msra.mxu0 0
      %1201 = vmatprep.subr.bf16.mxu0 0
      %1202 = vmatpush1.bf16.msra.mxu0 0
      %1203 = vmatprep.subr.bf16.mxu0 0
      %1204 = vmatpush1.bf16.msra.mxu0 0
      %1205 = vmatprep.subr.bf16.mxu0 0
      %1206 = vmatpush1.bf16.msra.mxu0 0
      %1207 = vmatprep.subr.bf16.mxu0 0
      %1208 = vmatpush1.bf16.msra.mxu0 0
      %1209 = vmatprep.subr.bf16.mxu0 0
      %1210 = vmatpush1.bf16.msra.mxu0 0
      %1211 = vmatprep.subr.bf16.mxu0 0
      %1212 = vmatpush1.bf16.msra.mxu0 0
      %1213 = vmatprep.subr.bf16.mxu0 0
      %1214 = vmatpush1.bf16.msra.mxu0 0
      %1215 = vmatprep.subr.bf16.mxu0 0
      %1216 = vmatpush1.bf16.msra.mxu0 0
      %1217 = vmatprep.subr.bf16.mxu0 0
      %1218 = vmatpush1.bf16.msra.mxu0 0
      %1219 = vmatprep.subr.bf16.mxu0 0
      %1220 = vmatpush1.bf16.msra.mxu0 0
      %1221 = vmatprep.subr.bf16.mxu0 0
      %1222 = vmatpush1.bf16.msra.mxu0 0
      %1223 = vmatprep.subr.bf16.mxu0 0
      %1224 = vmatpush1.bf16.msra.mxu0 0
      %1225 = vmatprep.subr.bf16.mxu0 0
      %1226 = vmatpush1.bf16.msra.mxu0 0
      %1227 = vmatprep.subr.bf16.mxu0 0
      %1228 = vmatpush1.bf16.msra.mxu0 0
      %1229 = vmatprep.mubr.bf16.mxu0 0
      %1230 = vmatmul.mubr.bf16.gmra.mrb[0].mxu0 %v1192
      %v1231 = vpop.f32.mrb[0].mxu0
      %v1232 = vadd.f32 0.0, %v1231
      %v1233 = vpop.f32.mrb[0].mxu0
      %v1234 = vpop.f32.mrb[0].mxu0
      %v1235 = vpop.f32.mrb[0].mxu0
      %1236 = vdwg.mxu0
      %v1238 = vunpack.c.l.b16 %v1063
      %1239 = vset.pattern.permute.xlu0 0
      %1240 = vperm.xlu0 %1239, %v1238
      %v1241 = vpop.permute.xlu0 %1240
      %v1242 = vlaneseq
      %v1243 = vshrl.u32 %v1242, 7
      %v1244 = vsub.s32 %v815, %v1243
      %v1245 = vrot.slane %v1241, %v1244
      %v1246 = vpack.c.b16 %v1245, %v1245
      %v1248 = vsel %vm863, %v1246, 0
      %v1251 = vsel %vm1081, %v154, 0
      %1253 = vmatprep.subr.bf16.mxu0 0
      %1254 = vmatpush1.bf16.msra.mxu0 %v1251
      %1255 = vmatprep.subr.bf16.mxu0 0
      %1256 = vmatpush1.bf16.msra.mxu0 0
      %1257 = vmatprep.subr.bf16.mxu0 0
      %1258 = vmatpush1.bf16.msra.mxu0 0
      %1259 = vmatprep.subr.bf16.mxu0 0
      %1260 = vmatpush1.bf16.msra.mxu0 0
      %1261 = vmatprep.subr.bf16.mxu0 0
      %1262 = vmatpush1.bf16.msra.mxu0 0
      %1263 = vmatprep.subr.bf16.mxu0 0
      %1264 = vmatpush1.bf16.msra.mxu0 0
      %1265 = vmatprep.subr.bf16.mxu0 0
      %1266 = vmatpush1.bf16.msra.mxu0 0
      %1267 = vmatprep.subr.bf16.mxu0 0
      %1268 = vmatpush1.bf16.msra.mxu0 0
      %1269 = vmatprep.subr.bf16.mxu0 0
      %1270 = vmatpush1.bf16.msra.mxu0 0
      %1271 = vmatprep.subr.bf16.mxu0 0
      %1272 = vmatpush1.bf16.msra.mxu0 0
      %1273 = vmatprep.subr.bf16.mxu0 0
      %1274 = vmatpush1.bf16.msra.mxu0 0
      %1275 = vmatprep.subr.bf16.mxu0 0
      %1276 = vmatpush1.bf16.msra.mxu0 0
      %1277 = vmatprep.subr.bf16.mxu0 0
      %1278 = vmatpush1.bf16.msra.mxu0 0
      %1279 = vmatprep.subr.bf16.mxu0 0
      %1280 = vmatpush1.bf16.msra.mxu0 0
      %1281 = vmatprep.subr.bf16.mxu0 0
      %1282 = vmatpush1.bf16.msra.mxu0 0
      %1283 = vmatprep.subr.bf16.mxu0 0
      %1284 = vmatpush1.bf16.msra.mxu0 0
      %1285 = vmatprep.mubr.bf16.mxu0 0
      %1286 = vmatmul.mubr.bf16.gmra.mrb[0].mxu0 %v1248
      %v1287 = vpop.f32.mrb[0].mxu0
      %v1288 = vadd.f32 0.0, %v1287
      %v1289 = vpop.f32.mrb[0].mxu0
      %v1290 = vpop.f32.mrb[0].mxu0
      %v1291 = vpop.f32.mrb[0].mxu0
      %1292 = vdwg.mxu0
      %v1294 = vunpack.c.l.b16 %v1064
      %1295 = vset.pattern.permute.xlu0 0
      %1296 = vperm.xlu0 %1295, %v1294
      %v1297 = vpop.permute.xlu0 %1296
      %v1298 = vlaneseq
      %v1299 = vshrl.u32 %v1298, 7
      %v1300 = vsub.s32 %v815, %v1299
      %v1301 = vrot.slane %v1297, %v1300
      %v1302 = vpack.c.b16 %v1301, %v1301
      %v1304 = vsel %vm863, %v1302, 0
      %v1307 = vsel %vm1081, %v155, 0
      %1309 = vmatprep.subr.bf16.mxu0 0
      %1310 = vmatpush1.bf16.msra.mxu0 %v1307
      %1311 = vmatprep.subr.bf16.mxu0 0
      %1312 = vmatpush1.bf16.msra.mxu0 0
      %1313 = vmatprep.subr.bf16.mxu0 0
      %1314 = vmatpush1.bf16.msra.mxu0 0
      %1315 = vmatprep.subr.bf16.mxu0 0
      %1316 = vmatpush1.bf16.msra.mxu0 0
      %1317 = vmatprep.subr.bf16.mxu0 0
      %1318 = vmatpush1.bf16.msra.mxu0 0
      %1319 = vmatprep.subr.bf16.mxu0 0
      %1320 = vmatpush1.bf16.msra.mxu0 0
      %1321 = vmatprep.subr.bf16.mxu0 0
      %1322 = vmatpush1.bf16.msra.mxu0 0
      %1323 = vmatprep.subr.bf16.mxu0 0
      %1324 = vmatpush1.bf16.msra.mxu0 0
      %1325 = vmatprep.subr.bf16.mxu0 0
      %1326 = vmatpush1.bf16.msra.mxu0 0
      %1327 = vmatprep.subr.bf16.mxu0 0
      %1328 = vmatpush1.bf16.msra.mxu0 0
      %1329 = vmatprep.subr.bf16.mxu0 0
      %1330 = vmatpush1.bf16.msra.mxu0 0
      %1331 = vmatprep.subr.bf16.mxu0 0
      %1332 = vmatpush1.bf16.msra.mxu0 0
      %1333 = vmatprep.subr.bf16.mxu0 0
      %1334 = vmatpush1.bf16.msra.mxu0 0
      %1335 = vmatprep.subr.bf16.mxu0 0
      %1336 = vmatpush1.bf16.msra.mxu0 0
      %1337 = vmatprep.subr.bf16.mxu0 0
      %1338 = vmatpush1.bf16.msra.mxu0 0
      %1339 = vmatprep.subr.bf16.mxu0 0
      %1340 = vmatpush1.bf16.msra.mxu0 0
      %1341 = vmatprep.mubr.bf16.mxu0 0
      %1342 = vmatmul.mubr.bf16.gmra.mrb[0].mxu0 %v1304
      %v1343 = vpop.f32.mrb[0].mxu0
      %v1344 = vadd.f32 0.0, %v1343
      %v1345 = vpop.f32.mrb[0].mxu0
      %v1346 = vpop.f32.mrb[0].mxu0
      %v1347 = vpop.f32.mrb[0].mxu0
      %1348 = vdwg.mxu0
      %v1350 = vunpack.c.l.b16 %v1065
      %1351 = vset.pattern.permute.xlu0 0
      %1352 = vperm.xlu0 %1351, %v1350
      %v1353 = vpop.permute.xlu0 %1352
      %v1354 = vlaneseq
      %v1355 = vshrl.u32 %v1354, 7
      %v1356 = vsub.s32 %v815, %v1355
      %v1357 = vrot.slane %v1353, %v1356
      %v1358 = vpack.c.b16 %v1357, %v1357
      %v1360 = vsel %vm863, %v1358, 0
      %v1363 = vsel %vm1081, %v156, 0
      %1365 = vmatprep.subr.bf16.mxu0 0
      %1366 = vmatpush1.bf16.msra.mxu0 %v1363
      %1367 = vmatprep.subr.bf16.mxu0 0
      %1368 = vmatpush1.bf16.msra.mxu0 0
      %1369 = vmatprep.subr.bf16.mxu0 0
      %1370 = vmatpush1.bf16.msra.mxu0 0
      %1371 = vmatprep.subr.bf16.mxu0 0
      %1372 = vmatpush1.bf16.msra.mxu0 0
      %1373 = vmatprep.subr.bf16.mxu0 0
      %1374 = vmatpush1.bf16.msra.mxu0 0
      %1375 = vmatprep.subr.bf16.mxu0 0
      %1376 = vmatpush1.bf16.msra.mxu0 0
      %1377 = vmatprep.subr.bf16.mxu0 0
      %1378 = vmatpush1.bf16.msra.mxu0 0
      %1379 = vmatprep.subr.bf16.mxu0 0
      %1380 = vmatpush1.bf16.msra.mxu0 0
      %1381 = vmatprep.subr.bf16.mxu0 0
      %1382 = vmatpush1.bf16.msra.mxu0 0
      %1383 = vmatprep.subr.bf16.mxu0 0
      %1384 = vmatpush1.bf16.msra.mxu0 0
      %1385 = vmatprep.subr.bf16.mxu0 0
      %1386 = vmatpush1.bf16.msra.mxu0 0
      %1387 = vmatprep.subr.bf16.mxu0 0
      %1388 = vmatpush1.bf16.msra.mxu0 0
      %1389 = vmatprep.subr.bf16.mxu0 0
      %1390 = vmatpush1.bf16.msra.mxu0 0
      %1391 = vmatprep.subr.bf16.mxu0 0
      %1392 = vmatpush1.bf16.msra.mxu0 0
      %1393 = vmatprep.subr.bf16.mxu0 0
      %1394 = vmatpush1.bf16.msra.mxu0 0
      %1395 = vmatprep.subr.bf16.mxu0 0
      %1396 = vmatpush1.bf16.msra.mxu0 0
      %1397 = vmatprep.mubr.bf16.mxu0 0
      %1398 = vmatmul.mubr.bf16.gmra.mrb[0].mxu0 %v1360
      %v1399 = vpop.f32.mrb[0].mxu0
      %v1400 = vadd.f32 0.0, %v1399
      %v1401 = vpop.f32.mrb[0].mxu0
      %v1402 = vpop.f32.mrb[0].mxu0
      %v1403 = vpop.f32.mrb[0].mxu0
      %1404 = vdwg.mxu0
      %v1406 = vunpack.c.l.b16 %v1066
      %1407 = vset.pattern.permute.xlu0 0
      %1408 = vperm.xlu0 %1407, %v1406
      %v1409 = vpop.permute.xlu0 %1408
      %v1410 = vlaneseq
      %v1411 = vshrl.u32 %v1410, 7
      %v1412 = vsub.s32 %v815, %v1411
      %v1413 = vrot.slane %v1409, %v1412
      %v1414 = vpack.c.b16 %v1413, %v1413
      %v1416 = vsel %vm863, %v1414, 0
      %v1419 = vsel %vm1081, %v157, 0
      %1421 = vmatprep.subr.bf16.mxu0 0
      %1422 = vmatpush1.bf16.msra.mxu0 %v1419
      %1423 = vmatprep.subr.bf16.mxu0 0
      %1424 = vmatpush1.bf16.msra.mxu0 0
      %1425 = vmatprep.subr.bf16.mxu0 0
      %1426 = vmatpush1.bf16.msra.mxu0 0
      %1427 = vmatprep.subr.bf16.mxu0 0
      %1428 = vmatpush1.bf16.msra.mxu0 0
      %1429 = vmatprep.subr.bf16.mxu0 0
      %1430 = vmatpush1.bf16.msra.mxu0 0
      %1431 = vmatprep.subr.bf16.mxu0 0
      %1432 = vmatpush1.bf16.msra.mxu0 0
      %1433 = vmatprep.subr.bf16.mxu0 0
      %1434 = vmatpush1.bf16.msra.mxu0 0
      %1435 = vmatprep.subr.bf16.mxu0 0
      %1436 = vmatpush1.bf16.msra.mxu0 0
      %1437 = vmatprep.subr.bf16.mxu0 0
      %1438 = vmatpush1.bf16.msra.mxu0 0
      %1439 = vmatprep.subr.bf16.mxu0 0
      %1440 = vmatpush1.bf16.msra.mxu0 0
      %1441 = vmatprep.subr.bf16.mxu0 0
      %1442 = vmatpush1.bf16.msra.mxu0 0
      %1443 = vmatprep.subr.bf16.mxu0 0
      %1444 = vmatpush1.bf16.msra.mxu0 0
      %1445 = vmatprep.subr.bf16.mxu0 0
      %1446 = vmatpush1.bf16.msra.mxu0 0
      %1447 = vmatprep.subr.bf16.mxu0 0
      %1448 = vmatpush1.bf16.msra.mxu0 0
      %1449 = vmatprep.subr.bf16.mxu0 0
      %1450 = vmatpush1.bf16.msra.mxu0 0
      %1451 = vmatprep.subr.bf16.mxu0 0
      %1452 = vmatpush1.bf16.msra.mxu0 0
      %1453 = vmatprep.mubr.bf16.mxu0 0
      %1454 = vmatmul.mubr.bf16.gmra.mrb[0].mxu0 %v1416
      %v1455 = vpop.f32.mrb[0].mxu0
      %v1456 = vadd.f32 0.0, %v1455
      %v1457 = vpop.f32.mrb[0].mxu0
      %v1458 = vpop.f32.mrb[0].mxu0
      %v1459 = vpop.f32.mrb[0].mxu0
      %1460 = vdwg.mxu0
      %v1462 = vunpack.c.l.b16 %v1067
      %1463 = vset.pattern.permute.xlu0 0
      %1464 = vperm.xlu0 %1463, %v1462
      %v1465 = vpop.permute.xlu0 %1464
      %v1466 = vlaneseq
      %v1467 = vshrl.u32 %v1466, 7
      %v1468 = vsub.s32 %v815, %v1467
      %v1469 = vrot.slane %v1465, %v1468
      %v1470 = vpack.c.b16 %v1469, %v1469
      %v1472 = vsel %vm863, %v1470, 0
      %v1475 = vsel %vm1081, %v158, 0
      %1477 = vmatprep.subr.bf16.mxu0 0
      %1478 = vmatpush1.bf16.msra.mxu0 %v1475
      %1479 = vmatprep.subr.bf16.mxu0 0
      %1480 = vmatpush1.bf16.msra.mxu0 0
      %1481 = vmatprep.subr.bf16.mxu0 0
      %1482 = vmatpush1.bf16.msra.mxu0 0
      %1483 = vmatprep.subr.bf16.mxu0 0
      %1484 = vmatpush1.bf16.msra.mxu0 0
      %1485 = vmatprep.subr.bf16.mxu0 0
      %1486 = vmatpush1.bf16.msra.mxu0 0
      %1487 = vmatprep.subr.bf16.mxu0 0
      %1488 = vmatpush1.bf16.msra.mxu0 0
      %1489 = vmatprep.subr.bf16.mxu0 0
      %1490 = vmatpush1.bf16.msra.mxu0 0
      %1491 = vmatprep.subr.bf16.mxu0 0
      %1492 = vmatpush1.bf16.msra.mxu0 0
      %1493 = vmatprep.subr.bf16.mxu0 0
      %1494 = vmatpush1.bf16.msra.mxu0 0
      %1495 = vmatprep.subr.bf16.mxu0 0
      %1496 = vmatpush1.bf16.msra.mxu0 0
      %1497 = vmatprep.subr.bf16.mxu0 0
      %1498 = vmatpush1.bf16.msra.mxu0 0
      %1499 = vmatprep.subr.bf16.mxu0 0
      %1500 = vmatpush1.bf16.msra.mxu0 0
      %1501 = vmatprep.subr.bf16.mxu0 0
      %1502 = vmatpush1.bf16.msra.mxu0 0
      %1503 = vmatprep.subr.bf16.mxu0 0
      %1504 = vmatpush1.bf16.msra.mxu0 0
      %1505 = vmatprep.subr.bf16.mxu0 0
      %1506 = vmatpush1.bf16.msra.mxu0 0
      %1507 = vmatprep.subr.bf16.mxu0 0
      %1508 = vmatpush1.bf16.msra.mxu0 0
      %1509 = vmatprep.mubr.bf16.mxu0 0
      %1510 = vmatmul.mubr.bf16.gmra.mrb[0].mxu0 %v1472
      %v1511 = vpop.f32.mrb[0].mxu0
      %v1512 = vadd.f32 0.0, %v1511
      %v1513 = vpop.f32.mrb[0].mxu0
      %v1514 = vpop.f32.mrb[0].mxu0
      %v1515 = vpop.f32.mrb[0].mxu0
      %1516 = vdwg.mxu0
      %v1517 = vpack.c.bf16 %v1120, %v1120
      %v1518 = vpack.c.bf16 %v1176, %v1176
      %v1519 = vpack.c.bf16 %v1232, %v1232
      %v1520 = vpack.c.bf16 %v1288, %v1288
      %v1521 = vpack.c.bf16 %v1344, %v1344
      %v1522 = vpack.c.bf16 %v1400, %v1400
      %v1523 = vpack.c.bf16 %v1456, %v1456
      %v1524 = vpack.c.bf16 %v1512, %v1512
      %v1525 = vld [vmem:[#allocation12] sm:$0xf]
      %v1526 = vld [vmem:[#allocation12 + $0x4] sm:$0xf]
      %v1527 = vld [vmem:[#allocation12 + $0x8] sm:$0xf]
      %v1528 = vld [vmem:[#allocation12 + $0xc] sm:$0xf]
      %v1529 = vld [vmem:[#allocation12 + $0x10] sm:$0xf]
      %v1530 = vld [vmem:[#allocation12 + $0x14] sm:$0xf]
      %v1531 = vld [vmem:[#allocation12 + $0x18] sm:$0xf]
      %v1532 = vld [vmem:[#allocation12 + $0x1c] sm:$0xf]
      %v1533 = vld [vmem:[#allocation12 + $0x20] sm:$0xf]
      %v1534 = vld [vmem:[#allocation12 + $0x24] sm:$0xf]
      %v1535 = vld [vmem:[#allocation12 + $0x28] sm:$0xf]
      %v1536 = vld [vmem:[#allocation12 + $0x2c] sm:$0xf]
      %v1537 = vld [vmem:[#allocation12 + $0x30] sm:$0xf]
      %v1538 = vld [vmem:[#allocation12 + $0x34] sm:$0xf]
      %v1539 = vld [vmem:[#allocation12 + $0x38] sm:$0xf]
      %v1540 = vld [vmem:[#allocation12 + $0x3c] sm:$0xf]
      %v1541 = vpack.c.bf16 %v683, %v683
      %v1542 = vld [vmem:[#allocation14] sm:$0xf]
      %v1543 = vld [vmem:[#allocation14 + $0x4] sm:$0xf]
      %v1544 = vld [vmem:[#allocation14 + $0x8] sm:$0xf]
      %v1545 = vld [vmem:[#allocation14 + $0xc] sm:$0xf]
      %v1546 = vld [vmem:[#allocation14 + $0x10] sm:$0xf]
      %v1547 = vld [vmem:[#allocation14 + $0x14] sm:$0xf]
      %v1548 = vld [vmem:[#allocation14 + $0x18] sm:$0xf]
      %v1549 = vld [vmem:[#allocation14 + $0x1c] sm:$0xf]
      %v1550 = vld [vmem:[#allocation14 + $0x20] sm:$0xf]
      %v1551 = vld [vmem:[#allocation14 + $0x24] sm:$0xf]
      %v1552 = vld [vmem:[#allocation14 + $0x28] sm:$0xf]
      %v1553 = vld [vmem:[#allocation14 + $0x2c] sm:$0xf]
      %v1554 = vld [vmem:[#allocation14 + $0x30] sm:$0xf]
      %v1555 = vld [vmem:[#allocation14 + $0x34] sm:$0xf]
      %v1556 = vld [vmem:[#allocation14 + $0x38] sm:$0xf]
      %v1557 = vld [vmem:[#allocation14 + $0x3c] sm:$0xf]
      %v1574 = vunpack.c.l.b16 %v1542
      %v1575 = vunpack.c.l.b16 %v1543
      %v1576 = vunpack.c.l.b16 %v1544
      %v1577 = vunpack.c.l.b16 %v1545
      %v1578 = vunpack.c.l.b16 %v1546
      %v1579 = vunpack.c.l.b16 %v1547
      %v1580 = vunpack.c.l.b16 %v1548
      %v1581 = vunpack.c.l.b16 %v1549
      %v1582 = vunpack.c.l.b16 %v1550
      %v1583 = vunpack.c.l.b16 %v1551
      %v1584 = vunpack.c.l.b16 %v1552
      %v1585 = vunpack.c.l.b16 %v1553
      %v1586 = vunpack.c.l.b16 %v1554
      %v1587 = vunpack.c.l.b16 %v1555
      %v1588 = vunpack.c.l.b16 %v1556
      %v1589 = vunpack.c.l.b16 %v1557
      %v1590 = vpack.c.b16 %v1575, %v1574
      %v1591 = vpack.c.b16 %v1577, %v1576
      %v1592 = vpack.c.b16 %v1579, %v1578
      %v1593 = vpack.c.b16 %v1581, %v1580
      %v1594 = vpack.c.b16 %v1583, %v1582
      %v1595 = vpack.c.b16 %v1585, %v1584
      %v1596 = vpack.c.b16 %v1587, %v1586
      %v1597 = vpack.c.b16 %v1589, %v1588
      %1606 = vmatprep.subr.bf16.mxu0 0
      %1607 = vmatpush1.bf16.msra.mxu0 %v1590
      %1608 = vmatprep.subr.bf16.mxu0 0
      %1609 = vmatpush1.bf16.msra.mxu0 %v1591
      %1610 = vmatprep.subr.bf16.mxu0 0
      %1611 = vmatpush1.bf16.msra.mxu0 %v1592
      %1612 = vmatprep.subr.bf16.mxu0 0
      %1613 = vmatpush1.bf16.msra.mxu0 %v1593
      %1614 = vmatprep.subr.bf16.mxu0 0
      %1615 = vmatpush1.bf16.msra.mxu0 %v1594
      %1616 = vmatprep.subr.bf16.mxu0 0
      %1617 = vmatpush1.bf16.msra.mxu0 %v1595
      %1618 = vmatprep.subr.bf16.mxu0 0
      %1619 = vmatpush1.bf16.msra.mxu0 %v1596
      %1620 = vmatprep.subr.bf16.mxu0 0
      %1621 = vmatpush1.bf16.msra.mxu0 %v1597
      %1622 = vmatprep.subr.bf16.mxu0 0
      %1623 = vmatpush1.bf16.msra.mxu0 0
      %1624 = vmatprep.subr.bf16.mxu0 0
      %1625 = vmatpush1.bf16.msra.mxu0 0
      %1626 = vmatprep.subr.bf16.mxu0 0
      %1627 = vmatpush1.bf16.msra.mxu0 0
      %1628 = vmatprep.subr.bf16.mxu0 0
      %1629 = vmatpush1.bf16.msra.mxu0 0
      %1630 = vmatprep.subr.bf16.mxu0 0
      %1631 = vmatpush1.bf16.msra.mxu0 0
      %1632 = vmatprep.subr.bf16.mxu0 0
      %1633 = vmatpush1.bf16.msra.mxu0 0
      %1634 = vmatprep.subr.bf16.mxu0 0
      %1635 = vmatpush1.bf16.msra.mxu0 0
      %1636 = vmatprep.subr.bf16.mxu0 0
      %1637 = vmatpush1.bf16.msra.mxu0 0
      %1638 = vmatprep.mubr.bf16.mxu0 0
      %1639 = vmatmul.mubr.bf16.gmra.mrb[0].mxu0 %v1541
      %v1640 = vpop.f32.mrb[0].mxu0
      %v1641 = vadd.f32 0.0, %v1640
      %v1642 = vpop.f32.mrb[0].mxu0
      %v1643 = vpop.f32.mrb[0].mxu0
      %v1644 = vpop.f32.mrb[0].mxu0
      %1645 = vdwg.mxu0
      %v1654 = vunpack.c.l.b16 %v1517
      %v1655 = vunpack.c.l.b16 %v1518
      %v1656 = vunpack.c.l.b16 %v1519
      %v1657 = vunpack.c.l.b16 %v1520
      %v1658 = vunpack.c.l.b16 %v1521
      %v1659 = vunpack.c.l.b16 %v1522
      %v1660 = vunpack.c.l.b16 %v1523
      %v1661 = vunpack.c.l.b16 %v1524
      %v1662 = vrot.slane %v1655, 7
      %v1663 = vsel %vm848, %v1662, %v1654
      %v1664 = vrot.slane %v1656, 6
      %v1665 = vsel %vm850, %v1664, %v1663
      %v1666 = vrot.slane %v1657, 5
      %v1667 = vsel %vm852, %v1666, %v1665
      %v1668 = vrot.slane %v1658, 4
      %v1669 = vsel %vm854, %v1668, %v1667
      %v1670 = vrot.slane %v1659, 3
      %v1671 = vsel %vm856, %v1670, %v1669
      %v1672 = vrot.slane %v1660, 2
      %v1673 = vsel %vm858, %v1672, %v1671
      %v1674 = vrot.slane %v1661, 1
      %v1675 = vsel %vm860, %v1674, %v1673
      %v1676 = vpack.c.b16 %v1675, %v1675
      %v1694 = vunpack.c.l.b16 %v1525
      %v1695 = vunpack.c.l.b16 %v1526
      %v1696 = vunpack.c.l.b16 %v1527
      %v1697 = vunpack.c.l.b16 %v1528
      %v1698 = vunpack.c.l.b16 %v1529
      %v1699 = vunpack.c.l.b16 %v1530
      %v1700 = vunpack.c.l.b16 %v1531
      %v1701 = vunpack.c.l.b16 %v1532
      %v1702 = vunpack.c.l.b16 %v1533
      %v1703 = vunpack.c.l.b16 %v1534
      %v1704 = vunpack.c.l.b16 %v1535
      %v1705 = vunpack.c.l.b16 %v1536
      %v1706 = vunpack.c.l.b16 %v1537
      %v1707 = vunpack.c.l.b16 %v1538
      %v1708 = vunpack.c.l.b16 %v1539
      %v1709 = vunpack.c.l.b16 %v1540
      %v1710 = vpack.c.b16 %v1695, %v1694
      %v1711 = vpack.c.b16 %v1697, %v1696
      %v1712 = vpack.c.b16 %v1699, %v1698
      %v1713 = vpack.c.b16 %v1701, %v1700
      %v1714 = vpack.c.b16 %v1703, %v1702
      %v1715 = vpack.c.b16 %v1705, %v1704
      %v1716 = vpack.c.b16 %v1707, %v1706
      %v1717 = vpack.c.b16 %v1709, %v1708
      %1726 = vmatprep.subr.bf16.mxu0 0
      %1727 = vmatpush1.bf16.msra.mxu0 %v1710
      %1728 = vmatprep.subr.bf16.mxu0 0
      %1729 = vmatpush1.bf16.msra.mxu0 %v1711
      %1730 = vmatprep.subr.bf16.mxu0 0
      %1731 = vmatpush1.bf16.msra.mxu0 %v1712
      %1732 = vmatprep.subr.bf16.mxu0 0
      %1733 = vmatpush1.bf16.msra.mxu0 %v1713
      %1734 = vmatprep.subr.bf16.mxu0 0
      %1735 = vmatpush1.bf16.msra.mxu0 %v1714
      %1736 = vmatprep.subr.bf16.mxu0 0
      %1737 = vmatpush1.bf16.msra.mxu0 %v1715
      %1738 = vmatprep.subr.bf16.mxu0 0
      %1739 = vmatpush1.bf16.msra.mxu0 %v1716
      %1740 = vmatprep.subr.bf16.mxu0 0
      %1741 = vmatpush1.bf16.msra.mxu0 %v1717
      %1742 = vmatprep.subr.bf16.mxu0 0
      %1743 = vmatpush1.bf16.msra.mxu0 0
      %1744 = vmatprep.subr.bf16.mxu0 0
      %1745 = vmatpush1.bf16.msra.mxu0 0
      %1746 = vmatprep.subr.bf16.mxu0 0
      %1747 = vmatpush1.bf16.msra.mxu0 0
      %1748 = vmatprep.subr.bf16.mxu0 0
      %1749 = vmatpush1.bf16.msra.mxu0 0
      %1750 = vmatprep.subr.bf16.mxu0 0
      %1751 = vmatpush1.bf16.msra.mxu0 0
      %1752 = vmatprep.subr.bf16.mxu0 0
      %1753 = vmatpush1.bf16.msra.mxu0 0
      %1754 = vmatprep.subr.bf16.mxu0 0
      %1755 = vmatpush1.bf16.msra.mxu0 0
      %1756 = vmatprep.subr.bf16.mxu0 0
      %1757 = vmatpush1.bf16.msra.mxu0 0
      %1758 = vmatprep.mubr.bf16.mxu0 0
      %1759 = vmatmul.mubr.bf16.gmra.mrb[0].mxu0 %v1676
      %v1760 = vpop.f32.mrb[0].mxu0
      %v1761 = vadd.f32 %v1641, %v1760
      %v1762 = vpop.f32.mrb[0].mxu0
      %v1763 = vpop.f32.mrb[0].mxu0
      %v1764 = vpop.f32.mrb[0].mxu0
      %1765 = vdwg.mxu0
      %v1766 = vlaneseq
      %v1767 = vshrl.u32 %v1766, 7
      %v1768 = vsub.s32 4, %v1767
      %v1769 = vrot.slane %v642, %v1768
      %v1770 = vadd.f32 %v1761, %v1769
      %v1771 = vmax.f32 %v1770, 0.0
      %v1772 = vpack.c.bf16 %v1771, %v1771
      %1773 = vst [vmem:[#allocation2] sm:$0xf] %v1772
      %1774 = vst [vmem:[#allocation18] sm:$0xff] %v683
    $region77: #{tpu_custom_call.1} parent=1 // pred_fallthru
      _
    %v1775 = vld [vmem:[#allocation2] sm:$0xf]
    %v1776 = vld [vmem:[#allocation15] sm:$0xf]
    %v1777 = vld [vmem:[#allocation15 + $0x4] sm:$0xf]
    %v1778 = vld [vmem:[#allocation15 + $0x8] sm:$0xf]
    %v1779 = vld [vmem:[#allocation15 + $0xc] sm:$0xf]
    %v1780 = vld [vmem:[#allocation15 + $0x10] sm:$0xf]
    %v1781 = vld [vmem:[#allocation15 + $0x14] sm:$0xf]
    %v1782 = vld [vmem:[#allocation15 + $0x18] sm:$0xf]
    %v1783 = vld [vmem:[#allocation15 + $0x1c] sm:$0xf]
    %v1784 = vld [vmem:[#allocation15 + $0x20] sm:$0xf]
    %v1785 = vld [vmem:[#allocation15 + $0x24] sm:$0xf]
    %v1786 = vld [vmem:[#allocation15 + $0x28] sm:$0xf]
    %v1787 = vld [vmem:[#allocation15 + $0x2c] sm:$0xf]
    %v1788 = vld [vmem:[#allocation15 + $0x30] sm:$0xf]
    %v1789 = vld [vmem:[#allocation15 + $0x34] sm:$0xf]
    %v1790 = vld [vmem:[#allocation15 + $0x38] sm:$0xf]
    %v1791 = vld [vmem:[#allocation15 + $0x3c] sm:$0xf]
    %v1792 = vld [vmem:[%s9] sm:$0x1]
    %v1794 = vlaneseq
    %v1795 = vshrl.u32 %v1794, 7
    %v1796 = vsub.s32 0, %v1795
    %v1797 = vrot.slane %v1792, %v1796
    %v1815 = vunpack.c.l.b16 %v1776
    %v1816 = vunpack.c.l.b16 %v1777
    %v1817 = vunpack.c.l.b16 %v1778
    %v1818 = vunpack.c.l.b16 %v1779
    %v1819 = vunpack.c.l.b16 %v1780
    %v1820 = vunpack.c.l.b16 %v1781
    %v1821 = vunpack.c.l.b16 %v1782
    %v1822 = vunpack.c.l.b16 %v1783
    %v1823 = vunpack.c.l.b16 %v1784
    %v1824 = vunpack.c.l.b16 %v1785
    %v1825 = vunpack.c.l.b16 %v1786
    %v1826 = vunpack.c.l.b16 %v1787
    %v1827 = vunpack.c.l.b16 %v1788
    %v1828 = vunpack.c.l.b16 %v1789
    %v1829 = vunpack.c.l.b16 %v1790
    %v1830 = vunpack.c.l.b16 %v1791
    %v1831 = vpack.c.b16 %v1816, %v1815
    %v1832 = vpack.c.b16 %v1818, %v1817
    %v1833 = vpack.c.b16 %v1820, %v1819
    %v1834 = vpack.c.b16 %v1822, %v1821
    %v1835 = vpack.c.b16 %v1824, %v1823
    %v1836 = vpack.c.b16 %v1826, %v1825
    %v1837 = vpack.c.b16 %v1828, %v1827
    %v1838 = vpack.c.b16 %v1830, %v1829
    %1847 = vmatprep.subr.bf16.mxu0 0
    %1848 = vmatpush1.bf16.msra.mxu0 %v1831
    %1849 = vmatprep.subr.bf16.mxu0 0
    %1850 = vmatpush1.bf16.msra.mxu0 %v1832
    %1851 = vmatprep.subr.bf16.mxu0 0
    %1852 = vmatpush1.bf16.msra.mxu0 %v1833
    %1853 = vmatprep.subr.bf16.mxu0 0
    %1854 = vmatpush1.bf16.msra.mxu0 %v1834
    %1855 = vmatprep.subr.bf16.mxu0 0
    %1856 = vmatpush1.bf16.msra.mxu0 %v1835
    %1857 = vmatprep.subr.bf16.mxu0 0
    %1858 = vmatpush1.bf16.msra.mxu0 %v1836
    %1859 = vmatprep.subr.bf16.mxu0 0
    %1860 = vmatpush1.bf16.msra.mxu0 %v1837
    %1861 = vmatprep.subr.bf16.mxu0 0
    %1862 = vmatpush1.bf16.msra.mxu0 %v1838
    %1863 = vmatprep.subr.bf16.mxu0 0
    %1864 = vmatpush1.bf16.msra.mxu0 0
    %1865 = vmatprep.subr.bf16.mxu0 0
    %1866 = vmatpush1.bf16.msra.mxu0 0
    %1867 = vmatprep.subr.bf16.mxu0 0
    %1868 = vmatpush1.bf16.msra.mxu0 0
    %1869 = vmatprep.subr.bf16.mxu0 0
    %1870 = vmatpush1.bf16.msra.mxu0 0
    %1871 = vmatprep.subr.bf16.mxu0 0
    %1872 = vmatpush1.bf16.msra.mxu0 0
    %1873 = vmatprep.subr.bf16.mxu0 0
    %1874 = vmatpush1.bf16.msra.mxu0 0
    %1875 = vmatprep.subr.bf16.mxu0 0
    %1876 = vmatpush1.bf16.msra.mxu0 0
    %1877 = vmatprep.subr.bf16.mxu0 0
    %1878 = vmatpush1.bf16.msra.mxu0 0
    %1879 = vmatprep.mubr.bf16.mxu0 0
    %1880 = vmatmul.mubr.bf16.gmra.mrb[0].mxu0 %v1775
    %v1881 = vpop.f32.mrb[0].mxu0
    %v1882 = vadd.f32 %v1797, %v1881
    %v1883 = vpop.f32.mrb[0].mxu0
    %v1884 = vpop.f32.mrb[0].mxu0
    %v1885 = vpop.f32.mrb[0].mxu0
    %1886 = vdwg.mxu0
    %1887 = vst [vmem:[#allocation17] sm:$0xff] %v1882
    // Predicated region
    $region78: #{tpu_custom_call.1} parent=1 // pred_check
      _
    $region79: #{tpu_custom_call.1} parent=1 // pred_check_branch
      %1889 = sbr.rel (0) target = $region81
    $region80: #{tpu_custom_call.1} parent=1 // pred_region
      %s1891 = ssub.s32 128, 128
      %1892 = vsyncadd [#allocation5], %s1891
      %s1894 = sshll.u32 [#allocation17], 4
      %s1895 = int_to_ptr.vmem [resolvable:$true] %s1894
      %1897 = dma.vmem_to_hbm [thread:$0]  %s1895, 128, %s10, [#allocation5]
    $region81: #{tpu_custom_call.1} parent=1 // pred_fallthru
      _
    // Predicated region
    $region82: #{tpu_custom_call.1} parent=1 // pred_check
      _
    $region83: #{tpu_custom_call.1} parent=1 // pred_check_branch
      %1899 = sbr.rel (0) target = $region85
    $region84: #{tpu_custom_call.1} parent=1 // pred_region
      %s1901 = ssub.s32 128, 128
      %1902 = vsyncadd [#allocation19], %s1901
      %s1904 = sshll.u32 [#allocation18], 4
      %s1905 = int_to_ptr.vmem [resolvable:$true] %s1904
      %1907 = dma.vmem_to_hbm [thread:$0]  %s1905, 128, %s11, [#allocation19]
    $region85: #{tpu_custom_call.1} parent=1 // pred_fallthru
      _
    // Predicated region
    $region86: #{tpu_custom_call.1} parent=1 // pred_check
      _
    $region87: #{tpu_custom_call.1} parent=1 // pred_check_branch
      %1909 = sbr.rel (0) target = $region89
    $region88: #{tpu_custom_call.1} parent=1 // pred_region
      %1910 = dma.done [#allocation5], 128
    $region89: #{tpu_custom_call.1} parent=1 // pred_fallthru
      _
    // Predicated region
    $region90: #{tpu_custom_call.1} parent=1 // pred_check
      _
    $region91: #{tpu_custom_call.1} parent=1 // pred_check_branch
      %1912 = sbr.rel (0) target = $region93
    $region92: #{tpu_custom_call.1} parent=1 // pred_region
      %1913 = dma.done [#allocation19], 128
    $region93: #{tpu_custom_call.1} parent=1 // pred_fallthru
      _
    %1914 = vsyncpa [#allocation4], 1
    %1915 = vsyncpa [#allocation7], 1
    %1916 = vsyncpa [#allocation10], 1
    %1917 = vsyncpa [#allocation13], 1
    %1918 = vsyncpa [#allocation16], 1
    %1919 = vsyncpa [#allocation5], 1
    %1920 = vsyncpa [#allocation19], 1

</llo_original>
